<compile_context>
chip_gen: v7x
topology: tpu7x:2x2x1
jax: 0.10.0
libtpu: 0.0.40
codegen_flags: <defaults>
</compile_context>

<pallas_src>
import functools

import jax
import jax.numpy as jnp
from jax.experimental import pallas as pl
from jax.experimental.pallas import tpu as pltpu


def _round_up(n, m):
    return ((n + m - 1) // m) * m


# Gate-block order used inside the kernels: [f, i, o, g].
# (PyTorch nn.LSTM order is [i, f, g, o]; the wrapper permutes weight columns
#  once.)  Rationale (feedback #4): with this order the per-step alignment is
#    f   : block 0  -> no roll
#    o   : block 2  -> roll by 2H (self-inverse, direction-proof)
#    i,g : blocks 1/3 -> rolls by H and 3H; i*g is commutative, so the result
#          does not depend on the hardware rotate direction convention.
def _to_kernel_gate_order(w):
    H = w.shape[-1] // 4
    i, f, g, o = (w[..., k * H:(k + 1) * H] for k in range(4))
    return jnp.concatenate([f, i, o, g], axis=-1)


def _pad_rows_to_4h(w, H):
    """(H, N) -> (4H, N) with zero rows below H (matches the wide h/c layout)."""
    return jnp.pad(w, ((0, 3 * H), (0, 0)))


# ----------------------------------------------------------------------------
# One LSTM layer over the whole (padded) sequence, chunked over time.
#   first_layer: fuses the input projection of the raw x chunk.
#   last_layer : fuses the final Linear on the last hidden state.
#   otherwise  : emits the next layer's pre-activations (lane-dense 4H wide).
# ----------------------------------------------------------------------------
def _lstm_layer_kernel(*refs, hidden_dim, batch_pad, t_chunk, seq_len,
                       total_steps, first_layer, last_layer):
    if first_layer:
        xin_ref, wih_ref, bih_ref, *rest = refs   # raw x rows + layer-0 W_ih, b
    else:
        gin_ref, *rest = refs                     # pre-activations from below
    whh_ref, wout_ref, bout_ref, out_ref, h_scr, c_scr = rest

    H = hidden_dim
    G = 4 * H
    B = batch_pad
    chunk = pl.program_id(0)
    is_last_chunk = chunk == pl.num_programs(0) - 1

    @pl.when(chunk == 0)
    def _():
        h_scr[...] = jnp.zeros_like(h_scr)
        c_scr[...] = jnp.zeros_like(c_scr)

    if first_layer:
        # Fused input projection for the whole chunk: one MXU matmul over all
        # t_chunk*B rows (feedback #1/#5); gin never touches HBM for layer 0.
        gin = (
            jnp.dot(xin_ref[...], wih_ref[...],
                    preferred_element_type=jnp.float32)
            + bih_ref[...]
        )                                               # (t_chunk*B, 4H) f32

    # Loop-invariant operands; Mosaic keeps them in VMEM / vregs as it sees fit.
    # TODO(synk): pipeline_mode=pl.Buffered(1) on their BlockSpecs for large H.
    whh = whh_ref[...]            # (4H, 4H) bf16, rows [H:4H) are zero
    wout = wout_ref[...]          # (4H, Gout) bf16, rows [H:4H) are zero
    bout = bout_ref[...]          # (1, Gout) f32

    # Wide state: lanes [0:H) live, lanes [H:4H) kept exactly zero.
    h = h_scr[...]                # (B, 4H) f32
    c = c_scr[...]

    lane = jax.lax.broadcasted_iota(jnp.int32, (B, G), 1)   # hoisted (no CSE in loop)
    tanh_lane = lane >= 3 * H     # g gate lives in block 3
    live_lane = lane < H

    # Fully-unrolled inner time loop: static indices keep gin/out addressing
    # cheap and give the LLO scheduler full visibility.
    # TODO(synk): switch to lax.fori_loop(..., unroll=4..8) for large t_chunk.
    for s in range(t_chunk):
        if first_layer:
            g_in = gin[s * B:(s + 1) * B]                    # (B, 4H) f32 (row-aligned)
        else:
            g_in = gin_ref[s].astype(jnp.float32)            # bf16 -> f32

        gates = g_in + jnp.dot(h.astype(jnp.bfloat16), whh,
                               preferred_element_type=jnp.float32)   # (B, 4H) f32

        # Full-vreg nonlinearities (EUP) + one lane select (feedback #4);
        # gate blocks are [f, i, o, g].
        act = jnp.where(tanh_lane, jnp.tanh(gates), jax.nn.sigmoid(gates))
        f_a = act                                        # f already at block 0
        o_a = pltpu.roll(act, shift=2 * H, axis=1)       # o -> block 0
        a1 = pltpu.roll(act, shift=H, axis=1)            # {i, g} -> block 0
        a3 = pltpu.roll(act, shift=3 * H, axis=1)        # {g, i} -> block 0

        c_new = f_a * c + a1 * a3                        # sig(f)*c + sig(i)*tanh(g)
        h_new = o_a * jnp.tanh(c_new)
        # Keep dead lanes exactly zero so the zero-padded weight rows and the
        # carried state stay clean.
        c_new = jnp.where(live_lane, c_new, 0.0)
        h_new = jnp.where(live_lane, h_new, 0.0)

        # Time-padding mask, statically specialized (feedback #11): only the
        # trailing steps of the LAST chunk can be padding.
        if total_steps - t_chunk + s >= seq_len:
            h = jnp.where(is_last_chunk, h, h_new)
            c = jnp.where(is_last_chunk, c, c_new)
        else:
            h, c = h_new, c_new

        if not last_layer:
            # Emit the next layer's pre-activations h @ W_ih^{l+1} + b^{l+1}
            # (4H = 128 lanes -> lane-dense, unmasked stores; feedback #1b/#3).
            out_ref[s] = (
                jnp.dot(h.astype(jnp.bfloat16), wout,
                        preferred_element_type=jnp.float32) + bout
            ).astype(out_ref.dtype)

    h_scr[...] = h
    c_scr[...] = c

    if last_layer:
        # Final Linear fused on the current last hidden state.  The output
        # block has a constant index, so it stays VMEM-resident; the last
        # chunk's value is the model output.
        out_ref[...] = (
            jnp.dot(h.astype(jnp.bfloat16), wout,
                    preferred_element_type=jnp.float32) + bout
        ).astype(out_ref.dtype)


def _lstm_layer(seq_in, w_hh_wide, w_out, b_out, *, hidden_dim, batch_pad,
                seq_len, total_steps, t_chunk, first_layer, last_layer,
                w_in=None, b_in=None):
    """seq_in: (T_pad*B_pad, D) bf16 raw rows when first_layer, else
    (T_pad, B_pad, 4H) bf16 pre-activations.  Returns (T_pad, B_pad, 4H) bf16
    next-layer pre-activations, or (B_pad, O) f32 when last_layer."""
    H = hidden_dim
    G = 4 * H
    B_pad = batch_pad
    T_pad = total_steps
    n_chunks = T_pad // t_chunk
    Gout = w_out.shape[1]

    kernel = functools.partial(
        _lstm_layer_kernel, hidden_dim=H, batch_pad=B_pad, t_chunk=t_chunk,
        seq_len=seq_len, total_steps=T_pad,
        first_layer=first_layer, last_layer=last_layer)

    in_specs = []
    operands = []
    if first_layer:
        D = seq_in.shape[1]
        in_specs.append(pl.BlockSpec((t_chunk * B_pad, D), lambda c: (c, 0)))
        operands.append(seq_in)
        in_specs.append(pl.BlockSpec((D, G), lambda c: (0, 0)))       # W_ih^0
        operands.append(w_in)
        in_specs.append(pl.BlockSpec((1, G), lambda c: (0, 0)))       # b^0
        operands.append(b_in)
    else:
        in_specs.append(pl.BlockSpec((t_chunk, B_pad, G), lambda c: (c, 0, 0)))
        operands.append(seq_in)
    in_specs.append(pl.BlockSpec((G, G), lambda c: (0, 0)))           # W_hh (wide)
    operands.append(w_hh_wide)
    in_specs.append(pl.BlockSpec((G, Gout), lambda c: (0, 0)))        # W_ih^{l+1} / fc_w
    operands.append(w_out)
    in_specs.append(pl.BlockSpec((1, Gout), lambda c: (0, 0)))        # its bias
    operands.append(b_out)

    if last_layer:
        out_shape = jax.ShapeDtypeStruct((B_pad, Gout), jnp.float32)
        out_spec = pl.BlockSpec((B_pad, Gout), lambda c: (0, 0))
    else:
        out_shape = jax.ShapeDtypeStruct((T_pad, B_pad, Gout), jnp.bfloat16)
        out_spec = pl.BlockSpec((t_chunk, B_pad, Gout), lambda c: (c, 0, 0))

    return pl.pallas_call(
        kernel,
        out_shape=out_shape,
        grid_spec=pltpu.PrefetchScalarGridSpec(
            num_scalar_prefetch=0,
            grid=(n_chunks,),
            in_specs=in_specs,
            out_specs=out_spec,
            scratch_shapes=[
                pltpu.VMEM((B_pad, G), jnp.float32),   # h state (wide layout)
                pltpu.VMEM((B_pad, G), jnp.float32),   # c state (wide layout)
            ],
        ),
        compiler_params=pltpu.CompilerParams(
            # Time recurrence is serial.
            # TODO(synk): add a leading core-parallel batch axis on v7x once
            # B_pad >= 16 so the second TensorCore works during the recurrence.
            dimension_semantics=("arbitrary",),
            vmem_limit_bytes=32 * 1024 * 1024,
        ),
    )(*operands)


# ----------------------------------------------------------------------------
# Full model: multi-layer LSTM (h0 = c0 = 0, batch_first) + Linear(out[:, -1, :])
# ----------------------------------------------------------------------------
def lstm_model_forward(x_btd, params, *, t_chunk=8):
    """x_btd: (B, T, input_dim) f32 -> (B, output_dim) f32."""
    B, T, _ = x_btd.shape
    B_pad = _round_up(B, 8)          # full sublanes -> unmasked VPU ops & stores
    T_pad = _round_up(T, t_chunk)

    layers = params["layers"]
    n_layers = len(layers)
    H = layers[0][1].shape[0]

    # TODO(synk): fold this transpose/pad into the first kernel's index_map
    # (2-D grid reading batch-first blocks) to save one XLA pass over x.
    x = jnp.transpose(x_btd, (1, 0, 2))                          # (T, B, D)
    x = jnp.pad(x, ((0, T_pad - T), (0, B_pad - B), (0, 0)))
    seq = x.astype(jnp.bfloat16).reshape(T_pad * B_pad, -1)      # 2-D rows for layer 0

    out = None
    for l in range(n_layers):
        w_ih, w_hh, b = layers[l]
        last = l == n_layers - 1
        w_hh_wide = _pad_rows_to_4h(
            _to_kernel_gate_order(w_hh), H).astype(jnp.bfloat16)
        if last:
            w_out = _pad_rows_to_4h(params["fc_w"], H).astype(jnp.bfloat16)
            b_out = params["fc_b"]
        else:
            w_ih_next, _, b_next = layers[l + 1]
            w_out = _pad_rows_to_4h(
                _to_kernel_gate_order(w_ih_next), H).astype(jnp.bfloat16)
            b_out = _to_kernel_gate_order(b_next)
        kwargs = dict(hidden_dim=H, batch_pad=B_pad, seq_len=T,
                      total_steps=T_pad, t_chunk=t_chunk,
                      first_layer=(l == 0), last_layer=last)
        if l == 0:
            seq = _lstm_layer(
                seq, w_hh_wide, w_out, b_out,
                w_in=_to_kernel_gate_order(w_ih).astype(jnp.bfloat16),
                b_in=_to_kernel_gate_order(b), **kwargs)
        else:
            seq = _lstm_layer(seq, w_hh_wide, w_out, b_out, **kwargs)
        out = seq
    return out[:B]


# ----------------------------------------------------------------------------
# Deterministic parameter init (PyTorch-style uniform(-1/sqrt(H), 1/sqrt(H))).
# Weights stored pre-transposed, gate order [i, f, g, o]: W_ih (D,4H),
# W_hh (H,4H), bias = b_ih + b_hh.
# ----------------------------------------------------------------------------
def init_params(key, input_dim, hidden_dim, output_dim, num_layers):
    H = hidden_dim
    bound = 1.0 / jnp.sqrt(jnp.float32(H))
    layers = []
    for l in range(num_layers):
        d_in = input_dim if l == 0 else H
        key, k1, k2, k3, k4 = jax.random.split(key, 5)
        w_ih = jax.random.uniform(k1, (d_in, 4 * H), jnp.float32, -bound, bound)
        w_hh = jax.random.uniform(k2, (H, 4 * H), jnp.float32, -bound, bound)
        b_ih = jax.random.uniform(k3, (4 * H,), jnp.float32, -bound, bound)
        b_hh = jax.random.uniform(k4, (4 * H,), jnp.float32, -bound, bound)
        layers.append((w_ih, w_hh, (b_ih + b_hh)[None, :]))
    key, k5, k6 = jax.random.split(key, 3)
    fc_w = jax.random.uniform(k5, (H, output_dim), jnp.float32, -bound, bound)
    fc_b = jax.random.uniform(k6, (1, output_dim), jnp.float32, -bound, bound)
    return {"layers": layers, "fc_w": fc_w, "fc_b": fc_b}


# ----------------------------------------------------------------------------
# Pure-JAX reference.  matmul_dtype=bfloat16 mirrors the kernel's casts
# (bf16 matmul operands, bf16 inter-layer pre-activations, f32 accum/state);
# matmul_dtype=float32 is the PyTorch-semantics baseline.
# ----------------------------------------------------------------------------
def reference_forward(x_btd, params, matmul_dtype=jnp.float32):
    md = matmul_dtype
    x = jnp.transpose(x_btd, (1, 0, 2)).astype(jnp.float32)      # (T, B, D)
    T, B, _ = x.shape
    n_layers = len(params["layers"])
    h_last = None
    gin = None
    for l, (w_ih, w_hh, b) in enumerate(params["layers"]):
        H = w_hh.shape[0]
        whh = w_hh.astype(md)
        if l == 0:
            gin = jnp.dot(x.astype(md).reshape(T * B, -1), w_ih.astype(md),
                          preferred_element_type=jnp.float32
                          ).reshape(T, B, 4 * H) + b

        def step(carry, g_t, whh=whh, H=H):
            h, c = carry
            gates = g_t.astype(jnp.float32) + jnp.dot(
                h.astype(md), whh, preferred_element_type=jnp.float32)
            i = jax.nn.sigmoid(gates[:, 0 * H:1 * H])
            f = jax.nn.sigmoid(gates[:, 1 * H:2 * H])
            g = jnp.tanh(gates[:, 2 * H:3 * H])
            o = jax.nn.sigmoid(gates[:, 3 * H:4 * H])
            c = f * c + i * g
            h = o * jnp.tanh(c)
            return (h, c), h

        (h_last, _), hs = jax.lax.scan(
            step,
            (jnp.zeros((B, H), jnp.float32), jnp.zeros((B, H), jnp.float32)),
            gin)
        if l < n_layers - 1:
            w_ih_next, _, b_next = params["layers"][l + 1]
            gin = (jnp.dot(hs.reshape(T * B, H).astype(md),
                           w_ih_next.astype(md),
                           preferred_element_type=jnp.float32
                           ).reshape(T, B, 4 * H) + b_next)
            if md == jnp.bfloat16:
                gin = gin.astype(jnp.bfloat16)   # mirrors bf16 HBM storage
    return (jnp.dot(h_last.astype(md), params["fc_w"].astype(md),
                    preferred_element_type=jnp.float32) + params["fc_b"])


if __name__ == "__main__":
    B, T = 2, 8
    input_dim, hidden_dim, output_dim, num_layers = 16, 32, 8, 2

    key = jax.random.PRNGKey(0)
    kx, kp = jax.random.split(key)
    x = jax.random.normal(kx, (B, T, input_dim), jnp.float32)
    params = init_params(kp, input_dim, hidden_dim, output_dim, num_layers)

    fwd = jax.jit(functools.partial(lstm_model_forward, t_chunk=8))
    out = jax.block_until_ready(fwd(x, params))
    assert out.shape == (B, output_dim)

    # Strict check vs a reference that mirrors the kernel's bf16 casts.
    ref_bf16 = jax.block_until_ready(reference_forward(x, params, jnp.bfloat16))
    assert jnp.allclose(out, ref_bf16, atol=2e-3, rtol=2e-3), \
        "mismatch vs bf16-matched reference"
    # Loose check vs the full-f32 (PyTorch-semantics) reference.
    ref_f32 = jax.block_until_ready(reference_forward(x, params, jnp.float32))
    assert jnp.allclose(out, ref_f32, atol=3e-2, rtol=3e-2), \
        "mismatch vs f32 reference"

    # Multi-chunk path (h/c state carried across grid steps).
    out4 = jax.block_until_ready(
        jax.jit(functools.partial(lstm_model_forward, t_chunk=4))(x, params))
    assert jnp.allclose(out4, ref_bf16, atol=2e-3, rtol=2e-3), \
        "mismatch (t_chunk=4) vs bf16-matched reference"

    # Time-padding path (T not a multiple of t_chunk).
    x6 = x[:, :6, :]
    out6 = jax.block_until_ready(
        jax.jit(functools.partial(lstm_model_forward, t_chunk=4))(x6, params))
    ref6 = jax.block_until_ready(reference_forward(x6, params, jnp.bfloat16))
    assert jnp.allclose(out6, ref6, atol=2e-3, rtol=2e-3), \
        "mismatch (time padding) vs bf16-matched reference"

    print("KERNEL_OK")
</pallas_src>

<mosaic_0001>
module attributes {stable_mosaic.version = 11 : i64} {
  func.func @_lstm_layer_kernel(%arg0: i32, %arg1: memref<64x16xbf16, #tpu.memory_space<vmem>>, %arg2: memref<16x128xbf16, #tpu.memory_space<vmem>>, %arg3: memref<1x128xf32, #tpu.memory_space<vmem>>, %arg4: memref<128x128xbf16, #tpu.memory_space<vmem>>, %arg5: memref<128x128xbf16, #tpu.memory_space<vmem>>, %arg6: memref<1x128xf32, #tpu.memory_space<vmem>>, %arg7: memref<8x8x128xbf16, #tpu.memory_space<vmem>>, %arg8: memref<8x128xf32, #tpu.memory_space<vmem>>, %arg9: memref<8x128xf32, #tpu.memory_space<vmem>>) attributes {dimension_semantics = [#tpu.dimension_semantics<arbitrary>], iteration_bounds = array<i64: 1>, scalar_prefetch = 0 : i64, scratch_operands = 2 : i64, tpu.core_type = #tpu.core_type<tc>, window_params = [{transform_indices = @transform_0, window_bounds = array<i64: 64, 16>}, {pipeline_mode = #tpu.pipeline_mode<synchronous>, transform_indices = @transform_1, window_bounds = array<i64: 16, 128>}, {pipeline_mode = #tpu.pipeline_mode<synchronous>, transform_indices = @transform_2, window_bounds = array<i64: 1, 128>}, {pipeline_mode = #tpu.pipeline_mode<synchronous>, transform_indices = @transform_3, window_bounds = array<i64: 128, 128>}, {pipeline_mode = #tpu.pipeline_mode<synchronous>, transform_indices = @transform_4, window_bounds = array<i64: 128, 128>}, {pipeline_mode = #tpu.pipeline_mode<synchronous>, transform_indices = @transform_5, window_bounds = array<i64: 1, 128>}, {transform_indices = @transform_6, window_bounds = array<i64: 8, 8, 128>}]} {
    %c0_i32 = arith.constant 0 : i32
    %0 = arith.cmpi eq, %arg0, %c0_i32 : i32
    %1 = arith.extui %0 : i1 to i32
    %c0_i32_0 = arith.constant 0 : i32
    %2 = arith.cmpi ne, %1, %c0_i32_0 : i32
    scf.if %2 {
      %cst_100 = arith.constant 0.000000e+00 : f32
      %269 = vector.broadcast %cst_100 : f32 to vector<8x128xf32>
      %c0_101 = arith.constant 0 : index
      %c0_102 = arith.constant 0 : index
      %270 = vector.load %arg8[%c0_101, %c0_102] : memref<8x128xf32, #tpu.memory_space<vmem>>, vector<8x128xf32>
      tpu.vector_store %arg8[%c0_101, %c0_102], %269 {strides = array<i32>} : memref<8x128xf32, #tpu.memory_space<vmem>>, vector<8x128xf32>,
      %cst_103 = arith.constant 0.000000e+00 : f32
      %271 = vector.broadcast %cst_103 : f32 to vector<8x128xf32>
      %c0_104 = arith.constant 0 : index
      %c0_105 = arith.constant 0 : index
      %272 = vector.load %arg9[%c0_104, %c0_105] : memref<8x128xf32, #tpu.memory_space<vmem>>, vector<8x128xf32>
      tpu.vector_store %arg9[%c0_104, %c0_105], %271 {strides = array<i32>} : memref<8x128xf32, #tpu.memory_space<vmem>>, vector<8x128xf32>,
    } else {
    }
    %c0 = arith.constant 0 : index
    %c0_1 = arith.constant 0 : index
    %3 = vector.load %arg1[%c0, %c0_1] : memref<64x16xbf16, #tpu.memory_space<vmem>>, vector<64x16xbf16>
    %c0_2 = arith.constant 0 : index
    %c0_3 = arith.constant 0 : index
    %4 = vector.load %arg2[%c0_2, %c0_3] : memref<16x128xbf16, #tpu.memory_space<vmem>>, vector<16x128xbf16>
    %cst = arith.constant dense<0.000000e+00> : vector<64x128xf32>
    %5 = tpu.matmul %3, %4, %cst {dimension_numbers = #tpu.dot_dimension_numbers<[1], [0], [0], [1], [0, 0, 1, 1], [], []>} : vector<64x16xbf16>, vector<16x128xbf16>, vector<64x128xf32> -> vector<64x128xf32>
    %c0_4 = arith.constant 0 : index
    %c0_5 = arith.constant 0 : index
    %6 = vector.load %arg3[%c0_4, %c0_5] : memref<1x128xf32, #tpu.memory_space<vmem>>, vector<1x128xf32>
    %7 = vector.broadcast %6 : vector<1x128xf32> to vector<64x128xf32>
    %8 = arith.addf %5, %7 : vector<64x128xf32>
    %c0_6 = arith.constant 0 : index
    %c0_7 = arith.constant 0 : index
    %9 = vector.load %arg4[%c0_6, %c0_7] : memref<128x128xbf16, #tpu.memory_space<vmem>>, vector<128x128xbf16>
    %c0_8 = arith.constant 0 : index
    %c0_9 = arith.constant 0 : index
    %10 = vector.load %arg5[%c0_8, %c0_9] : memref<128x128xbf16, #tpu.memory_space<vmem>>, vector<128x128xbf16>
    %c0_10 = arith.constant 0 : index
    %c0_11 = arith.constant 0 : index
    %11 = vector.load %arg6[%c0_10, %c0_11] : memref<1x128xf32, #tpu.memory_space<vmem>>, vector<1x128xf32>
    %c0_12 = arith.constant 0 : index
    %c0_13 = arith.constant 0 : index
    %12 = vector.load %arg8[%c0_12, %c0_13] : memref<8x128xf32, #tpu.memory_space<vmem>>, vector<8x128xf32>
    %c0_14 = arith.constant 0 : index
    %c0_15 = arith.constant 0 : index
    %13 = vector.load %arg9[%c0_14, %c0_15] : memref<8x128xf32, #tpu.memory_space<vmem>>, vector<8x128xf32>
    %14 = tpu.iota {dimensions = array<i32: 1>} : vector<8x128xi32>
    %c96_i32 = arith.constant 96 : i32
    %15 = vector.broadcast %c96_i32 : i32 to vector<8x128xi32>
    %16 = arith.cmpi sge, %14, %15 : vector<8x128xi32>
    %c32_i32 = arith.constant 32 : i32
    %17 = vector.broadcast %c32_i32 : i32 to vector<8x128xi32>
    %18 = arith.cmpi slt, %14, %17 : vector<8x128xi32>
    %19 = vector.extract_strided_slice %8 {offsets = [0, 0], sizes = [8, 128], strides = [1, 1]} : vector<64x128xf32> to vector<8x128xf32>
    %20 = arith.truncf %12 : vector<8x128xf32> to vector<8x128xbf16>
    %cst_16 = arith.constant dense<0.000000e+00> : vector<8x128xf32>
    %21 = tpu.matmul %20, %9, %cst_16 {dimension_numbers = #tpu.dot_dimension_numbers<[1], [0], [0], [1], [0, 0, 1, 1], [], []>} : vector<8x128xbf16>, vector<128x128xbf16>, vector<8x128xf32> -> vector<8x128xf32>
    %22 = arith.addf %19, %21 : vector<8x128xf32>
    %23 = math.tanh %22 : vector<8x128xf32>
    %24 = arith.negf %22 : vector<8x128xf32>
    %25 = math.exp %24 : vector<8x128xf32>
    %cst_17 = arith.constant 1.000000e+00 : f32
    %26 = vector.broadcast %cst_17 : f32 to vector<8x128xf32>
    %27 = arith.addf %26, %25 : vector<8x128xf32>
    %28 = arith.divf %26, %27 : vector<8x128xf32>
    %29 = arith.select %16, %23, %28 : vector<8x128xi1>, vector<8x128xf32>
    %c64_i32 = arith.constant 64 : i32
    %30 = tpu.dynamic_rotate %29 by %c64_i32 dim 1 : vector<8x128xf32>, i32 -> vector<8x128xf32>
    %c32_i32_18 = arith.constant 32 : i32
    %31 = tpu.dynamic_rotate %29 by %c32_i32_18 dim 1 : vector<8x128xf32>, i32 -> vector<8x128xf32>
    %c96_i32_19 = arith.constant 96 : i32
    %32 = tpu.dynamic_rotate %29 by %c96_i32_19 dim 1 : vector<8x128xf32>, i32 -> vector<8x128xf32>
    %33 = arith.mulf %29, %13 : vector<8x128xf32>
    %34 = arith.mulf %31, %32 : vector<8x128xf32>
    %35 = arith.addf %33, %34 : vector<8x128xf32>
    %36 = math.tanh %35 : vector<8x128xf32>
    %37 = arith.mulf %30, %36 : vector<8x128xf32>
    %cst_20 = arith.constant 0.000000e+00 : f32
    %38 = vector.broadcast %cst_20 : f32 to vector<8x128xf32>
    %39 = arith.select %18, %35, %38 : vector<8x128xi1>, vector<8x128xf32>
    %cst_21 = arith.constant 0.000000e+00 : f32
    %40 = vector.broadcast %cst_21 : f32 to vector<8x128xf32>
    %41 = arith.select %18, %37, %40 : vector<8x128xi1>, vector<8x128xf32>
    %42 = arith.truncf %41 : vector<8x128xf32> to vector<8x128xbf16>
    %cst_22 = arith.constant dense<0.000000e+00> : vector<8x128xf32>
    %43 = tpu.matmul %42, %10, %cst_22 {dimension_numbers = #tpu.dot_dimension_numbers<[1], [0], [0], [1], [0, 0, 1, 1], [], []>} : vector<8x128xbf16>, vector<128x128xbf16>, vector<8x128xf32> -> vector<8x128xf32>
    %44 = vector.broadcast %11 : vector<1x128xf32> to vector<8x128xf32>
    %45 = arith.addf %43, %44 : vector<8x128xf32>
    %46 = arith.truncf %45 : vector<8x128xf32> to vector<8x128xbf16>
    %c0_23 = arith.constant 0 : index
    %c0_24 = arith.constant 0 : index
    %c0_25 = arith.constant 0 : index
    %47 = vector.load %arg7[%c0_23, %c0_24, %c0_25] : memref<8x8x128xbf16, #tpu.memory_space<vmem>>, vector<1x8x128xbf16>
    %48 = vector.shape_cast %47 : vector<1x8x128xbf16> to vector<8x128xbf16>
    %49 = vector.shape_cast %46 : vector<8x128xbf16> to vector<1x8x128xbf16>
    tpu.vector_store %arg7[%c0_23, %c0_24, %c0_25], %49 {strides = array<i32>} : memref<8x8x128xbf16, #tpu.memory_space<vmem>>, vector<1x8x128xbf16>,
    %50 = vector.extract_strided_slice %8 {offsets = [8, 0], sizes = [8, 128], strides = [1, 1]} : vector<64x128xf32> to vector<8x128xf32>
    %51 = arith.truncf %41 : vector<8x128xf32> to vector<8x128xbf16>
    %cst_26 = arith.constant dense<0.000000e+00> : vector<8x128xf32>
    %52 = tpu.matmul %51, %9, %cst_26 {dimension_numbers = #tpu.dot_dimension_numbers<[1], [0], [0], [1], [0, 0, 1, 1], [], []>} : vector<8x128xbf16>, vector<128x128xbf16>, vector<8x128xf32> -> vector<8x128xf32>
    %53 = arith.addf %50, %52 : vector<8x128xf32>
    %54 = math.tanh %53 : vector<8x128xf32>
    %55 = arith.negf %53 : vector<8x128xf32>
    %56 = math.exp %55 : vector<8x128xf32>
    %cst_27 = arith.constant 1.000000e+00 : f32
    %57 = vector.broadcast %cst_27 : f32 to vector<8x128xf32>
    %58 = arith.addf %57, %56 : vector<8x128xf32>
    %59 = arith.divf %57, %58 : vector<8x128xf32>
    %60 = arith.select %16, %54, %59 : vector<8x128xi1>, vector<8x128xf32>
    %c64_i32_28 = arith.constant 64 : i32
    %61 = tpu.dynamic_rotate %60 by %c64_i32_28 dim 1 : vector<8x128xf32>, i32 -> vector<8x128xf32>
    %c32_i32_29 = arith.constant 32 : i32
    %62 = tpu.dynamic_rotate %60 by %c32_i32_29 dim 1 : vector<8x128xf32>, i32 -> vector<8x128xf32>
    %c96_i32_30 = arith.constant 96 : i32
    %63 = tpu.dynamic_rotate %60 by %c96_i32_30 dim 1 : vector<8x128xf32>, i32 -> vector<8x128xf32>
    %64 = arith.mulf %60, %39 : vector<8x128xf32>
    %65 = arith.mulf %62, %63 : vector<8x128xf32>
    %66 = arith.addf %64, %65 : vector<8x128xf32>
    %67 = math.tanh %66 : vector<8x128xf32>
    %68 = arith.mulf %61, %67 : vector<8x128xf32>
    %cst_31 = arith.constant 0.000000e+00 : f32
    %69 = vector.broadcast %cst_31 : f32 to vector<8x128xf32>
    %70 = arith.select %18, %66, %69 : vector<8x128xi1>, vector<8x128xf32>
    %cst_32 = arith.constant 0.000000e+00 : f32
    %71 = vector.broadcast %cst_32 : f32 to vector<8x128xf32>
    %72 = arith.select %18, %68, %71 : vector<8x128xi1>, vector<8x128xf32>
    %73 = arith.truncf %72 : vector<8x128xf32> to vector<8x128xbf16>
    %cst_33 = arith.constant dense<0.000000e+00> : vector<8x128xf32>
    %74 = tpu.matmul %73, %10, %cst_33 {dimension_numbers = #tpu.dot_dimension_numbers<[1], [0], [0], [1], [0, 0, 1, 1], [], []>} : vector<8x128xbf16>, vector<128x128xbf16>, vector<8x128xf32> -> vector<8x128xf32>
    %75 = vector.broadcast %11 : vector<1x128xf32> to vector<8x128xf32>
    %76 = arith.addf %74, %75 : vector<8x128xf32>
    %77 = arith.truncf %76 : vector<8x128xf32> to vector<8x128xbf16>
    %c1 = arith.constant 1 : index
    %c0_34 = arith.constant 0 : index
    %c0_35 = arith.constant 0 : index
    %78 = vector.load %arg7[%c1, %c0_34, %c0_35] : memref<8x8x128xbf16, #tpu.memory_space<vmem>>, vector<1x8x128xbf16>
    %79 = vector.shape_cast %78 : vector<1x8x128xbf16> to vector<8x128xbf16>
    %80 = vector.shape_cast %77 : vector<8x128xbf16> to vector<1x8x128xbf16>
    tpu.vector_store %arg7[%c1, %c0_34, %c0_35], %80 {strides = array<i32>} : memref<8x8x128xbf16, #tpu.memory_space<vmem>>, vector<1x8x128xbf16>,
    %81 = vector.extract_strided_slice %8 {offsets = [16, 0], sizes = [8, 128], strides = [1, 1]} : vector<64x128xf32> to vector<8x128xf32>
    %82 = arith.truncf %72 : vector<8x128xf32> to vector<8x128xbf16>
    %cst_36 = arith.constant dense<0.000000e+00> : vector<8x128xf32>
    %83 = tpu.matmul %82, %9, %cst_36 {dimension_numbers = #tpu.dot_dimension_numbers<[1], [0], [0], [1], [0, 0, 1, 1], [], []>} : vector<8x128xbf16>, vector<128x128xbf16>, vector<8x128xf32> -> vector<8x128xf32>
    %84 = arith.addf %81, %83 : vector<8x128xf32>
    %85 = math.tanh %84 : vector<8x128xf32>
    %86 = arith.negf %84 : vector<8x128xf32>
    %87 = math.exp %86 : vector<8x128xf32>
    %cst_37 = arith.constant 1.000000e+00 : f32
    %88 = vector.broadcast %cst_37 : f32 to vector<8x128xf32>
    %89 = arith.addf %88, %87 : vector<8x128xf32>
    %90 = arith.divf %88, %89 : vector<8x128xf32>
    %91 = arith.select %16, %85, %90 : vector<8x128xi1>, vector<8x128xf32>
    %c64_i32_38 = arith.constant 64 : i32
    %92 = tpu.dynamic_rotate %91 by %c64_i32_38 dim 1 : vector<8x128xf32>, i32 -> vector<8x128xf32>
    %c32_i32_39 = arith.constant 32 : i32
    %93 = tpu.dynamic_rotate %91 by %c32_i32_39 dim 1 : vector<8x128xf32>, i32 -> vector<8x128xf32>
    %c96_i32_40 = arith.constant 96 : i32
    %94 = tpu.dynamic_rotate %91 by %c96_i32_40 dim 1 : vector<8x128xf32>, i32 -> vector<8x128xf32>
    %95 = arith.mulf %91, %70 : vector<8x128xf32>
    %96 = arith.mulf %93, %94 : vector<8x128xf32>
    %97 = arith.addf %95, %96 : vector<8x128xf32>
    %98 = math.tanh %97 : vector<8x128xf32>
    %99 = arith.mulf %92, %98 : vector<8x128xf32>
    %cst_41 = arith.constant 0.000000e+00 : f32
    %100 = vector.broadcast %cst_41 : f32 to vector<8x128xf32>
    %101 = arith.select %18, %97, %100 : vector<8x128xi1>, vector<8x128xf32>
    %cst_42 = arith.constant 0.000000e+00 : f32
    %102 = vector.broadcast %cst_42 : f32 to vector<8x128xf32>
    %103 = arith.select %18, %99, %102 : vector<8x128xi1>, vector<8x128xf32>
    %104 = arith.truncf %103 : vector<8x128xf32> to vector<8x128xbf16>
    %cst_43 = arith.constant dense<0.000000e+00> : vector<8x128xf32>
    %105 = tpu.matmul %104, %10, %cst_43 {dimension_numbers = #tpu.dot_dimension_numbers<[1], [0], [0], [1], [0, 0, 1, 1], [], []>} : vector<8x128xbf16>, vector<128x128xbf16>, vector<8x128xf32> -> vector<8x128xf32>
    %106 = vector.broadcast %11 : vector<1x128xf32> to vector<8x128xf32>
    %107 = arith.addf %105, %106 : vector<8x128xf32>
    %108 = arith.truncf %107 : vector<8x128xf32> to vector<8x128xbf16>
    %c2 = arith.constant 2 : index
    %c0_44 = arith.constant 0 : index
    %c0_45 = arith.constant 0 : index
    %109 = vector.load %arg7[%c2, %c0_44, %c0_45] : memref<8x8x128xbf16, #tpu.memory_space<vmem>>, vector<1x8x128xbf16>
    %110 = vector.shape_cast %109 : vector<1x8x128xbf16> to vector<8x128xbf16>
    %111 = vector.shape_cast %108 : vector<8x128xbf16> to vector<1x8x128xbf16>
    tpu.vector_store %arg7[%c2, %c0_44, %c0_45], %111 {strides = array<i32>} : memref<8x8x128xbf16, #tpu.memory_space<vmem>>, vector<1x8x128xbf16>,
    %112 = vector.extract_strided_slice %8 {offsets = [24, 0], sizes = [8, 128], strides = [1, 1]} : vector<64x128xf32> to vector<8x128xf32>
    %113 = arith.truncf %103 : vector<8x128xf32> to vector<8x128xbf16>
    %cst_46 = arith.constant dense<0.000000e+00> : vector<8x128xf32>
    %114 = tpu.matmul %113, %9, %cst_46 {dimension_numbers = #tpu.dot_dimension_numbers<[1], [0], [0], [1], [0, 0, 1, 1], [], []>} : vector<8x128xbf16>, vector<128x128xbf16>, vector<8x128xf32> -> vector<8x128xf32>
    %115 = arith.addf %112, %114 : vector<8x128xf32>
    %116 = math.tanh %115 : vector<8x128xf32>
    %117 = arith.negf %115 : vector<8x128xf32>
    %118 = math.exp %117 : vector<8x128xf32>
    %cst_47 = arith.constant 1.000000e+00 : f32
    %119 = vector.broadcast %cst_47 : f32 to vector<8x128xf32>
    %120 = arith.addf %119, %118 : vector<8x128xf32>
    %121 = arith.divf %119, %120 : vector<8x128xf32>
    %122 = arith.select %16, %116, %121 : vector<8x128xi1>, vector<8x128xf32>
    %c64_i32_48 = arith.constant 64 : i32
    %123 = tpu.dynamic_rotate %122 by %c64_i32_48 dim 1 : vector<8x128xf32>, i32 -> vector<8x128xf32>
    %c32_i32_49 = arith.constant 32 : i32
    %124 = tpu.dynamic_rotate %122 by %c32_i32_49 dim 1 : vector<8x128xf32>, i32 -> vector<8x128xf32>
    %c96_i32_50 = arith.constant 96 : i32
    %125 = tpu.dynamic_rotate %122 by %c96_i32_50 dim 1 : vector<8x128xf32>, i32 -> vector<8x128xf32>
    %126 = arith.mulf %122, %101 : vector<8x128xf32>
    %127 = arith.mulf %124, %125 : vector<8x128xf32>
    %128 = arith.addf %126, %127 : vector<8x128xf32>
    %129 = math.tanh %128 : vector<8x128xf32>
    %130 = arith.mulf %123, %129 : vector<8x128xf32>
    %cst_51 = arith.constant 0.000000e+00 : f32
    %131 = vector.broadcast %cst_51 : f32 to vector<8x128xf32>
    %132 = arith.select %18, %128, %131 : vector<8x128xi1>, vector<8x128xf32>
    %cst_52 = arith.constant 0.000000e+00 : f32
    %133 = vector.broadcast %cst_52 : f32 to vector<8x128xf32>
    %134 = arith.select %18, %130, %133 : vector<8x128xi1>, vector<8x128xf32>
    %135 = arith.truncf %134 : vector<8x128xf32> to vector<8x128xbf16>
    %cst_53 = arith.constant dense<0.000000e+00> : vector<8x128xf32>
    %136 = tpu.matmul %135, %10, %cst_53 {dimension_numbers = #tpu.dot_dimension_numbers<[1], [0], [0], [1], [0, 0, 1, 1], [], []>} : vector<8x128xbf16>, vector<128x128xbf16>, vector<8x128xf32> -> vector<8x128xf32>
    %137 = vector.broadcast %11 : vector<1x128xf32> to vector<8x128xf32>
    %138 = arith.addf %136, %137 : vector<8x128xf32>
    %139 = arith.truncf %138 : vector<8x128xf32> to vector<8x128xbf16>
    %c3 = arith.constant 3 : index
    %c0_54 = arith.constant 0 : index
    %c0_55 = arith.constant 0 : index
    %140 = vector.load %arg7[%c3, %c0_54, %c0_55] : memref<8x8x128xbf16, #tpu.memory_space<vmem>>, vector<1x8x128xbf16>
    %141 = vector.shape_cast %140 : vector<1x8x128xbf16> to vector<8x128xbf16>
    %142 = vector.shape_cast %139 : vector<8x128xbf16> to vector<1x8x128xbf16>
    tpu.vector_store %arg7[%c3, %c0_54, %c0_55], %142 {strides = array<i32>} : memref<8x8x128xbf16, #tpu.memory_space<vmem>>, vector<1x8x128xbf16>,
    %143 = vector.extract_strided_slice %8 {offsets = [32, 0], sizes = [8, 128], strides = [1, 1]} : vector<64x128xf32> to vector<8x128xf32>
    %144 = arith.truncf %134 : vector<8x128xf32> to vector<8x128xbf16>
    %cst_56 = arith.constant dense<0.000000e+00> : vector<8x128xf32>
    %145 = tpu.matmul %144, %9, %cst_56 {dimension_numbers = #tpu.dot_dimension_numbers<[1], [0], [0], [1], [0, 0, 1, 1], [], []>} : vector<8x128xbf16>, vector<128x128xbf16>, vector<8x128xf32> -> vector<8x128xf32>
    %146 = arith.addf %143, %145 : vector<8x128xf32>
    %147 = math.tanh %146 : vector<8x128xf32>
    %148 = arith.negf %146 : vector<8x128xf32>
    %149 = math.exp %148 : vector<8x128xf32>
    %cst_57 = arith.constant 1.000000e+00 : f32
    %150 = vector.broadcast %cst_57 : f32 to vector<8x128xf32>
    %151 = arith.addf %150, %149 : vector<8x128xf32>
    %152 = arith.divf %150, %151 : vector<8x128xf32>
    %153 = arith.select %16, %147, %152 : vector<8x128xi1>, vector<8x128xf32>
    %c64_i32_58 = arith.constant 64 : i32
    %154 = tpu.dynamic_rotate %153 by %c64_i32_58 dim 1 : vector<8x128xf32>, i32 -> vector<8x128xf32>
    %c32_i32_59 = arith.constant 32 : i32
    %155 = tpu.dynamic_rotate %153 by %c32_i32_59 dim 1 : vector<8x128xf32>, i32 -> vector<8x128xf32>
    %c96_i32_60 = arith.constant 96 : i32
    %156 = tpu.dynamic_rotate %153 by %c96_i32_60 dim 1 : vector<8x128xf32>, i32 -> vector<8x128xf32>
    %157 = arith.mulf %153, %132 : vector<8x128xf32>
    %158 = arith.mulf %155, %156 : vector<8x128xf32>
    %159 = arith.addf %157, %158 : vector<8x128xf32>
    %160 = math.tanh %159 : vector<8x128xf32>
    %161 = arith.mulf %154, %160 : vector<8x128xf32>
    %cst_61 = arith.constant 0.000000e+00 : f32
    %162 = vector.broadcast %cst_61 : f32 to vector<8x128xf32>
    %163 = arith.select %18, %159, %162 : vector<8x128xi1>, vector<8x128xf32>
    %cst_62 = arith.constant 0.000000e+00 : f32
    %164 = vector.broadcast %cst_62 : f32 to vector<8x128xf32>
    %165 = arith.select %18, %161, %164 : vector<8x128xi1>, vector<8x128xf32>
    %166 = arith.truncf %165 : vector<8x128xf32> to vector<8x128xbf16>
    %cst_63 = arith.constant dense<0.000000e+00> : vector<8x128xf32>
    %167 = tpu.matmul %166, %10, %cst_63 {dimension_numbers = #tpu.dot_dimension_numbers<[1], [0], [0], [1], [0, 0, 1, 1], [], []>} : vector<8x128xbf16>, vector<128x128xbf16>, vector<8x128xf32> -> vector<8x128xf32>
    %168 = vector.broadcast %11 : vector<1x128xf32> to vector<8x128xf32>
    %169 = arith.addf %167, %168 : vector<8x128xf32>
    %170 = arith.truncf %169 : vector<8x128xf32> to vector<8x128xbf16>
    %c4 = arith.constant 4 : index
    %c0_64 = arith.constant 0 : index
    %c0_65 = arith.constant 0 : index
    %171 = vector.load %arg7[%c4, %c0_64, %c0_65] : memref<8x8x128xbf16, #tpu.memory_space<vmem>>, vector<1x8x128xbf16>
    %172 = vector.shape_cast %171 : vector<1x8x128xbf16> to vector<8x128xbf16>
    %173 = vector.shape_cast %170 : vector<8x128xbf16> to vector<1x8x128xbf16>
    tpu.vector_store %arg7[%c4, %c0_64, %c0_65], %173 {strides = array<i32>} : memref<8x8x128xbf16, #tpu.memory_space<vmem>>, vector<1x8x128xbf16>,
    %174 = vector.extract_strided_slice %8 {offsets = [40, 0], sizes = [8, 128], strides = [1, 1]} : vector<64x128xf32> to vector<8x128xf32>
    %175 = arith.truncf %165 : vector<8x128xf32> to vector<8x128xbf16>
    %cst_66 = arith.constant dense<0.000000e+00> : vector<8x128xf32>
    %176 = tpu.matmul %175, %9, %cst_66 {dimension_numbers = #tpu.dot_dimension_numbers<[1], [0], [0], [1], [0, 0, 1, 1], [], []>} : vector<8x128xbf16>, vector<128x128xbf16>, vector<8x128xf32> -> vector<8x128xf32>
    %177 = arith.addf %174, %176 : vector<8x128xf32>
    %178 = math.tanh %177 : vector<8x128xf32>
    %179 = arith.negf %177 : vector<8x128xf32>
    %180 = math.exp %179 : vector<8x128xf32>
    %cst_67 = arith.constant 1.000000e+00 : f32
    %181 = vector.broadcast %cst_67 : f32 to vector<8x128xf32>
    %182 = arith.addf %181, %180 : vector<8x128xf32>
    %183 = arith.divf %181, %182 : vector<8x128xf32>
    %184 = arith.select %16, %178, %183 : vector<8x128xi1>, vector<8x128xf32>
    %c64_i32_68 = arith.constant 64 : i32
    %185 = tpu.dynamic_rotate %184 by %c64_i32_68 dim 1 : vector<8x128xf32>, i32 -> vector<8x128xf32>
    %c32_i32_69 = arith.constant 32 : i32
    %186 = tpu.dynamic_rotate %184 by %c32_i32_69 dim 1 : vector<8x128xf32>, i32 -> vector<8x128xf32>
    %c96_i32_70 = arith.constant 96 : i32
    %187 = tpu.dynamic_rotate %184 by %c96_i32_70 dim 1 : vector<8x128xf32>, i32 -> vector<8x128xf32>
    %188 = arith.mulf %184, %163 : vector<8x128xf32>
    %189 = arith.mulf %186, %187 : vector<8x128xf32>
    %190 = arith.addf %188, %189 : vector<8x128xf32>
    %191 = math.tanh %190 : vector<8x128xf32>
    %192 = arith.mulf %185, %191 : vector<8x128xf32>
    %cst_71 = arith.constant 0.000000e+00 : f32
    %193 = vector.broadcast %cst_71 : f32 to vector<8x128xf32>
    %194 = arith.select %18, %190, %193 : vector<8x128xi1>, vector<8x128xf32>
    %cst_72 = arith.constant 0.000000e+00 : f32
    %195 = vector.broadcast %cst_72 : f32 to vector<8x128xf32>
    %196 = arith.select %18, %192, %195 : vector<8x128xi1>, vector<8x128xf32>
    %197 = arith.truncf %196 : vector<8x128xf32> to vector<8x128xbf16>
    %cst_73 = arith.constant dense<0.000000e+00> : vector<8x128xf32>
    %198 = tpu.matmul %197, %10, %cst_73 {dimension_numbers = #tpu.dot_dimension_numbers<[1], [0], [0], [1], [0, 0, 1, 1], [], []>} : vector<8x128xbf16>, vector<128x128xbf16>, vector<8x128xf32> -> vector<8x128xf32>
    %199 = vector.broadcast %11 : vector<1x128xf32> to vector<8x128xf32>
    %200 = arith.addf %198, %199 : vector<8x128xf32>
    %201 = arith.truncf %200 : vector<8x128xf32> to vector<8x128xbf16>
    %c5 = arith.constant 5 : index
    %c0_74 = arith.constant 0 : index
    %c0_75 = arith.constant 0 : index
    %202 = vector.load %arg7[%c5, %c0_74, %c0_75] : memref<8x8x128xbf16, #tpu.memory_space<vmem>>, vector<1x8x128xbf16>
    %203 = vector.shape_cast %202 : vector<1x8x128xbf16> to vector<8x128xbf16>
    %204 = vector.shape_cast %201 : vector<8x128xbf16> to vector<1x8x128xbf16>
    tpu.vector_store %arg7[%c5, %c0_74, %c0_75], %204 {strides = array<i32>} : memref<8x8x128xbf16, #tpu.memory_space<vmem>>, vector<1x8x128xbf16>,
    %205 = vector.extract_strided_slice %8 {offsets = [48, 0], sizes = [8, 128], strides = [1, 1]} : vector<64x128xf32> to vector<8x128xf32>
    %206 = arith.truncf %196 : vector<8x128xf32> to vector<8x128xbf16>
    %cst_76 = arith.constant dense<0.000000e+00> : vector<8x128xf32>
    %207 = tpu.matmul %206, %9, %cst_76 {dimension_numbers = #tpu.dot_dimension_numbers<[1], [0], [0], [1], [0, 0, 1, 1], [], []>} : vector<8x128xbf16>, vector<128x128xbf16>, vector<8x128xf32> -> vector<8x128xf32>
    %208 = arith.addf %205, %207 : vector<8x128xf32>
    %209 = math.tanh %208 : vector<8x128xf32>
    %210 = arith.negf %208 : vector<8x128xf32>
    %211 = math.exp %210 : vector<8x128xf32>
    %cst_77 = arith.constant 1.000000e+00 : f32
    %212 = vector.broadcast %cst_77 : f32 to vector<8x128xf32>
    %213 = arith.addf %212, %211 : vector<8x128xf32>
    %214 = arith.divf %212, %213 : vector<8x128xf32>
    %215 = arith.select %16, %209, %214 : vector<8x128xi1>, vector<8x128xf32>
    %c64_i32_78 = arith.constant 64 : i32
    %216 = tpu.dynamic_rotate %215 by %c64_i32_78 dim 1 : vector<8x128xf32>, i32 -> vector<8x128xf32>
    %c32_i32_79 = arith.constant 32 : i32
    %217 = tpu.dynamic_rotate %215 by %c32_i32_79 dim 1 : vector<8x128xf32>, i32 -> vector<8x128xf32>
    %c96_i32_80 = arith.constant 96 : i32
    %218 = tpu.dynamic_rotate %215 by %c96_i32_80 dim 1 : vector<8x128xf32>, i32 -> vector<8x128xf32>
    %219 = arith.mulf %215, %194 : vector<8x128xf32>
    %220 = arith.mulf %217, %218 : vector<8x128xf32>
    %221 = arith.addf %219, %220 : vector<8x128xf32>
    %222 = math.tanh %221 : vector<8x128xf32>
    %223 = arith.mulf %216, %222 : vector<8x128xf32>
    %cst_81 = arith.constant 0.000000e+00 : f32
    %224 = vector.broadcast %cst_81 : f32 to vector<8x128xf32>
    %225 = arith.select %18, %221, %224 : vector<8x128xi1>, vector<8x128xf32>
    %cst_82 = arith.constant 0.000000e+00 : f32
    %226 = vector.broadcast %cst_82 : f32 to vector<8x128xf32>
    %227 = arith.select %18, %223, %226 : vector<8x128xi1>, vector<8x128xf32>
    %228 = arith.truncf %227 : vector<8x128xf32> to vector<8x128xbf16>
    %cst_83 = arith.constant dense<0.000000e+00> : vector<8x128xf32>
    %229 = tpu.matmul %228, %10, %cst_83 {dimension_numbers = #tpu.dot_dimension_numbers<[1], [0], [0], [1], [0, 0, 1, 1], [], []>} : vector<8x128xbf16>, vector<128x128xbf16>, vector<8x128xf32> -> vector<8x128xf32>
    %230 = vector.broadcast %11 : vector<1x128xf32> to vector<8x128xf32>
    %231 = arith.addf %229, %230 : vector<8x128xf32>
    %232 = arith.truncf %231 : vector<8x128xf32> to vector<8x128xbf16>
    %c6 = arith.constant 6 : index
    %c0_84 = arith.constant 0 : index
    %c0_85 = arith.constant 0 : index
    %233 = vector.load %arg7[%c6, %c0_84, %c0_85] : memref<8x8x128xbf16, #tpu.memory_space<vmem>>, vector<1x8x128xbf16>
    %234 = vector.shape_cast %233 : vector<1x8x128xbf16> to vector<8x128xbf16>
    %235 = vector.shape_cast %232 : vector<8x128xbf16> to vector<1x8x128xbf16>
    tpu.vector_store %arg7[%c6, %c0_84, %c0_85], %235 {strides = array<i32>} : memref<8x8x128xbf16, #tpu.memory_space<vmem>>, vector<1x8x128xbf16>,
    %236 = vector.extract_strided_slice %8 {offsets = [56, 0], sizes = [8, 128], strides = [1, 1]} : vector<64x128xf32> to vector<8x128xf32>
    %237 = arith.truncf %227 : vector<8x128xf32> to vector<8x128xbf16>
    %cst_86 = arith.constant dense<0.000000e+00> : vector<8x128xf32>
    %238 = tpu.matmul %237, %9, %cst_86 {dimension_numbers = #tpu.dot_dimension_numbers<[1], [0], [0], [1], [0, 0, 1, 1], [], []>} : vector<8x128xbf16>, vector<128x128xbf16>, vector<8x128xf32> -> vector<8x128xf32>
    %239 = arith.addf %236, %238 : vector<8x128xf32>
    %240 = math.tanh %239 : vector<8x128xf32>
    %241 = arith.negf %239 : vector<8x128xf32>
    %242 = math.exp %241 : vector<8x128xf32>
    %cst_87 = arith.constant 1.000000e+00 : f32
    %243 = vector.broadcast %cst_87 : f32 to vector<8x128xf32>
    %244 = arith.addf %243, %242 : vector<8x128xf32>
    %245 = arith.divf %243, %244 : vector<8x128xf32>
    %246 = arith.select %16, %240, %245 : vector<8x128xi1>, vector<8x128xf32>
    %c64_i32_88 = arith.constant 64 : i32
    %247 = tpu.dynamic_rotate %246 by %c64_i32_88 dim 1 : vector<8x128xf32>, i32 -> vector<8x128xf32>
    %c32_i32_89 = arith.constant 32 : i32
    %248 = tpu.dynamic_rotate %246 by %c32_i32_89 dim 1 : vector<8x128xf32>, i32 -> vector<8x128xf32>
    %c96_i32_90 = arith.constant 96 : i32
    %249 = tpu.dynamic_rotate %246 by %c96_i32_90 dim 1 : vector<8x128xf32>, i32 -> vector<8x128xf32>
    %250 = arith.mulf %246, %225 : vector<8x128xf32>
    %251 = arith.mulf %248, %249 : vector<8x128xf32>
    %252 = arith.addf %250, %251 : vector<8x128xf32>
    %253 = math.tanh %252 : vector<8x128xf32>
    %254 = arith.mulf %247, %253 : vector<8x128xf32>
    %cst_91 = arith.constant 0.000000e+00 : f32
    %255 = vector.broadcast %cst_91 : f32 to vector<8x128xf32>
    %256 = arith.select %18, %252, %255 : vector<8x128xi1>, vector<8x128xf32>
    %cst_92 = arith.constant 0.000000e+00 : f32
    %257 = vector.broadcast %cst_92 : f32 to vector<8x128xf32>
    %258 = arith.select %18, %254, %257 : vector<8x128xi1>, vector<8x128xf32>
    %259 = arith.truncf %258 : vector<8x128xf32> to vector<8x128xbf16>
    %cst_93 = arith.constant dense<0.000000e+00> : vector<8x128xf32>
    %260 = tpu.matmul %259, %10, %cst_93 {dimension_numbers = #tpu.dot_dimension_numbers<[1], [0], [0], [1], [0, 0, 1, 1], [], []>} : vector<8x128xbf16>, vector<128x128xbf16>, vector<8x128xf32> -> vector<8x128xf32>
    %261 = vector.broadcast %11 : vector<1x128xf32> to vector<8x128xf32>
    %262 = arith.addf %260, %261 : vector<8x128xf32>
    %263 = arith.truncf %262 : vector<8x128xf32> to vector<8x128xbf16>
    %c7 = arith.constant 7 : index
    %c0_94 = arith.constant 0 : index
    %c0_95 = arith.constant 0 : index
    %264 = vector.load %arg7[%c7, %c0_94, %c0_95] : memref<8x8x128xbf16, #tpu.memory_space<vmem>>, vector<1x8x128xbf16>
    %265 = vector.shape_cast %264 : vector<1x8x128xbf16> to vector<8x128xbf16>
    %266 = vector.shape_cast %263 : vector<8x128xbf16> to vector<1x8x128xbf16>
    tpu.vector_store %arg7[%c7, %c0_94, %c0_95], %266 {strides = array<i32>} : memref<8x8x128xbf16, #tpu.memory_space<vmem>>, vector<1x8x128xbf16>,
    %c0_96 = arith.constant 0 : index
    %c0_97 = arith.constant 0 : index
    %267 = vector.load %arg8[%c0_96, %c0_97] : memref<8x128xf32, #tpu.memory_space<vmem>>, vector<8x128xf32>
    tpu.vector_store %arg8[%c0_96, %c0_97], %258 {strides = array<i32>} : memref<8x128xf32, #tpu.memory_space<vmem>>, vector<8x128xf32>,
    %c0_98 = arith.constant 0 : index
    %c0_99 = arith.constant 0 : index
    %268 = vector.load %arg9[%c0_98, %c0_99] : memref<8x128xf32, #tpu.memory_space<vmem>>, vector<8x128xf32>
    tpu.vector_store %arg9[%c0_98, %c0_99], %256 {strides = array<i32>} : memref<8x128xf32, #tpu.memory_space<vmem>>, vector<8x128xf32>,
    return
  }
  func.func @transform_0(%arg0: i32) -> (i32, i32) {
    %c0_i32 = arith.constant 0 : i32
    %c0_i32_0 = arith.constant 0 : i32
    return %arg0, %c0_i32 : i32, i32
  }
  func.func @transform_1(%arg0: i32) -> (i32, i32) {
    %c0_i32 = arith.constant 0 : i32
    %c0_i32_0 = arith.constant 0 : i32
    %c0_i32_1 = arith.constant 0 : i32
    return %c0_i32, %c0_i32_0 : i32, i32
  }
  func.func @transform_2(%arg0: i32) -> (i32, i32) {
    %c0_i32 = arith.constant 0 : i32
    %c0_i32_0 = arith.constant 0 : i32
    %c0_i32_1 = arith.constant 0 : i32
    return %c0_i32, %c0_i32_0 : i32, i32
  }
  func.func @transform_3(%arg0: i32) -> (i32, i32) {
    %c0_i32 = arith.constant 0 : i32
    %c0_i32_0 = arith.constant 0 : i32
    %c0_i32_1 = arith.constant 0 : i32
    return %c0_i32, %c0_i32_0 : i32, i32
  }
  func.func @transform_4(%arg0: i32) -> (i32, i32) {
    %c0_i32 = arith.constant 0 : i32
    %c0_i32_0 = arith.constant 0 : i32
    %c0_i32_1 = arith.constant 0 : i32
    return %c0_i32, %c0_i32_0 : i32, i32
  }
  func.func @transform_5(%arg0: i32) -> (i32, i32) {
    %c0_i32 = arith.constant 0 : i32
    %c0_i32_0 = arith.constant 0 : i32
    %c0_i32_1 = arith.constant 0 : i32
    return %c0_i32, %c0_i32_0 : i32, i32
  }
  func.func @transform_6(%arg0: i32) -> (i32, i32, i32) {
    %c0_i32 = arith.constant 0 : i32
    %c0_i32_0 = arith.constant 0 : i32
    %c0_i32_1 = arith.constant 0 : i32
    return %arg0, %c0_i32, %c0_i32_0 : i32, i32, i32
  }
}

module attributes {stable_mosaic.version = 11 : i64} {
  func.func @_lstm_layer_kernel(%arg0: i32, %arg1: memref<8x8x128xbf16, #tpu.memory_space<vmem>>, %arg2: memref<128x128xbf16, #tpu.memory_space<vmem>>, %arg3: memref<128x8xbf16, #tpu.memory_space<vmem>>, %arg4: memref<1x8xf32, #tpu.memory_space<vmem>>, %arg5: memref<8x8xf32, #tpu.memory_space<vmem>>, %arg6: memref<8x128xf32, #tpu.memory_space<vmem>>, %arg7: memref<8x128xf32, #tpu.memory_space<vmem>>) attributes {dimension_semantics = [#tpu.dimension_semantics<arbitrary>], iteration_bounds = array<i64: 1>, scalar_prefetch = 0 : i64, scratch_operands = 2 : i64, tpu.core_type = #tpu.core_type<tc>, window_params = [{transform_indices = @transform_0, window_bounds = array<i64: 8, 8, 128>}, {pipeline_mode = #tpu.pipeline_mode<synchronous>, transform_indices = @transform_1, window_bounds = array<i64: 128, 128>}, {pipeline_mode = #tpu.pipeline_mode<synchronous>, transform_indices = @transform_2, window_bounds = array<i64: 128, 8>}, {pipeline_mode = #tpu.pipeline_mode<synchronous>, transform_indices = @transform_3, window_bounds = array<i64: 1, 8>}, {pipeline_mode = #tpu.pipeline_mode<synchronous>, transform_indices = @transform_4, window_bounds = array<i64: 8, 8>}]} {
    %c0_i32 = arith.constant 0 : i32
    %0 = arith.cmpi eq, %arg0, %c0_i32 : i32
    %1 = arith.extui %0 : i1 to i32
    %c0_i32_0 = arith.constant 0 : i32
    %2 = arith.cmpi ne, %1, %c0_i32_0 : i32
    scf.if %2 {
      %cst_88 = arith.constant 0.000000e+00 : f32
      %220 = vector.broadcast %cst_88 : f32 to vector<8x128xf32>
      %c0_89 = arith.constant 0 : index
      %c0_90 = arith.constant 0 : index
      %221 = vector.load %arg6[%c0_89, %c0_90] : memref<8x128xf32, #tpu.memory_space<vmem>>, vector<8x128xf32>
      tpu.vector_store %arg6[%c0_89, %c0_90], %220 {strides = array<i32>} : memref<8x128xf32, #tpu.memory_space<vmem>>, vector<8x128xf32>,
      %cst_91 = arith.constant 0.000000e+00 : f32
      %222 = vector.broadcast %cst_91 : f32 to vector<8x128xf32>
      %c0_92 = arith.constant 0 : index
      %c0_93 = arith.constant 0 : index
      %223 = vector.load %arg7[%c0_92, %c0_93] : memref<8x128xf32, #tpu.memory_space<vmem>>, vector<8x128xf32>
      tpu.vector_store %arg7[%c0_92, %c0_93], %222 {strides = array<i32>} : memref<8x128xf32, #tpu.memory_space<vmem>>, vector<8x128xf32>,
    } else {
    }
    %c0 = arith.constant 0 : index
    %c0_1 = arith.constant 0 : index
    %3 = vector.load %arg2[%c0, %c0_1] : memref<128x128xbf16, #tpu.memory_space<vmem>>, vector<128x128xbf16>
    %c0_2 = arith.constant 0 : index
    %c0_3 = arith.constant 0 : index
    %4 = vector.load %arg3[%c0_2, %c0_3] : memref<128x8xbf16, #tpu.memory_space<vmem>>, vector<128x8xbf16>
    %c0_4 = arith.constant 0 : index
    %c0_5 = arith.constant 0 : index
    %5 = vector.load %arg4[%c0_4, %c0_5] : memref<1x8xf32, #tpu.memory_space<vmem>>, vector<1x8xf32>
    %c0_6 = arith.constant 0 : index
    %c0_7 = arith.constant 0 : index
    %6 = vector.load %arg6[%c0_6, %c0_7] : memref<8x128xf32, #tpu.memory_space<vmem>>, vector<8x128xf32>
    %c0_8 = arith.constant 0 : index
    %c0_9 = arith.constant 0 : index
    %7 = vector.load %arg7[%c0_8, %c0_9] : memref<8x128xf32, #tpu.memory_space<vmem>>, vector<8x128xf32>
    %8 = tpu.iota {dimensions = array<i32: 1>} : vector<8x128xi32>
    %c96_i32 = arith.constant 96 : i32
    %9 = vector.broadcast %c96_i32 : i32 to vector<8x128xi32>
    %10 = arith.cmpi sge, %8, %9 : vector<8x128xi32>
    %c32_i32 = arith.constant 32 : i32
    %11 = vector.broadcast %c32_i32 : i32 to vector<8x128xi32>
    %12 = arith.cmpi slt, %8, %11 : vector<8x128xi32>
    %c0_10 = arith.constant 0 : index
    %c0_11 = arith.constant 0 : index
    %c0_12 = arith.constant 0 : index
    %13 = vector.load %arg1[%c0_10, %c0_11, %c0_12] : memref<8x8x128xbf16, #tpu.memory_space<vmem>>, vector<1x8x128xbf16>
    %14 = vector.shape_cast %13 : vector<1x8x128xbf16> to vector<8x128xbf16>
    %15 = arith.extf %14 : vector<8x128xbf16> to vector<8x128xf32>
    %16 = arith.truncf %6 : vector<8x128xf32> to vector<8x128xbf16>
    %cst = arith.constant dense<0.000000e+00> : vector<8x128xf32>
    %17 = tpu.matmul %16, %3, %cst {dimension_numbers = #tpu.dot_dimension_numbers<[1], [0], [0], [1], [0, 0, 1, 1], [], []>} : vector<8x128xbf16>, vector<128x128xbf16>, vector<8x128xf32> -> vector<8x128xf32>
    %18 = arith.addf %15, %17 : vector<8x128xf32>
    %19 = math.tanh %18 : vector<8x128xf32>
    %20 = arith.negf %18 : vector<8x128xf32>
    %21 = math.exp %20 : vector<8x128xf32>
    %cst_13 = arith.constant 1.000000e+00 : f32
    %22 = vector.broadcast %cst_13 : f32 to vector<8x128xf32>
    %23 = arith.addf %22, %21 : vector<8x128xf32>
    %24 = arith.divf %22, %23 : vector<8x128xf32>
    %25 = arith.select %10, %19, %24 : vector<8x128xi1>, vector<8x128xf32>
    %c64_i32 = arith.constant 64 : i32
    %26 = tpu.dynamic_rotate %25 by %c64_i32 dim 1 : vector<8x128xf32>, i32 -> vector<8x128xf32>
    %c32_i32_14 = arith.constant 32 : i32
    %27 = tpu.dynamic_rotate %25 by %c32_i32_14 dim 1 : vector<8x128xf32>, i32 -> vector<8x128xf32>
    %c96_i32_15 = arith.constant 96 : i32
    %28 = tpu.dynamic_rotate %25 by %c96_i32_15 dim 1 : vector<8x128xf32>, i32 -> vector<8x128xf32>
    %29 = arith.mulf %25, %7 : vector<8x128xf32>
    %30 = arith.mulf %27, %28 : vector<8x128xf32>
    %31 = arith.addf %29, %30 : vector<8x128xf32>
    %32 = math.tanh %31 : vector<8x128xf32>
    %33 = arith.mulf %26, %32 : vector<8x128xf32>
    %cst_16 = arith.constant 0.000000e+00 : f32
    %34 = vector.broadcast %cst_16 : f32 to vector<8x128xf32>
    %35 = arith.select %12, %31, %34 : vector<8x128xi1>, vector<8x128xf32>
    %cst_17 = arith.constant 0.000000e+00 : f32
    %36 = vector.broadcast %cst_17 : f32 to vector<8x128xf32>
    %37 = arith.select %12, %33, %36 : vector<8x128xi1>, vector<8x128xf32>
    %c1 = arith.constant 1 : index
    %c0_18 = arith.constant 0 : index
    %c0_19 = arith.constant 0 : index
    %38 = vector.load %arg1[%c1, %c0_18, %c0_19] : memref<8x8x128xbf16, #tpu.memory_space<vmem>>, vector<1x8x128xbf16>
    %39 = vector.shape_cast %38 : vector<1x8x128xbf16> to vector<8x128xbf16>
    %40 = arith.extf %39 : vector<8x128xbf16> to vector<8x128xf32>
    %41 = arith.truncf %37 : vector<8x128xf32> to vector<8x128xbf16>
    %cst_20 = arith.constant dense<0.000000e+00> : vector<8x128xf32>
    %42 = tpu.matmul %41, %3, %cst_20 {dimension_numbers = #tpu.dot_dimension_numbers<[1], [0], [0], [1], [0, 0, 1, 1], [], []>} : vector<8x128xbf16>, vector<128x128xbf16>, vector<8x128xf32> -> vector<8x128xf32>
    %43 = arith.addf %40, %42 : vector<8x128xf32>
    %44 = math.tanh %43 : vector<8x128xf32>
    %45 = arith.negf %43 : vector<8x128xf32>
    %46 = math.exp %45 : vector<8x128xf32>
    %cst_21 = arith.constant 1.000000e+00 : f32
    %47 = vector.broadcast %cst_21 : f32 to vector<8x128xf32>
    %48 = arith.addf %47, %46 : vector<8x128xf32>
    %49 = arith.divf %47, %48 : vector<8x128xf32>
    %50 = arith.select %10, %44, %49 : vector<8x128xi1>, vector<8x128xf32>
    %c64_i32_22 = arith.constant 64 : i32
    %51 = tpu.dynamic_rotate %50 by %c64_i32_22 dim 1 : vector<8x128xf32>, i32 -> vector<8x128xf32>
    %c32_i32_23 = arith.constant 32 : i32
    %52 = tpu.dynamic_rotate %50 by %c32_i32_23 dim 1 : vector<8x128xf32>, i32 -> vector<8x128xf32>
    %c96_i32_24 = arith.constant 96 : i32
    %53 = tpu.dynamic_rotate %50 by %c96_i32_24 dim 1 : vector<8x128xf32>, i32 -> vector<8x128xf32>
    %54 = arith.mulf %50, %35 : vector<8x128xf32>
    %55 = arith.mulf %52, %53 : vector<8x128xf32>
    %56 = arith.addf %54, %55 : vector<8x128xf32>
    %57 = math.tanh %56 : vector<8x128xf32>
    %58 = arith.mulf %51, %57 : vector<8x128xf32>
    %cst_25 = arith.constant 0.000000e+00 : f32
    %59 = vector.broadcast %cst_25 : f32 to vector<8x128xf32>
    %60 = arith.select %12, %56, %59 : vector<8x128xi1>, vector<8x128xf32>
    %cst_26 = arith.constant 0.000000e+00 : f32
    %61 = vector.broadcast %cst_26 : f32 to vector<8x128xf32>
    %62 = arith.select %12, %58, %61 : vector<8x128xi1>, vector<8x128xf32>
    %c2 = arith.constant 2 : index
    %c0_27 = arith.constant 0 : index
    %c0_28 = arith.constant 0 : index
    %63 = vector.load %arg1[%c2, %c0_27, %c0_28] : memref<8x8x128xbf16, #tpu.memory_space<vmem>>, vector<1x8x128xbf16>
    %64 = vector.shape_cast %63 : vector<1x8x128xbf16> to vector<8x128xbf16>
    %65 = arith.extf %64 : vector<8x128xbf16> to vector<8x128xf32>
    %66 = arith.truncf %62 : vector<8x128xf32> to vector<8x128xbf16>
    %cst_29 = arith.constant dense<0.000000e+00> : vector<8x128xf32>
    %67 = tpu.matmul %66, %3, %cst_29 {dimension_numbers = #tpu.dot_dimension_numbers<[1], [0], [0], [1], [0, 0, 1, 1], [], []>} : vector<8x128xbf16>, vector<128x128xbf16>, vector<8x128xf32> -> vector<8x128xf32>
    %68 = arith.addf %65, %67 : vector<8x128xf32>
    %69 = math.tanh %68 : vector<8x128xf32>
    %70 = arith.negf %68 : vector<8x128xf32>
    %71 = math.exp %70 : vector<8x128xf32>
    %cst_30 = arith.constant 1.000000e+00 : f32
    %72 = vector.broadcast %cst_30 : f32 to vector<8x128xf32>
    %73 = arith.addf %72, %71 : vector<8x128xf32>
    %74 = arith.divf %72, %73 : vector<8x128xf32>
    %75 = arith.select %10, %69, %74 : vector<8x128xi1>, vector<8x128xf32>
    %c64_i32_31 = arith.constant 64 : i32
    %76 = tpu.dynamic_rotate %75 by %c64_i32_31 dim 1 : vector<8x128xf32>, i32 -> vector<8x128xf32>
    %c32_i32_32 = arith.constant 32 : i32
    %77 = tpu.dynamic_rotate %75 by %c32_i32_32 dim 1 : vector<8x128xf32>, i32 -> vector<8x128xf32>
    %c96_i32_33 = arith.constant 96 : i32
    %78 = tpu.dynamic_rotate %75 by %c96_i32_33 dim 1 : vector<8x128xf32>, i32 -> vector<8x128xf32>
    %79 = arith.mulf %75, %60 : vector<8x128xf32>
    %80 = arith.mulf %77, %78 : vector<8x128xf32>
    %81 = arith.addf %79, %80 : vector<8x128xf32>
    %82 = math.tanh %81 : vector<8x128xf32>
    %83 = arith.mulf %76, %82 : vector<8x128xf32>
    %cst_34 = arith.constant 0.000000e+00 : f32
    %84 = vector.broadcast %cst_34 : f32 to vector<8x128xf32>
    %85 = arith.select %12, %81, %84 : vector<8x128xi1>, vector<8x128xf32>
    %cst_35 = arith.constant 0.000000e+00 : f32
    %86 = vector.broadcast %cst_35 : f32 to vector<8x128xf32>
    %87 = arith.select %12, %83, %86 : vector<8x128xi1>, vector<8x128xf32>
    %c3 = arith.constant 3 : index
    %c0_36 = arith.constant 0 : index
    %c0_37 = arith.constant 0 : index
    %88 = vector.load %arg1[%c3, %c0_36, %c0_37] : memref<8x8x128xbf16, #tpu.memory_space<vmem>>, vector<1x8x128xbf16>
    %89 = vector.shape_cast %88 : vector<1x8x128xbf16> to vector<8x128xbf16>
    %90 = arith.extf %89 : vector<8x128xbf16> to vector<8x128xf32>
    %91 = arith.truncf %87 : vector<8x128xf32> to vector<8x128xbf16>
    %cst_38 = arith.constant dense<0.000000e+00> : vector<8x128xf32>
    %92 = tpu.matmul %91, %3, %cst_38 {dimension_numbers = #tpu.dot_dimension_numbers<[1], [0], [0], [1], [0, 0, 1, 1], [], []>} : vector<8x128xbf16>, vector<128x128xbf16>, vector<8x128xf32> -> vector<8x128xf32>
    %93 = arith.addf %90, %92 : vector<8x128xf32>
    %94 = math.tanh %93 : vector<8x128xf32>
    %95 = arith.negf %93 : vector<8x128xf32>
    %96 = math.exp %95 : vector<8x128xf32>
    %cst_39 = arith.constant 1.000000e+00 : f32
    %97 = vector.broadcast %cst_39 : f32 to vector<8x128xf32>
    %98 = arith.addf %97, %96 : vector<8x128xf32>
    %99 = arith.divf %97, %98 : vector<8x128xf32>
    %100 = arith.select %10, %94, %99 : vector<8x128xi1>, vector<8x128xf32>
    %c64_i32_40 = arith.constant 64 : i32
    %101 = tpu.dynamic_rotate %100 by %c64_i32_40 dim 1 : vector<8x128xf32>, i32 -> vector<8x128xf32>
    %c32_i32_41 = arith.constant 32 : i32
    %102 = tpu.dynamic_rotate %100 by %c32_i32_41 dim 1 : vector<8x128xf32>, i32 -> vector<8x128xf32>
    %c96_i32_42 = arith.constant 96 : i32
    %103 = tpu.dynamic_rotate %100 by %c96_i32_42 dim 1 : vector<8x128xf32>, i32 -> vector<8x128xf32>
    %104 = arith.mulf %100, %85 : vector<8x128xf32>
    %105 = arith.mulf %102, %103 : vector<8x128xf32>
    %106 = arith.addf %104, %105 : vector<8x128xf32>
    %107 = math.tanh %106 : vector<8x128xf32>
    %108 = arith.mulf %101, %107 : vector<8x128xf32>
    %cst_43 = arith.constant 0.000000e+00 : f32
    %109 = vector.broadcast %cst_43 : f32 to vector<8x128xf32>
    %110 = arith.select %12, %106, %109 : vector<8x128xi1>, vector<8x128xf32>
    %cst_44 = arith.constant 0.000000e+00 : f32
    %111 = vector.broadcast %cst_44 : f32 to vector<8x128xf32>
    %112 = arith.select %12, %108, %111 : vector<8x128xi1>, vector<8x128xf32>
    %c4 = arith.constant 4 : index
    %c0_45 = arith.constant 0 : index
    %c0_46 = arith.constant 0 : index
    %113 = vector.load %arg1[%c4, %c0_45, %c0_46] : memref<8x8x128xbf16, #tpu.memory_space<vmem>>, vector<1x8x128xbf16>
    %114 = vector.shape_cast %113 : vector<1x8x128xbf16> to vector<8x128xbf16>
    %115 = arith.extf %114 : vector<8x128xbf16> to vector<8x128xf32>
    %116 = arith.truncf %112 : vector<8x128xf32> to vector<8x128xbf16>
    %cst_47 = arith.constant dense<0.000000e+00> : vector<8x128xf32>
    %117 = tpu.matmul %116, %3, %cst_47 {dimension_numbers = #tpu.dot_dimension_numbers<[1], [0], [0], [1], [0, 0, 1, 1], [], []>} : vector<8x128xbf16>, vector<128x128xbf16>, vector<8x128xf32> -> vector<8x128xf32>
    %118 = arith.addf %115, %117 : vector<8x128xf32>
    %119 = math.tanh %118 : vector<8x128xf32>
    %120 = arith.negf %118 : vector<8x128xf32>
    %121 = math.exp %120 : vector<8x128xf32>
    %cst_48 = arith.constant 1.000000e+00 : f32
    %122 = vector.broadcast %cst_48 : f32 to vector<8x128xf32>
    %123 = arith.addf %122, %121 : vector<8x128xf32>
    %124 = arith.divf %122, %123 : vector<8x128xf32>
    %125 = arith.select %10, %119, %124 : vector<8x128xi1>, vector<8x128xf32>
    %c64_i32_49 = arith.constant 64 : i32
    %126 = tpu.dynamic_rotate %125 by %c64_i32_49 dim 1 : vector<8x128xf32>, i32 -> vector<8x128xf32>
    %c32_i32_50 = arith.constant 32 : i32
    %127 = tpu.dynamic_rotate %125 by %c32_i32_50 dim 1 : vector<8x128xf32>, i32 -> vector<8x128xf32>
    %c96_i32_51 = arith.constant 96 : i32
    %128 = tpu.dynamic_rotate %125 by %c96_i32_51 dim 1 : vector<8x128xf32>, i32 -> vector<8x128xf32>
    %129 = arith.mulf %125, %110 : vector<8x128xf32>
    %130 = arith.mulf %127, %128 : vector<8x128xf32>
    %131 = arith.addf %129, %130 : vector<8x128xf32>
    %132 = math.tanh %131 : vector<8x128xf32>
    %133 = arith.mulf %126, %132 : vector<8x128xf32>
    %cst_52 = arith.constant 0.000000e+00 : f32
    %134 = vector.broadcast %cst_52 : f32 to vector<8x128xf32>
    %135 = arith.select %12, %131, %134 : vector<8x128xi1>, vector<8x128xf32>
    %cst_53 = arith.constant 0.000000e+00 : f32
    %136 = vector.broadcast %cst_53 : f32 to vector<8x128xf32>
    %137 = arith.select %12, %133, %136 : vector<8x128xi1>, vector<8x128xf32>
    %c5 = arith.constant 5 : index
    %c0_54 = arith.constant 0 : index
    %c0_55 = arith.constant 0 : index
    %138 = vector.load %arg1[%c5, %c0_54, %c0_55] : memref<8x8x128xbf16, #tpu.memory_space<vmem>>, vector<1x8x128xbf16>
    %139 = vector.shape_cast %138 : vector<1x8x128xbf16> to vector<8x128xbf16>
    %140 = arith.extf %139 : vector<8x128xbf16> to vector<8x128xf32>
    %141 = arith.truncf %137 : vector<8x128xf32> to vector<8x128xbf16>
    %cst_56 = arith.constant dense<0.000000e+00> : vector<8x128xf32>
    %142 = tpu.matmul %141, %3, %cst_56 {dimension_numbers = #tpu.dot_dimension_numbers<[1], [0], [0], [1], [0, 0, 1, 1], [], []>} : vector<8x128xbf16>, vector<128x128xbf16>, vector<8x128xf32> -> vector<8x128xf32>
    %143 = arith.addf %140, %142 : vector<8x128xf32>
    %144 = math.tanh %143 : vector<8x128xf32>
    %145 = arith.negf %143 : vector<8x128xf32>
    %146 = math.exp %145 : vector<8x128xf32>
    %cst_57 = arith.constant 1.000000e+00 : f32
    %147 = vector.broadcast %cst_57 : f32 to vector<8x128xf32>
    %148 = arith.addf %147, %146 : vector<8x128xf32>
    %149 = arith.divf %147, %148 : vector<8x128xf32>
    %150 = arith.select %10, %144, %149 : vector<8x128xi1>, vector<8x128xf32>
    %c64_i32_58 = arith.constant 64 : i32
    %151 = tpu.dynamic_rotate %150 by %c64_i32_58 dim 1 : vector<8x128xf32>, i32 -> vector<8x128xf32>
    %c32_i32_59 = arith.constant 32 : i32
    %152 = tpu.dynamic_rotate %150 by %c32_i32_59 dim 1 : vector<8x128xf32>, i32 -> vector<8x128xf32>
    %c96_i32_60 = arith.constant 96 : i32
    %153 = tpu.dynamic_rotate %150 by %c96_i32_60 dim 1 : vector<8x128xf32>, i32 -> vector<8x128xf32>
    %154 = arith.mulf %150, %135 : vector<8x128xf32>
    %155 = arith.mulf %152, %153 : vector<8x128xf32>
    %156 = arith.addf %154, %155 : vector<8x128xf32>
    %157 = math.tanh %156 : vector<8x128xf32>
    %158 = arith.mulf %151, %157 : vector<8x128xf32>
    %cst_61 = arith.constant 0.000000e+00 : f32
    %159 = vector.broadcast %cst_61 : f32 to vector<8x128xf32>
    %160 = arith.select %12, %156, %159 : vector<8x128xi1>, vector<8x128xf32>
    %cst_62 = arith.constant 0.000000e+00 : f32
    %161 = vector.broadcast %cst_62 : f32 to vector<8x128xf32>
    %162 = arith.select %12, %158, %161 : vector<8x128xi1>, vector<8x128xf32>
    %c6 = arith.constant 6 : index
    %c0_63 = arith.constant 0 : index
    %c0_64 = arith.constant 0 : index
    %163 = vector.load %arg1[%c6, %c0_63, %c0_64] : memref<8x8x128xbf16, #tpu.memory_space<vmem>>, vector<1x8x128xbf16>
    %164 = vector.shape_cast %163 : vector<1x8x128xbf16> to vector<8x128xbf16>
    %165 = arith.extf %164 : vector<8x128xbf16> to vector<8x128xf32>
    %166 = arith.truncf %162 : vector<8x128xf32> to vector<8x128xbf16>
    %cst_65 = arith.constant dense<0.000000e+00> : vector<8x128xf32>
    %167 = tpu.matmul %166, %3, %cst_65 {dimension_numbers = #tpu.dot_dimension_numbers<[1], [0], [0], [1], [0, 0, 1, 1], [], []>} : vector<8x128xbf16>, vector<128x128xbf16>, vector<8x128xf32> -> vector<8x128xf32>
    %168 = arith.addf %165, %167 : vector<8x128xf32>
    %169 = math.tanh %168 : vector<8x128xf32>
    %170 = arith.negf %168 : vector<8x128xf32>
    %171 = math.exp %170 : vector<8x128xf32>
    %cst_66 = arith.constant 1.000000e+00 : f32
    %172 = vector.broadcast %cst_66 : f32 to vector<8x128xf32>
    %173 = arith.addf %172, %171 : vector<8x128xf32>
    %174 = arith.divf %172, %173 : vector<8x128xf32>
    %175 = arith.select %10, %169, %174 : vector<8x128xi1>, vector<8x128xf32>
    %c64_i32_67 = arith.constant 64 : i32
    %176 = tpu.dynamic_rotate %175 by %c64_i32_67 dim 1 : vector<8x128xf32>, i32 -> vector<8x128xf32>
    %c32_i32_68 = arith.constant 32 : i32
    %177 = tpu.dynamic_rotate %175 by %c32_i32_68 dim 1 : vector<8x128xf32>, i32 -> vector<8x128xf32>
    %c96_i32_69 = arith.constant 96 : i32
    %178 = tpu.dynamic_rotate %175 by %c96_i32_69 dim 1 : vector<8x128xf32>, i32 -> vector<8x128xf32>
    %179 = arith.mulf %175, %160 : vector<8x128xf32>
    %180 = arith.mulf %177, %178 : vector<8x128xf32>
    %181 = arith.addf %179, %180 : vector<8x128xf32>
    %182 = math.tanh %181 : vector<8x128xf32>
    %183 = arith.mulf %176, %182 : vector<8x128xf32>
    %cst_70 = arith.constant 0.000000e+00 : f32
    %184 = vector.broadcast %cst_70 : f32 to vector<8x128xf32>
    %185 = arith.select %12, %181, %184 : vector<8x128xi1>, vector<8x128xf32>
    %cst_71 = arith.constant 0.000000e+00 : f32
    %186 = vector.broadcast %cst_71 : f32 to vector<8x128xf32>
    %187 = arith.select %12, %183, %186 : vector<8x128xi1>, vector<8x128xf32>
    %c7 = arith.constant 7 : index
    %c0_72 = arith.constant 0 : index
    %c0_73 = arith.constant 0 : index
    %188 = vector.load %arg1[%c7, %c0_72, %c0_73] : memref<8x8x128xbf16, #tpu.memory_space<vmem>>, vector<1x8x128xbf16>
    %189 = vector.shape_cast %188 : vector<1x8x128xbf16> to vector<8x128xbf16>
    %190 = arith.extf %189 : vector<8x128xbf16> to vector<8x128xf32>
    %191 = arith.truncf %187 : vector<8x128xf32> to vector<8x128xbf16>
    %cst_74 = arith.constant dense<0.000000e+00> : vector<8x128xf32>
    %192 = tpu.matmul %191, %3, %cst_74 {dimension_numbers = #tpu.dot_dimension_numbers<[1], [0], [0], [1], [0, 0, 1, 1], [], []>} : vector<8x128xbf16>, vector<128x128xbf16>, vector<8x128xf32> -> vector<8x128xf32>
    %193 = arith.addf %190, %192 : vector<8x128xf32>
    %194 = math.tanh %193 : vector<8x128xf32>
    %195 = arith.negf %193 : vector<8x128xf32>
    %196 = math.exp %195 : vector<8x128xf32>
    %cst_75 = arith.constant 1.000000e+00 : f32
    %197 = vector.broadcast %cst_75 : f32 to vector<8x128xf32>
    %198 = arith.addf %197, %196 : vector<8x128xf32>
    %199 = arith.divf %197, %198 : vector<8x128xf32>
    %200 = arith.select %10, %194, %199 : vector<8x128xi1>, vector<8x128xf32>
    %c64_i32_76 = arith.constant 64 : i32
    %201 = tpu.dynamic_rotate %200 by %c64_i32_76 dim 1 : vector<8x128xf32>, i32 -> vector<8x128xf32>
    %c32_i32_77 = arith.constant 32 : i32
    %202 = tpu.dynamic_rotate %200 by %c32_i32_77 dim 1 : vector<8x128xf32>, i32 -> vector<8x128xf32>
    %c96_i32_78 = arith.constant 96 : i32
    %203 = tpu.dynamic_rotate %200 by %c96_i32_78 dim 1 : vector<8x128xf32>, i32 -> vector<8x128xf32>
    %204 = arith.mulf %200, %185 : vector<8x128xf32>
    %205 = arith.mulf %202, %203 : vector<8x128xf32>
    %206 = arith.addf %204, %205 : vector<8x128xf32>
    %207 = math.tanh %206 : vector<8x128xf32>
    %208 = arith.mulf %201, %207 : vector<8x128xf32>
    %cst_79 = arith.constant 0.000000e+00 : f32
    %209 = vector.broadcast %cst_79 : f32 to vector<8x128xf32>
    %210 = arith.select %12, %206, %209 : vector<8x128xi1>, vector<8x128xf32>
    %cst_80 = arith.constant 0.000000e+00 : f32
    %211 = vector.broadcast %cst_80 : f32 to vector<8x128xf32>
    %212 = arith.select %12, %208, %211 : vector<8x128xi1>, vector<8x128xf32>
    %c0_81 = arith.constant 0 : index
    %c0_82 = arith.constant 0 : index
    %213 = vector.load %arg6[%c0_81, %c0_82] : memref<8x128xf32, #tpu.memory_space<vmem>>, vector<8x128xf32>
    tpu.vector_store %arg6[%c0_81, %c0_82], %212 {strides = array<i32>} : memref<8x128xf32, #tpu.memory_space<vmem>>, vector<8x128xf32>,
    %c0_83 = arith.constant 0 : index
    %c0_84 = arith.constant 0 : index
    %214 = vector.load %arg7[%c0_83, %c0_84] : memref<8x128xf32, #tpu.memory_space<vmem>>, vector<8x128xf32>
    tpu.vector_store %arg7[%c0_83, %c0_84], %210 {strides = array<i32>} : memref<8x128xf32, #tpu.memory_space<vmem>>, vector<8x128xf32>,
    %215 = arith.truncf %212 : vector<8x128xf32> to vector<8x128xbf16>
    %cst_85 = arith.constant dense<0.000000e+00> : vector<8x8xf32>
    %216 = tpu.matmul %215, %4, %cst_85 {dimension_numbers = #tpu.dot_dimension_numbers<[1], [0], [0], [1], [0, 0, 1, 1], [], []>} : vector<8x128xbf16>, vector<128x8xbf16>, vector<8x8xf32> -> vector<8x8xf32>
    %217 = vector.broadcast %5 : vector<1x8xf32> to vector<8x8xf32>
    %218 = arith.addf %216, %217 : vector<8x8xf32>
    %c0_86 = arith.constant 0 : index
    %c0_87 = arith.constant 0 : index
    %219 = vector.load %arg5[%c0_86, %c0_87] : memref<8x8xf32, #tpu.memory_space<vmem>>, vector<8x8xf32>
    tpu.vector_store %arg5[%c0_86, %c0_87], %218 {strides = array<i32>} : memref<8x8xf32, #tpu.memory_space<vmem>>, vector<8x8xf32>,
    return
  }
  func.func @transform_0(%arg0: i32) -> (i32, i32, i32) {
    %c0_i32 = arith.constant 0 : i32
    %c0_i32_0 = arith.constant 0 : i32
    %c0_i32_1 = arith.constant 0 : i32
    return %arg0, %c0_i32, %c0_i32_0 : i32, i32, i32
  }
  func.func @transform_1(%arg0: i32) -> (i32, i32) {
    %c0_i32 = arith.constant 0 : i32
    %c0_i32_0 = arith.constant 0 : i32
    %c0_i32_1 = arith.constant 0 : i32
    return %c0_i32, %c0_i32_0 : i32, i32
  }
  func.func @transform_2(%arg0: i32) -> (i32, i32) {
    %c0_i32 = arith.constant 0 : i32
    %c0_i32_0 = arith.constant 0 : i32
    %c0_i32_1 = arith.constant 0 : i32
    return %c0_i32, %c0_i32_0 : i32, i32
  }
  func.func @transform_3(%arg0: i32) -> (i32, i32) {
    %c0_i32 = arith.constant 0 : i32
    %c0_i32_0 = arith.constant 0 : i32
    %c0_i32_1 = arith.constant 0 : i32
    return %c0_i32, %c0_i32_0 : i32, i32
  }
  func.func @transform_4(%arg0: i32) -> (i32, i32) {
    %c0_i32 = arith.constant 0 : i32
    %c0_i32_0 = arith.constant 0 : i32
    %c0_i32_1 = arith.constant 0 : i32
    return %c0_i32, %c0_i32_0 : i32, i32
  }
}

</mosaic_0001>

<llo_original>
// kernel: lstm_model_forward.2
$region0: #{lstm_model_forward.2}
  #allocation0 [shape = 'u32[]', space=smem, size = 0x4, offset = 0x4, fixed_abs, tag = 'smem constant byte address 0x4 - core index']
  #allocation1 [shape = 'u32[144,128]{1,0:T(1,128)}', space=vmem, size = 0x12000, scoped, tag = 'internal scratch']
  #allocation2 [shape = 'f32[8,128]{1,0:T(8,128)}', space=vmem, size = 0x1000, scoped, tag = 'scratch operand']
  #allocation3 [shape = 'f32[8,128]{1,0:T(8,128)}', space=vmem, size = 0x1000, scoped, tag = 'scratch operand']
  %s0 = inlined_call_operand.vmem [shape: bf16[64,16], index: 0, kind: input, shape index: {}]
  %s1 = inlined_call_operand.vmem [shape: bf16[16,128], index: 1, kind: input, shape index: {}]
  %s2 = inlined_call_operand.vmem [shape: f32[1,128], index: 2, kind: input, shape index: {}]
  %s3 = inlined_call_operand.vmem [shape: bf16[128,128], index: 3, kind: input, shape index: {}]
  %s4 = inlined_call_operand.vmem [shape: bf16[128,128], index: 4, kind: input, shape index: {}]
  %s5 = inlined_call_operand.vmem [shape: f32[1,128], index: 5, kind: input, shape index: {}]
  %s6 = inlined_call_operand.vmem [shape: bf16[8,8,128], index: 6, kind: output, shape index: {}]
  %s7 = sld [smem:[#allocation0]]
  $region38: #{lstm_model_forward.2} parent=0
    _
  %s9 = ssub.s32 1, %s7
  %s10 = scalar_select 0, %s9, %s7
  // Predicated region
  $region2: #{lstm_model_forward.2} parent=0 // pred_check
    _
  $region3: #{lstm_model_forward.2} parent=0 // pred_check_branch
    %12 = sbr.rel (0) target = $region5
  $region4: #{lstm_model_forward.2} parent=0 // pred_region
    _
  $region5: #{lstm_model_forward.2} parent=0 // pred_fallthru
    _
  // Predicated region
  $region6: #{lstm_model_forward.2} parent=0 // pred_check
    _
  $region7: #{lstm_model_forward.2} parent=0 // pred_check_branch
    %14 = sbr.rel (0) target = $region9
  $region8: #{lstm_model_forward.2} parent=0 // pred_region
    _
  $region9: #{lstm_model_forward.2} parent=0 // pred_fallthru
    _
  // Predicated region
  $region10: #{lstm_model_forward.2} parent=0 // pred_check
    _
  $region11: #{lstm_model_forward.2} parent=0 // pred_check_branch
    %16 = sbr.rel (0) target = $region13
  $region12: #{lstm_model_forward.2} parent=0 // pred_region
    _
  $region13: #{lstm_model_forward.2} parent=0 // pred_fallthru
    _
  // Predicated region
  $region14: #{lstm_model_forward.2} parent=0 // pred_check
    _
  $region15: #{lstm_model_forward.2} parent=0 // pred_check_branch
    %18 = sbr.rel (0) target = $region17
  $region16: #{lstm_model_forward.2} parent=0 // pred_region
    _
  $region17: #{lstm_model_forward.2} parent=0 // pred_fallthru
    _
  // Predicated region
  $region18: #{lstm_model_forward.2} parent=0 // pred_check
    _
  $region19: #{lstm_model_forward.2} parent=0 // pred_check_branch
    %20 = sbr.rel (0) target = $region21
  $region20: #{lstm_model_forward.2} parent=0 // pred_region
    _
  $region21: #{lstm_model_forward.2} parent=0 // pred_fallthru
    _
  // Predicated region
  $region22: #{lstm_model_forward.2} parent=0 // pred_check
    _
  $region23: #{lstm_model_forward.2} parent=0 // pred_check_branch
    %22 = sbr.rel (0) target = $region25
  $region24: #{lstm_model_forward.2} parent=0 // pred_region
    _
  $region25: #{lstm_model_forward.2} parent=0 // pred_fallthru
    _
  %p24 = scmp.eq.s32.totalorder 0, 0
  // Predicated region
  $region26: #{lstm_model_forward.2} parent=0 // pred_check
    %p25 = pneg %p24
  $region27: #{lstm_model_forward.2} parent=0 // pred_check_branch
    %27 = sbr.rel (%p25) target = $region29
  $region28: #{lstm_model_forward.2} parent=0 // pred_region
    %28 = vst [vmem:[#allocation2] sm:$0xff] 0.0
    %29 = vst [vmem:[#allocation3] sm:$0xff] 0.0
  $region29: #{lstm_model_forward.2} parent=0 // pred_fallthru
    _
  %v30 = vld [vmem:[%s0] sm:$0xf]
  %v31 = vld [vmem:[%s0 + $0x4] sm:$0xf]
  %v32 = vld [vmem:[%s0 + $0x8] sm:$0xf]
  %v33 = vld [vmem:[%s0 + $0xc] sm:$0xf]
  %v34 = vld [vmem:[%s0 + $0x10] sm:$0xf]
  %v35 = vld [vmem:[%s0 + $0x14] sm:$0xf]
  %v36 = vld [vmem:[%s0 + $0x18] sm:$0xf]
  %v37 = vld [vmem:[%s0 + $0x1c] sm:$0xf]
  %v38 = vld [vmem:[%s1] sm:$0xf]
  %v39 = vld [vmem:[%s1 + $0x4] sm:$0xf]
  %v40 = vld [vmem:[%s2] sm:$0x1]
  %v42 = vlaneseq
  %v43 = vshrl.u32 %v42, 7
  %v44 = vsub.s32 0, %v43
  %v45 = vrot.slane %v40, %v44
  %v55 = vunpack.c.l.b16 %v30
  %v56 = vunpack.c.l.b16 %v31
  %v57 = vunpack.c.l.b16 %v32
  %v58 = vunpack.c.l.b16 %v33
  %v59 = vunpack.c.l.b16 %v34
  %v60 = vunpack.c.l.b16 %v35
  %v61 = vunpack.c.l.b16 %v36
  %v62 = vunpack.c.l.b16 %v37
  %v63 = vpack.c.b16 %v56, %v55
  %v64 = vpack.c.b16 %v58, %v57
  %v65 = vpack.c.b16 %v60, %v59
  %v66 = vpack.c.b16 %v62, %v61
  %v69 = vunpack.c.l.b16 %v38
  %v70 = vunpack.c.l.b16 %v39
  %v71 = vpack.c.b16 %v70, %v69
  %vm73 = vcmask 130048
  %v75 = vsel %vm73, %v63, 0
  %v78 = vsel %vm73, %v64, 0
  %v81 = vsel %vm73, %v65, 0
  %v84 = vsel %vm73, %v66, 0
  %86 = vmatprep.subr.bf16.mxu0 0
  %87 = vmatpush1.bf16.msra.mxu0 %v71
  %88 = vmatprep.subr.bf16.mxu0 0
  %89 = vmatpush1.bf16.msra.mxu0 0
  %90 = vmatprep.subr.bf16.mxu0 0
  %91 = vmatpush1.bf16.msra.mxu0 0
  %92 = vmatprep.subr.bf16.mxu0 0
  %93 = vmatpush1.bf16.msra.mxu0 0
  %94 = vmatprep.subr.bf16.mxu0 0
  %95 = vmatpush1.bf16.msra.mxu0 0
  %96 = vmatprep.subr.bf16.mxu0 0
  %97 = vmatpush1.bf16.msra.mxu0 0
  %98 = vmatprep.subr.bf16.mxu0 0
  %99 = vmatpush1.bf16.msra.mxu0 0
  %100 = vmatprep.subr.bf16.mxu0 0
  %101 = vmatpush1.bf16.msra.mxu0 0
  %102 = vmatprep.subr.bf16.mxu0 0
  %103 = vmatpush1.bf16.msra.mxu0 0
  %104 = vmatprep.subr.bf16.mxu0 0
  %105 = vmatpush1.bf16.msra.mxu0 0
  %106 = vmatprep.subr.bf16.mxu0 0
  %107 = vmatpush1.bf16.msra.mxu0 0
  %108 = vmatprep.subr.bf16.mxu0 0
  %109 = vmatpush1.bf16.msra.mxu0 0
  %110 = vmatprep.subr.bf16.mxu0 0
  %111 = vmatpush1.bf16.msra.mxu0 0
  %112 = vmatprep.subr.bf16.mxu0 0
  %113 = vmatpush1.bf16.msra.mxu0 0
  %114 = vmatprep.subr.bf16.mxu0 0
  %115 = vmatpush1.bf16.msra.mxu0 0
  %116 = vmatprep.subr.bf16.mxu0 0
  %117 = vmatpush1.bf16.msra.mxu0 0
  %118 = vmatprep.mubr.bf16.mxu0 0
  %119 = vmatmul.mubr.bf16.gmra.mrb[0].mxu0 %v75
  %v120 = vpop.f32.mrb[0].mxu0
  %v121 = vadd.f32 %v45, %v120
  %v122 = vpop.f32.mrb[0].mxu0
  %v123 = vpop.f32.mrb[0].mxu0
  %v124 = vadd.f32 %v45, %v123
  %v125 = vpop.f32.mrb[0].mxu0
  %126 = vmatprep.mubr.bf16.mxu0 0
  %127 = vmatmul.mubr.bf16.gmra.mrb[0].mxu0 %v78
  %v128 = vpop.f32.mrb[0].mxu0
  %v129 = vadd.f32 %v45, %v128
  %v130 = vpop.f32.mrb[0].mxu0
  %v131 = vpop.f32.mrb[0].mxu0
  %v132 = vadd.f32 %v45, %v131
  %v133 = vpop.f32.mrb[0].mxu0
  %134 = vmatprep.mubr.bf16.mxu0 0
  %135 = vmatmul.mubr.bf16.gmra.mrb[0].mxu0 %v81
  %v136 = vpop.f32.mrb[0].mxu0
  %v137 = vadd.f32 %v45, %v136
  %v138 = vpop.f32.mrb[0].mxu0
  %v139 = vpop.f32.mrb[0].mxu0
  %v140 = vadd.f32 %v45, %v139
  %v141 = vpop.f32.mrb[0].mxu0
  %142 = vmatprep.mubr.bf16.mxu0 0
  %143 = vmatmul.mubr.bf16.gmra.mrb[0].mxu0 %v84
  %v144 = vpop.f32.mrb[0].mxu0
  %v145 = vadd.f32 %v45, %v144
  %v146 = vpop.f32.mrb[0].mxu0
  %v147 = vpop.f32.mrb[0].mxu0
  %v148 = vadd.f32 %v45, %v147
  %v149 = vpop.f32.mrb[0].mxu0
  %150 = vdwg.mxu0
  %v151 = vld [vmem:[%s3] sm:$0xf]
  %v152 = vld [vmem:[%s3 + $0x4] sm:$0xf]
  %v153 = vld [vmem:[%s3 + $0x8] sm:$0xf]
  %v154 = vld [vmem:[%s3 + $0xc] sm:$0xf]
  %v155 = vld [vmem:[%s3 + $0x10] sm:$0xf]
  %v156 = vld [vmem:[%s3 + $0x14] sm:$0xf]
  %v157 = vld [vmem:[%s3 + $0x18] sm:$0xf]
  %v158 = vld [vmem:[%s3 + $0x1c] sm:$0xf]
  %v159 = vld [vmem:[%s3 + $0x20] sm:$0xf]
  %v160 = vld [vmem:[%s3 + $0x24] sm:$0xf]
  %v161 = vld [vmem:[%s3 + $0x28] sm:$0xf]
  %v162 = vld [vmem:[%s3 + $0x2c] sm:$0xf]
  %v163 = vld [vmem:[%s3 + $0x30] sm:$0xf]
  %v164 = vld [vmem:[%s3 + $0x34] sm:$0xf]
  %v165 = vld [vmem:[%s3 + $0x38] sm:$0xf]
  %v166 = vld [vmem:[%s3 + $0x3c] sm:$0xf]
  %v167 = vld [vmem:[%s4] sm:$0xf]
  %v168 = vld [vmem:[%s4 + $0x4] sm:$0xf]
  %v169 = vld [vmem:[%s4 + $0x8] sm:$0xf]
  %v170 = vld [vmem:[%s4 + $0xc] sm:$0xf]
  %v171 = vld [vmem:[%s4 + $0x10] sm:$0xf]
  %v172 = vld [vmem:[%s4 + $0x14] sm:$0xf]
  %v173 = vld [vmem:[%s4 + $0x18] sm:$0xf]
  %v174 = vld [vmem:[%s4 + $0x1c] sm:$0xf]
  %v175 = vld [vmem:[%s4 + $0x20] sm:$0xf]
  %v176 = vld [vmem:[%s4 + $0x24] sm:$0xf]
  %v177 = vld [vmem:[%s4 + $0x28] sm:$0xf]
  %v178 = vld [vmem:[%s4 + $0x2c] sm:$0xf]
  %v179 = vld [vmem:[%s4 + $0x30] sm:$0xf]
  %v180 = vld [vmem:[%s4 + $0x34] sm:$0xf]
  %v181 = vld [vmem:[%s4 + $0x38] sm:$0xf]
  %v182 = vld [vmem:[%s4 + $0x3c] sm:$0xf]
  %v183 = vld [vmem:[%s5] sm:$0x1]
  %v184 = vld [vmem:[#allocation2] sm:$0xff]
  %v185 = vld [vmem:[#allocation3] sm:$0xff]
  %v186 = vlaneseq
  %v187 = vand.u32 %v186, 127
  %vm188 = vcmp.ge.s32.totalorder %v187, 96
  %vm189 = vcmp.lt.s32.totalorder %v187, 32
  %v190 = vpack.c.bf16 %v184, %v184
  %v207 = vunpack.c.l.b16 %v151
  %v208 = vunpack.c.l.b16 %v152
  %v209 = vunpack.c.l.b16 %v153
  %v210 = vunpack.c.l.b16 %v154
  %v211 = vunpack.c.l.b16 %v155
  %v212 = vunpack.c.l.b16 %v156
  %v213 = vunpack.c.l.b16 %v157
  %v214 = vunpack.c.l.b16 %v158
  %v215 = vunpack.c.l.b16 %v159
  %v216 = vunpack.c.l.b16 %v160
  %v217 = vunpack.c.l.b16 %v161
  %v218 = vunpack.c.l.b16 %v162
  %v219 = vunpack.c.l.b16 %v163
  %v220 = vunpack.c.l.b16 %v164
  %v221 = vunpack.c.l.b16 %v165
  %v222 = vunpack.c.l.b16 %v166
  %v223 = vpack.c.b16 %v208, %v207
  %v224 = vpack.c.b16 %v210, %v209
  %v225 = vpack.c.b16 %v212, %v211
  %v226 = vpack.c.b16 %v214, %v213
  %v227 = vpack.c.b16 %v216, %v215
  %v228 = vpack.c.b16 %v218, %v217
  %v229 = vpack.c.b16 %v220, %v219
  %v230 = vpack.c.b16 %v222, %v221
  %239 = vmatprep.subr.bf16.mxu0 0
  %240 = vmatpush1.bf16.msra.mxu0 %v223
  %241 = vmatprep.subr.bf16.mxu0 0
  %242 = vmatpush1.bf16.msra.mxu0 %v224
  %243 = vmatprep.subr.bf16.mxu0 0
  %244 = vmatpush1.bf16.msra.mxu0 %v225
  %245 = vmatprep.subr.bf16.mxu0 0
  %246 = vmatpush1.bf16.msra.mxu0 %v226
  %247 = vmatprep.subr.bf16.mxu0 0
  %248 = vmatpush1.bf16.msra.mxu0 %v227
  %249 = vmatprep.subr.bf16.mxu0 0
  %250 = vmatpush1.bf16.msra.mxu0 %v228
  %251 = vmatprep.subr.bf16.mxu0 0
  %252 = vmatpush1.bf16.msra.mxu0 %v229
  %253 = vmatprep.subr.bf16.mxu0 0
  %254 = vmatpush1.bf16.msra.mxu0 %v230
  %255 = vmatprep.subr.bf16.mxu0 0
  %256 = vmatpush1.bf16.msra.mxu0 0
  %257 = vmatprep.subr.bf16.mxu0 0
  %258 = vmatpush1.bf16.msra.mxu0 0
  %259 = vmatprep.subr.bf16.mxu0 0
  %260 = vmatpush1.bf16.msra.mxu0 0
  %261 = vmatprep.subr.bf16.mxu0 0
  %262 = vmatpush1.bf16.msra.mxu0 0
  %263 = vmatprep.subr.bf16.mxu0 0
  %264 = vmatpush1.bf16.msra.mxu0 0
  %265 = vmatprep.subr.bf16.mxu0 0
  %266 = vmatpush1.bf16.msra.mxu0 0
  %267 = vmatprep.subr.bf16.mxu0 0
  %268 = vmatpush1.bf16.msra.mxu0 0
  %269 = vmatprep.subr.bf16.mxu0 0
  %270 = vmatpush1.bf16.msra.mxu0 0
  %271 = vmatprep.mubr.bf16.mxu0 0
  %272 = vmatmul.mubr.bf16.gmra.mrb[0].mxu0 %v190
  %v273 = vpop.f32.mrb[0].mxu0
  %v274 = vadd.f32 0.0, %v273
  %v275 = vpop.f32.mrb[0].mxu0
  %v276 = vpop.f32.mrb[0].mxu0
  %v277 = vpop.f32.mrb[0].mxu0
  %278 = vdwg.mxu0
  %v279 = vadd.f32 %v121, %v274
  %v280 = vtanh.pop %v279
  %v281 = vxor.u32 %v279, 2147483648
  %v282 = vmul.f32 %v281, 1.442695
  %v283 = vpow.pop %v282
  %v284 = vadd.f32 %v283, 1.0
  %v285 = vrcp.pop %v284
  %v286 = vmul.f32 1.0, %v285
  %v287 = vsel %vm188, %v280, %v286
  %288 = vrot.lane.b32.xlu0 %v287, 64
  %v289 = vpop.permute.xlu0 %288
  %290 = vrot.lane.b32.xlu0 %v287, 32
  %v291 = vpop.permute.xlu0 %290
  %292 = vrot.lane.b32.xlu0 %v287, 96
  %v293 = vpop.permute.xlu0 %292
  %v294 = vmul.f32 %v287, %v185
  %v295 = vmul.f32 %v291, %v293
  %v296 = vadd.f32 %v294, %v295
  %v297 = vtanh.pop %v296
  %v298 = vmul.f32 %v289, %v297
  %v299 = vsel %vm189, %v296, 0.0
  %v300 = vsel %vm189, %v298, 0.0
  %v301 = vpack.c.bf16 %v300, %v300
  %v303 = vlaneseq
  %v304 = vshrl.u32 %v303, 7
  %v305 = vsub.s32 0, %v304
  %v306 = vrot.slane %v183, %v305
  %v324 = vunpack.c.l.b16 %v167
  %v325 = vunpack.c.l.b16 %v168
  %v326 = vunpack.c.l.b16 %v169
  %v327 = vunpack.c.l.b16 %v170
  %v328 = vunpack.c.l.b16 %v171
  %v329 = vunpack.c.l.b16 %v172
  %v330 = vunpack.c.l.b16 %v173
  %v331 = vunpack.c.l.b16 %v174
  %v332 = vunpack.c.l.b16 %v175
  %v333 = vunpack.c.l.b16 %v176
  %v334 = vunpack.c.l.b16 %v177
  %v335 = vunpack.c.l.b16 %v178
  %v336 = vunpack.c.l.b16 %v179
  %v337 = vunpack.c.l.b16 %v180
  %v338 = vunpack.c.l.b16 %v181
  %v339 = vunpack.c.l.b16 %v182
  %v340 = vpack.c.b16 %v325, %v324
  %v341 = vpack.c.b16 %v327, %v326
  %v342 = vpack.c.b16 %v329, %v328
  %v343 = vpack.c.b16 %v331, %v330
  %v344 = vpack.c.b16 %v333, %v332
  %v345 = vpack.c.b16 %v335, %v334
  %v346 = vpack.c.b16 %v337, %v336
  %v347 = vpack.c.b16 %v339, %v338
  %356 = vmatprep.subr.bf16.mxu0 0
  %357 = vmatpush1.bf16.msra.mxu0 %v340
  %358 = vmatprep.subr.bf16.mxu0 0
  %359 = vmatpush1.bf16.msra.mxu0 %v341
  %360 = vmatprep.subr.bf16.mxu0 0
  %361 = vmatpush1.bf16.msra.mxu0 %v342
  %362 = vmatprep.subr.bf16.mxu0 0
  %363 = vmatpush1.bf16.msra.mxu0 %v343
  %364 = vmatprep.subr.bf16.mxu0 0
  %365 = vmatpush1.bf16.msra.mxu0 %v344
  %366 = vmatprep.subr.bf16.mxu0 0
  %367 = vmatpush1.bf16.msra.mxu0 %v345
  %368 = vmatprep.subr.bf16.mxu0 0
  %369 = vmatpush1.bf16.msra.mxu0 %v346
  %370 = vmatprep.subr.bf16.mxu0 0
  %371 = vmatpush1.bf16.msra.mxu0 %v347
  %372 = vmatprep.subr.bf16.mxu0 0
  %373 = vmatpush1.bf16.msra.mxu0 0
  %374 = vmatprep.subr.bf16.mxu0 0
  %375 = vmatpush1.bf16.msra.mxu0 0
  %376 = vmatprep.subr.bf16.mxu0 0
  %377 = vmatpush1.bf16.msra.mxu0 0
  %378 = vmatprep.subr.bf16.mxu0 0
  %379 = vmatpush1.bf16.msra.mxu0 0
  %380 = vmatprep.subr.bf16.mxu0 0
  %381 = vmatpush1.bf16.msra.mxu0 0
  %382 = vmatprep.subr.bf16.mxu0 0
  %383 = vmatpush1.bf16.msra.mxu0 0
  %384 = vmatprep.subr.bf16.mxu0 0
  %385 = vmatpush1.bf16.msra.mxu0 0
  %386 = vmatprep.subr.bf16.mxu0 0
  %387 = vmatpush1.bf16.msra.mxu0 0
  %388 = vmatprep.mubr.bf16.mxu0 0
  %389 = vmatmul.mubr.bf16.gmra.mrb[0].mxu0 %v301
  %v390 = vpop.f32.mrb[0].mxu0
  %v391 = vadd.f32 %v306, %v390
  %v392 = vpop.f32.mrb[0].mxu0
  %v393 = vpop.f32.mrb[0].mxu0
  %v394 = vpop.f32.mrb[0].mxu0
  %395 = vdwg.mxu0
  %v396 = vpack.c.bf16 %v391, %v391
  %397 = vst [vmem:[%s6] sm:$0xf] %v396
  %398 = vmatprep.subr.bf16.mxu0 0
  %399 = vmatpush1.bf16.msra.mxu0 %v223
  %400 = vmatprep.subr.bf16.mxu0 0
  %401 = vmatpush1.bf16.msra.mxu0 %v224
  %402 = vmatprep.subr.bf16.mxu0 0
  %403 = vmatpush1.bf16.msra.mxu0 %v225
  %404 = vmatprep.subr.bf16.mxu0 0
  %405 = vmatpush1.bf16.msra.mxu0 %v226
  %406 = vmatprep.subr.bf16.mxu0 0
  %407 = vmatpush1.bf16.msra.mxu0 %v227
  %408 = vmatprep.subr.bf16.mxu0 0
  %409 = vmatpush1.bf16.msra.mxu0 %v228
  %410 = vmatprep.subr.bf16.mxu0 0
  %411 = vmatpush1.bf16.msra.mxu0 %v229
  %412 = vmatprep.subr.bf16.mxu0 0
  %413 = vmatpush1.bf16.msra.mxu0 %v230
  %414 = vmatprep.subr.bf16.mxu0 0
  %415 = vmatpush1.bf16.msra.mxu0 0
  %416 = vmatprep.subr.bf16.mxu0 0
  %417 = vmatpush1.bf16.msra.mxu0 0
  %418 = vmatprep.subr.bf16.mxu0 0
  %419 = vmatpush1.bf16.msra.mxu0 0
  %420 = vmatprep.subr.bf16.mxu0 0
  %421 = vmatpush1.bf16.msra.mxu0 0
  %422 = vmatprep.subr.bf16.mxu0 0
  %423 = vmatpush1.bf16.msra.mxu0 0
  %424 = vmatprep.subr.bf16.mxu0 0
  %425 = vmatpush1.bf16.msra.mxu0 0
  %426 = vmatprep.subr.bf16.mxu0 0
  %427 = vmatpush1.bf16.msra.mxu0 0
  %428 = vmatprep.subr.bf16.mxu0 0
  %429 = vmatpush1.bf16.msra.mxu0 0
  %430 = vmatprep.mubr.bf16.mxu0 0
  %431 = vmatmul.mubr.bf16.gmra.mrb[0].mxu0 %v301
  %v432 = vpop.f32.mrb[0].mxu0
  %v433 = vadd.f32 0.0, %v432
  %v434 = vpop.f32.mrb[0].mxu0
  %v435 = vpop.f32.mrb[0].mxu0
  %v436 = vpop.f32.mrb[0].mxu0
  %437 = vdwg.mxu0
  %v438 = vadd.f32 %v124, %v433
  %v439 = vtanh.pop %v438
  %v440 = vxor.u32 %v438, 2147483648
  %v441 = vmul.f32 %v440, 1.442695
  %v442 = vpow.pop %v441
  %v443 = vadd.f32 %v442, 1.0
  %v444 = vrcp.pop %v443
  %v445 = vmul.f32 1.0, %v444
  %v446 = vsel %vm188, %v439, %v445
  %447 = vrot.lane.b32.xlu0 %v446, 64
  %v448 = vpop.permute.xlu0 %447
  %449 = vrot.lane.b32.xlu0 %v446, 32
  %v450 = vpop.permute.xlu0 %449
  %451 = vrot.lane.b32.xlu0 %v446, 96
  %v452 = vpop.permute.xlu0 %451
  %v453 = vmul.f32 %v446, %v299
  %v454 = vmul.f32 %v450, %v452
  %v455 = vadd.f32 %v453, %v454
  %v456 = vtanh.pop %v455
  %v457 = vmul.f32 %v448, %v456
  %v458 = vsel %vm189, %v455, 0.0
  %v459 = vsel %vm189, %v457, 0.0
  %v460 = vpack.c.bf16 %v459, %v459
  %461 = vmatprep.subr.bf16.mxu0 0
  %462 = vmatpush1.bf16.msra.mxu0 %v340
  %463 = vmatprep.subr.bf16.mxu0 0
  %464 = vmatpush1.bf16.msra.mxu0 %v341
  %465 = vmatprep.subr.bf16.mxu0 0
  %466 = vmatpush1.bf16.msra.mxu0 %v342
  %467 = vmatprep.subr.bf16.mxu0 0
  %468 = vmatpush1.bf16.msra.mxu0 %v343
  %469 = vmatprep.subr.bf16.mxu0 0
  %470 = vmatpush1.bf16.msra.mxu0 %v344
  %471 = vmatprep.subr.bf16.mxu0 0
  %472 = vmatpush1.bf16.msra.mxu0 %v345
  %473 = vmatprep.subr.bf16.mxu0 0
  %474 = vmatpush1.bf16.msra.mxu0 %v346
  %475 = vmatprep.subr.bf16.mxu0 0
  %476 = vmatpush1.bf16.msra.mxu0 %v347
  %477 = vmatprep.subr.bf16.mxu0 0
  %478 = vmatpush1.bf16.msra.mxu0 0
  %479 = vmatprep.subr.bf16.mxu0 0
  %480 = vmatpush1.bf16.msra.mxu0 0
  %481 = vmatprep.subr.bf16.mxu0 0
  %482 = vmatpush1.bf16.msra.mxu0 0
  %483 = vmatprep.subr.bf16.mxu0 0
  %484 = vmatpush1.bf16.msra.mxu0 0
  %485 = vmatprep.subr.bf16.mxu0 0
  %486 = vmatpush1.bf16.msra.mxu0 0
  %487 = vmatprep.subr.bf16.mxu0 0
  %488 = vmatpush1.bf16.msra.mxu0 0
  %489 = vmatprep.subr.bf16.mxu0 0
  %490 = vmatpush1.bf16.msra.mxu0 0
  %491 = vmatprep.subr.bf16.mxu0 0
  %492 = vmatpush1.bf16.msra.mxu0 0
  %493 = vmatprep.mubr.bf16.mxu0 0
  %494 = vmatmul.mubr.bf16.gmra.mrb[0].mxu0 %v460
  %v495 = vpop.f32.mrb[0].mxu0
  %v496 = vadd.f32 %v306, %v495
  %v497 = vpop.f32.mrb[0].mxu0
  %v498 = vpop.f32.mrb[0].mxu0
  %v499 = vpop.f32.mrb[0].mxu0
  %500 = vdwg.mxu0
  %v501 = vpack.c.bf16 %v496, %v496
  %s502 = scalar_lea.vmem %s6, 4
  %503 = vst [vmem:[%s502] sm:$0xf] %v501
  %504 = vmatprep.subr.bf16.mxu0 0
  %505 = vmatpush1.bf16.msra.mxu0 %v223
  %506 = vmatprep.subr.bf16.mxu0 0
  %507 = vmatpush1.bf16.msra.mxu0 %v224
  %508 = vmatprep.subr.bf16.mxu0 0
  %509 = vmatpush1.bf16.msra.mxu0 %v225
  %510 = vmatprep.subr.bf16.mxu0 0
  %511 = vmatpush1.bf16.msra.mxu0 %v226
  %512 = vmatprep.subr.bf16.mxu0 0
  %513 = vmatpush1.bf16.msra.mxu0 %v227
  %514 = vmatprep.subr.bf16.mxu0 0
  %515 = vmatpush1.bf16.msra.mxu0 %v228
  %516 = vmatprep.subr.bf16.mxu0 0
  %517 = vmatpush1.bf16.msra.mxu0 %v229
  %518 = vmatprep.subr.bf16.mxu0 0
  %519 = vmatpush1.bf16.msra.mxu0 %v230
  %520 = vmatprep.subr.bf16.mxu0 0
  %521 = vmatpush1.bf16.msra.mxu0 0
  %522 = vmatprep.subr.bf16.mxu0 0
  %523 = vmatpush1.bf16.msra.mxu0 0
  %524 = vmatprep.subr.bf16.mxu0 0
  %525 = vmatpush1.bf16.msra.mxu0 0
  %526 = vmatprep.subr.bf16.mxu0 0
  %527 = vmatpush1.bf16.msra.mxu0 0
  %528 = vmatprep.subr.bf16.mxu0 0
  %529 = vmatpush1.bf16.msra.mxu0 0
  %530 = vmatprep.subr.bf16.mxu0 0
  %531 = vmatpush1.bf16.msra.mxu0 0
  %532 = vmatprep.subr.bf16.mxu0 0
  %533 = vmatpush1.bf16.msra.mxu0 0
  %534 = vmatprep.subr.bf16.mxu0 0
  %535 = vmatpush1.bf16.msra.mxu0 0
  %536 = vmatprep.mubr.bf16.mxu0 0
  %537 = vmatmul.mubr.bf16.gmra.mrb[0].mxu0 %v460
  %v538 = vpop.f32.mrb[0].mxu0
  %v539 = vadd.f32 0.0, %v538
  %v540 = vpop.f32.mrb[0].mxu0
  %v541 = vpop.f32.mrb[0].mxu0
  %v542 = vpop.f32.mrb[0].mxu0
  %543 = vdwg.mxu0
  %v544 = vadd.f32 %v129, %v539
  %v545 = vtanh.pop %v544
  %v546 = vxor.u32 %v544, 2147483648
  %v547 = vmul.f32 %v546, 1.442695
  %v548 = vpow.pop %v547
  %v549 = vadd.f32 %v548, 1.0
  %v550 = vrcp.pop %v549
  %v551 = vmul.f32 1.0, %v550
  %v552 = vsel %vm188, %v545, %v551
  %553 = vrot.lane.b32.xlu0 %v552, 64
  %v554 = vpop.permute.xlu0 %553
  %555 = vrot.lane.b32.xlu0 %v552, 32
  %v556 = vpop.permute.xlu0 %555
  %557 = vrot.lane.b32.xlu0 %v552, 96
  %v558 = vpop.permute.xlu0 %557
  %v559 = vmul.f32 %v552, %v458
  %v560 = vmul.f32 %v556, %v558
  %v561 = vadd.f32 %v559, %v560
  %v562 = vtanh.pop %v561
  %v563 = vmul.f32 %v554, %v562
  %v564 = vsel %vm189, %v561, 0.0
  %v565 = vsel %vm189, %v563, 0.0
  %v566 = vpack.c.bf16 %v565, %v565
  %567 = vmatprep.subr.bf16.mxu0 0
  %568 = vmatpush1.bf16.msra.mxu0 %v340
  %569 = vmatprep.subr.bf16.mxu0 0
  %570 = vmatpush1.bf16.msra.mxu0 %v341
  %571 = vmatprep.subr.bf16.mxu0 0
  %572 = vmatpush1.bf16.msra.mxu0 %v342
  %573 = vmatprep.subr.bf16.mxu0 0
  %574 = vmatpush1.bf16.msra.mxu0 %v343
  %575 = vmatprep.subr.bf16.mxu0 0
  %576 = vmatpush1.bf16.msra.mxu0 %v344
  %577 = vmatprep.subr.bf16.mxu0 0
  %578 = vmatpush1.bf16.msra.mxu0 %v345
  %579 = vmatprep.subr.bf16.mxu0 0
  %580 = vmatpush1.bf16.msra.mxu0 %v346
  %581 = vmatprep.subr.bf16.mxu0 0
  %582 = vmatpush1.bf16.msra.mxu0 %v347
  %583 = vmatprep.subr.bf16.mxu0 0
  %584 = vmatpush1.bf16.msra.mxu0 0
  %585 = vmatprep.subr.bf16.mxu0 0
  %586 = vmatpush1.bf16.msra.mxu0 0
  %587 = vmatprep.subr.bf16.mxu0 0
  %588 = vmatpush1.bf16.msra.mxu0 0
  %589 = vmatprep.subr.bf16.mxu0 0
  %590 = vmatpush1.bf16.msra.mxu0 0
  %591 = vmatprep.subr.bf16.mxu0 0
  %592 = vmatpush1.bf16.msra.mxu0 0
  %593 = vmatprep.subr.bf16.mxu0 0
  %594 = vmatpush1.bf16.msra.mxu0 0
  %595 = vmatprep.subr.bf16.mxu0 0
  %596 = vmatpush1.bf16.msra.mxu0 0
  %597 = vmatprep.subr.bf16.mxu0 0
  %598 = vmatpush1.bf16.msra.mxu0 0
  %599 = vmatprep.mubr.bf16.mxu0 0
  %600 = vmatmul.mubr.bf16.gmra.mrb[0].mxu0 %v566
  %v601 = vpop.f32.mrb[0].mxu0
  %v602 = vadd.f32 %v306, %v601
  %v603 = vpop.f32.mrb[0].mxu0
  %v604 = vpop.f32.mrb[0].mxu0
  %v605 = vpop.f32.mrb[0].mxu0
  %606 = vdwg.mxu0
  %v607 = vpack.c.bf16 %v602, %v602
  %s608 = scalar_lea.vmem %s6, 8
  %609 = vst [vmem:[%s608] sm:$0xf] %v607
  %610 = vmatprep.subr.bf16.mxu0 0
  %611 = vmatpush1.bf16.msra.mxu0 %v223
  %612 = vmatprep.subr.bf16.mxu0 0
  %613 = vmatpush1.bf16.msra.mxu0 %v224
  %614 = vmatprep.subr.bf16.mxu0 0
  %615 = vmatpush1.bf16.msra.mxu0 %v225
  %616 = vmatprep.subr.bf16.mxu0 0
  %617 = vmatpush1.bf16.msra.mxu0 %v226
  %618 = vmatprep.subr.bf16.mxu0 0
  %619 = vmatpush1.bf16.msra.mxu0 %v227
  %620 = vmatprep.subr.bf16.mxu0 0
  %621 = vmatpush1.bf16.msra.mxu0 %v228
  %622 = vmatprep.subr.bf16.mxu0 0
  %623 = vmatpush1.bf16.msra.mxu0 %v229
  %624 = vmatprep.subr.bf16.mxu0 0
  %625 = vmatpush1.bf16.msra.mxu0 %v230
  %626 = vmatprep.subr.bf16.mxu0 0
  %627 = vmatpush1.bf16.msra.mxu0 0
  %628 = vmatprep.subr.bf16.mxu0 0
  %629 = vmatpush1.bf16.msra.mxu0 0
  %630 = vmatprep.subr.bf16.mxu0 0
  %631 = vmatpush1.bf16.msra.mxu0 0
  %632 = vmatprep.subr.bf16.mxu0 0
  %633 = vmatpush1.bf16.msra.mxu0 0
  %634 = vmatprep.subr.bf16.mxu0 0
  %635 = vmatpush1.bf16.msra.mxu0 0
  %636 = vmatprep.subr.bf16.mxu0 0
  %637 = vmatpush1.bf16.msra.mxu0 0
  %638 = vmatprep.subr.bf16.mxu0 0
  %639 = vmatpush1.bf16.msra.mxu0 0
  %640 = vmatprep.subr.bf16.mxu0 0
  %641 = vmatpush1.bf16.msra.mxu0 0
  %642 = vmatprep.mubr.bf16.mxu0 0
  %643 = vmatmul.mubr.bf16.gmra.mrb[0].mxu0 %v566
  %v644 = vpop.f32.mrb[0].mxu0
  %v645 = vadd.f32 0.0, %v644
  %v646 = vpop.f32.mrb[0].mxu0
  %v647 = vpop.f32.mrb[0].mxu0
  %v648 = vpop.f32.mrb[0].mxu0
  %649 = vdwg.mxu0
  %v650 = vadd.f32 %v132, %v645
  %v651 = vtanh.pop %v650
  %v652 = vxor.u32 %v650, 2147483648
  %v653 = vmul.f32 %v652, 1.442695
  %v654 = vpow.pop %v653
  %v655 = vadd.f32 %v654, 1.0
  %v656 = vrcp.pop %v655
  %v657 = vmul.f32 1.0, %v656
  %v658 = vsel %vm188, %v651, %v657
  %659 = vrot.lane.b32.xlu0 %v658, 64
  %v660 = vpop.permute.xlu0 %659
  %661 = vrot.lane.b32.xlu0 %v658, 32
  %v662 = vpop.permute.xlu0 %661
  %663 = vrot.lane.b32.xlu0 %v658, 96
  %v664 = vpop.permute.xlu0 %663
  %v665 = vmul.f32 %v658, %v564
  %v666 = vmul.f32 %v662, %v664
  %v667 = vadd.f32 %v665, %v666
  %v668 = vtanh.pop %v667
  %v669 = vmul.f32 %v660, %v668
  %v670 = vsel %vm189, %v667, 0.0
  %v671 = vsel %vm189, %v669, 0.0
  %v672 = vpack.c.bf16 %v671, %v671
  %673 = vmatprep.subr.bf16.mxu0 0
  %674 = vmatpush1.bf16.msra.mxu0 %v340
  %675 = vmatprep.subr.bf16.mxu0 0
  %676 = vmatpush1.bf16.msra.mxu0 %v341
  %677 = vmatprep.subr.bf16.mxu0 0
  %678 = vmatpush1.bf16.msra.mxu0 %v342
  %679 = vmatprep.subr.bf16.mxu0 0
  %680 = vmatpush1.bf16.msra.mxu0 %v343
  %681 = vmatprep.subr.bf16.mxu0 0
  %682 = vmatpush1.bf16.msra.mxu0 %v344
  %683 = vmatprep.subr.bf16.mxu0 0
  %684 = vmatpush1.bf16.msra.mxu0 %v345
  %685 = vmatprep.subr.bf16.mxu0 0
  %686 = vmatpush1.bf16.msra.mxu0 %v346
  %687 = vmatprep.subr.bf16.mxu0 0
  %688 = vmatpush1.bf16.msra.mxu0 %v347
  %689 = vmatprep.subr.bf16.mxu0 0
  %690 = vmatpush1.bf16.msra.mxu0 0
  %691 = vmatprep.subr.bf16.mxu0 0
  %692 = vmatpush1.bf16.msra.mxu0 0
  %693 = vmatprep.subr.bf16.mxu0 0
  %694 = vmatpush1.bf16.msra.mxu0 0
  %695 = vmatprep.subr.bf16.mxu0 0
  %696 = vmatpush1.bf16.msra.mxu0 0
  %697 = vmatprep.subr.bf16.mxu0 0
  %698 = vmatpush1.bf16.msra.mxu0 0
  %699 = vmatprep.subr.bf16.mxu0 0
  %700 = vmatpush1.bf16.msra.mxu0 0
  %701 = vmatprep.subr.bf16.mxu0 0
  %702 = vmatpush1.bf16.msra.mxu0 0
  %703 = vmatprep.subr.bf16.mxu0 0
  %704 = vmatpush1.bf16.msra.mxu0 0
  %705 = vmatprep.mubr.bf16.mxu0 0
  %706 = vmatmul.mubr.bf16.gmra.mrb[0].mxu0 %v672
  %v707 = vpop.f32.mrb[0].mxu0
  %v708 = vadd.f32 %v306, %v707
  %v709 = vpop.f32.mrb[0].mxu0
  %v710 = vpop.f32.mrb[0].mxu0
  %v711 = vpop.f32.mrb[0].mxu0
  %712 = vdwg.mxu0
  %v713 = vpack.c.bf16 %v708, %v708
  %s714 = scalar_lea.vmem %s6, 12
  %715 = vst [vmem:[%s714] sm:$0xf] %v713
  %716 = vmatprep.subr.bf16.mxu0 0
  %717 = vmatpush1.bf16.msra.mxu0 %v223
  %718 = vmatprep.subr.bf16.mxu0 0
  %719 = vmatpush1.bf16.msra.mxu0 %v224
  %720 = vmatprep.subr.bf16.mxu0 0
  %721 = vmatpush1.bf16.msra.mxu0 %v225
  %722 = vmatprep.subr.bf16.mxu0 0
  %723 = vmatpush1.bf16.msra.mxu0 %v226
  %724 = vmatprep.subr.bf16.mxu0 0
  %725 = vmatpush1.bf16.msra.mxu0 %v227
  %726 = vmatprep.subr.bf16.mxu0 0
  %727 = vmatpush1.bf16.msra.mxu0 %v228
  %728 = vmatprep.subr.bf16.mxu0 0
  %729 = vmatpush1.bf16.msra.mxu0 %v229
  %730 = vmatprep.subr.bf16.mxu0 0
  %731 = vmatpush1.bf16.msra.mxu0 %v230
  %732 = vmatprep.subr.bf16.mxu0 0
  %733 = vmatpush1.bf16.msra.mxu0 0
  %734 = vmatprep.subr.bf16.mxu0 0
  %735 = vmatpush1.bf16.msra.mxu0 0
  %736 = vmatprep.subr.bf16.mxu0 0
  %737 = vmatpush1.bf16.msra.mxu0 0
  %738 = vmatprep.subr.bf16.mxu0 0
  %739 = vmatpush1.bf16.msra.mxu0 0
  %740 = vmatprep.subr.bf16.mxu0 0
  %741 = vmatpush1.bf16.msra.mxu0 0
  %742 = vmatprep.subr.bf16.mxu0 0
  %743 = vmatpush1.bf16.msra.mxu0 0
  %744 = vmatprep.subr.bf16.mxu0 0
  %745 = vmatpush1.bf16.msra.mxu0 0
  %746 = vmatprep.subr.bf16.mxu0 0
  %747 = vmatpush1.bf16.msra.mxu0 0
  %748 = vmatprep.mubr.bf16.mxu0 0
  %749 = vmatmul.mubr.bf16.gmra.mrb[0].mxu0 %v672
  %v750 = vpop.f32.mrb[0].mxu0
  %v751 = vadd.f32 0.0, %v750
  %v752 = vpop.f32.mrb[0].mxu0
  %v753 = vpop.f32.mrb[0].mxu0
  %v754 = vpop.f32.mrb[0].mxu0
  %755 = vdwg.mxu0
  %v756 = vadd.f32 %v137, %v751
  %v757 = vtanh.pop %v756
  %v758 = vxor.u32 %v756, 2147483648
  %v759 = vmul.f32 %v758, 1.442695
  %v760 = vpow.pop %v759
  %v761 = vadd.f32 %v760, 1.0
  %v762 = vrcp.pop %v761
  %v763 = vmul.f32 1.0, %v762
  %v764 = vsel %vm188, %v757, %v763
  %765 = vrot.lane.b32.xlu0 %v764, 64
  %v766 = vpop.permute.xlu0 %765
  %767 = vrot.lane.b32.xlu0 %v764, 32
  %v768 = vpop.permute.xlu0 %767
  %769 = vrot.lane.b32.xlu0 %v764, 96
  %v770 = vpop.permute.xlu0 %769
  %v771 = vmul.f32 %v764, %v670
  %v772 = vmul.f32 %v768, %v770
  %v773 = vadd.f32 %v771, %v772
  %v774 = vtanh.pop %v773
  %v775 = vmul.f32 %v766, %v774
  %v776 = vsel %vm189, %v773, 0.0
  %v777 = vsel %vm189, %v775, 0.0
  %v778 = vpack.c.bf16 %v777, %v777
  %779 = vmatprep.subr.bf16.mxu0 0
  %780 = vmatpush1.bf16.msra.mxu0 %v340
  %781 = vmatprep.subr.bf16.mxu0 0
  %782 = vmatpush1.bf16.msra.mxu0 %v341
  %783 = vmatprep.subr.bf16.mxu0 0
  %784 = vmatpush1.bf16.msra.mxu0 %v342
  %785 = vmatprep.subr.bf16.mxu0 0
  %786 = vmatpush1.bf16.msra.mxu0 %v343
  %787 = vmatprep.subr.bf16.mxu0 0
  %788 = vmatpush1.bf16.msra.mxu0 %v344
  %789 = vmatprep.subr.bf16.mxu0 0
  %790 = vmatpush1.bf16.msra.mxu0 %v345
  %791 = vmatprep.subr.bf16.mxu0 0
  %792 = vmatpush1.bf16.msra.mxu0 %v346
  %793 = vmatprep.subr.bf16.mxu0 0
  %794 = vmatpush1.bf16.msra.mxu0 %v347
  %795 = vmatprep.subr.bf16.mxu0 0
  %796 = vmatpush1.bf16.msra.mxu0 0
  %797 = vmatprep.subr.bf16.mxu0 0
  %798 = vmatpush1.bf16.msra.mxu0 0
  %799 = vmatprep.subr.bf16.mxu0 0
  %800 = vmatpush1.bf16.msra.mxu0 0
  %801 = vmatprep.subr.bf16.mxu0 0
  %802 = vmatpush1.bf16.msra.mxu0 0
  %803 = vmatprep.subr.bf16.mxu0 0
  %804 = vmatpush1.bf16.msra.mxu0 0
  %805 = vmatprep.subr.bf16.mxu0 0
  %806 = vmatpush1.bf16.msra.mxu0 0
  %807 = vmatprep.subr.bf16.mxu0 0
  %808 = vmatpush1.bf16.msra.mxu0 0
  %809 = vmatprep.subr.bf16.mxu0 0
  %810 = vmatpush1.bf16.msra.mxu0 0
  %811 = vmatprep.mubr.bf16.mxu0 0
  %812 = vmatmul.mubr.bf16.gmra.mrb[0].mxu0 %v778
  %v813 = vpop.f32.mrb[0].mxu0
  %v814 = vadd.f32 %v306, %v813
  %v815 = vpop.f32.mrb[0].mxu0
  %v816 = vpop.f32.mrb[0].mxu0
  %v817 = vpop.f32.mrb[0].mxu0
  %818 = vdwg.mxu0
  %v819 = vpack.c.bf16 %v814, %v814
  %s820 = scalar_lea.vmem %s6, 16
  %821 = vst [vmem:[%s820] sm:$0xf] %v819
  %822 = vmatprep.subr.bf16.mxu0 0
  %823 = vmatpush1.bf16.msra.mxu0 %v223
  %824 = vmatprep.subr.bf16.mxu0 0
  %825 = vmatpush1.bf16.msra.mxu0 %v224
  %826 = vmatprep.subr.bf16.mxu0 0
  %827 = vmatpush1.bf16.msra.mxu0 %v225
  %828 = vmatprep.subr.bf16.mxu0 0
  %829 = vmatpush1.bf16.msra.mxu0 %v226
  %830 = vmatprep.subr.bf16.mxu0 0
  %831 = vmatpush1.bf16.msra.mxu0 %v227
  %832 = vmatprep.subr.bf16.mxu0 0
  %833 = vmatpush1.bf16.msra.mxu0 %v228
  %834 = vmatprep.subr.bf16.mxu0 0
  %835 = vmatpush1.bf16.msra.mxu0 %v229
  %836 = vmatprep.subr.bf16.mxu0 0
  %837 = vmatpush1.bf16.msra.mxu0 %v230
  %838 = vmatprep.subr.bf16.mxu0 0
  %839 = vmatpush1.bf16.msra.mxu0 0
  %840 = vmatprep.subr.bf16.mxu0 0
  %841 = vmatpush1.bf16.msra.mxu0 0
  %842 = vmatprep.subr.bf16.mxu0 0
  %843 = vmatpush1.bf16.msra.mxu0 0
  %844 = vmatprep.subr.bf16.mxu0 0
  %845 = vmatpush1.bf16.msra.mxu0 0
  %846 = vmatprep.subr.bf16.mxu0 0
  %847 = vmatpush1.bf16.msra.mxu0 0
  %848 = vmatprep.subr.bf16.mxu0 0
  %849 = vmatpush1.bf16.msra.mxu0 0
  %850 = vmatprep.subr.bf16.mxu0 0
  %851 = vmatpush1.bf16.msra.mxu0 0
  %852 = vmatprep.subr.bf16.mxu0 0
  %853 = vmatpush1.bf16.msra.mxu0 0
  %854 = vmatprep.mubr.bf16.mxu0 0
  %855 = vmatmul.mubr.bf16.gmra.mrb[0].mxu0 %v778
  %v856 = vpop.f32.mrb[0].mxu0
  %v857 = vadd.f32 0.0, %v856
  %v858 = vpop.f32.mrb[0].mxu0
  %v859 = vpop.f32.mrb[0].mxu0
  %v860 = vpop.f32.mrb[0].mxu0
  %861 = vdwg.mxu0
  %v862 = vadd.f32 %v140, %v857
  %v863 = vtanh.pop %v862
  %v864 = vxor.u32 %v862, 2147483648
  %v865 = vmul.f32 %v864, 1.442695
  %v866 = vpow.pop %v865
  %v867 = vadd.f32 %v866, 1.0
  %v868 = vrcp.pop %v867
  %v869 = vmul.f32 1.0, %v868
  %v870 = vsel %vm188, %v863, %v869
  %871 = vrot.lane.b32.xlu0 %v870, 64
  %v872 = vpop.permute.xlu0 %871
  %873 = vrot.lane.b32.xlu0 %v870, 32
  %v874 = vpop.permute.xlu0 %873
  %875 = vrot.lane.b32.xlu0 %v870, 96
  %v876 = vpop.permute.xlu0 %875
  %v877 = vmul.f32 %v870, %v776
  %v878 = vmul.f32 %v874, %v876
  %v879 = vadd.f32 %v877, %v878
  %v880 = vtanh.pop %v879
  %v881 = vmul.f32 %v872, %v880
  %v882 = vsel %vm189, %v879, 0.0
  %v883 = vsel %vm189, %v881, 0.0
  %v884 = vpack.c.bf16 %v883, %v883
  %885 = vmatprep.subr.bf16.mxu0 0
  %886 = vmatpush1.bf16.msra.mxu0 %v340
  %887 = vmatprep.subr.bf16.mxu0 0
  %888 = vmatpush1.bf16.msra.mxu0 %v341
  %889 = vmatprep.subr.bf16.mxu0 0
  %890 = vmatpush1.bf16.msra.mxu0 %v342
  %891 = vmatprep.subr.bf16.mxu0 0
  %892 = vmatpush1.bf16.msra.mxu0 %v343
  %893 = vmatprep.subr.bf16.mxu0 0
  %894 = vmatpush1.bf16.msra.mxu0 %v344
  %895 = vmatprep.subr.bf16.mxu0 0
  %896 = vmatpush1.bf16.msra.mxu0 %v345
  %897 = vmatprep.subr.bf16.mxu0 0
  %898 = vmatpush1.bf16.msra.mxu0 %v346
  %899 = vmatprep.subr.bf16.mxu0 0
  %900 = vmatpush1.bf16.msra.mxu0 %v347
  %901 = vmatprep.subr.bf16.mxu0 0
  %902 = vmatpush1.bf16.msra.mxu0 0
  %903 = vmatprep.subr.bf16.mxu0 0
  %904 = vmatpush1.bf16.msra.mxu0 0
  %905 = vmatprep.subr.bf16.mxu0 0
  %906 = vmatpush1.bf16.msra.mxu0 0
  %907 = vmatprep.subr.bf16.mxu0 0
  %908 = vmatpush1.bf16.msra.mxu0 0
  %909 = vmatprep.subr.bf16.mxu0 0
  %910 = vmatpush1.bf16.msra.mxu0 0
  %911 = vmatprep.subr.bf16.mxu0 0
  %912 = vmatpush1.bf16.msra.mxu0 0
  %913 = vmatprep.subr.bf16.mxu0 0
  %914 = vmatpush1.bf16.msra.mxu0 0
  %915 = vmatprep.subr.bf16.mxu0 0
  %916 = vmatpush1.bf16.msra.mxu0 0
  %917 = vmatprep.mubr.bf16.mxu0 0
  %918 = vmatmul.mubr.bf16.gmra.mrb[0].mxu0 %v884
  %v919 = vpop.f32.mrb[0].mxu0
  %v920 = vadd.f32 %v306, %v919
  %v921 = vpop.f32.mrb[0].mxu0
  %v922 = vpop.f32.mrb[0].mxu0
  %v923 = vpop.f32.mrb[0].mxu0
  %924 = vdwg.mxu0
  %v925 = vpack.c.bf16 %v920, %v920
  %s926 = scalar_lea.vmem %s6, 20
  %927 = vst [vmem:[%s926] sm:$0xf] %v925
  %928 = vmatprep.subr.bf16.mxu0 0
  %929 = vmatpush1.bf16.msra.mxu0 %v223
  %930 = vmatprep.subr.bf16.mxu0 0
  %931 = vmatpush1.bf16.msra.mxu0 %v224
  %932 = vmatprep.subr.bf16.mxu0 0
  %933 = vmatpush1.bf16.msra.mxu0 %v225
  %934 = vmatprep.subr.bf16.mxu0 0
  %935 = vmatpush1.bf16.msra.mxu0 %v226
  %936 = vmatprep.subr.bf16.mxu0 0
  %937 = vmatpush1.bf16.msra.mxu0 %v227
  %938 = vmatprep.subr.bf16.mxu0 0
  %939 = vmatpush1.bf16.msra.mxu0 %v228
  %940 = vmatprep.subr.bf16.mxu0 0
  %941 = vmatpush1.bf16.msra.mxu0 %v229
  %942 = vmatprep.subr.bf16.mxu0 0
  %943 = vmatpush1.bf16.msra.mxu0 %v230
  %944 = vmatprep.subr.bf16.mxu0 0
  %945 = vmatpush1.bf16.msra.mxu0 0
  %946 = vmatprep.subr.bf16.mxu0 0
  %947 = vmatpush1.bf16.msra.mxu0 0
  %948 = vmatprep.subr.bf16.mxu0 0
  %949 = vmatpush1.bf16.msra.mxu0 0
  %950 = vmatprep.subr.bf16.mxu0 0
  %951 = vmatpush1.bf16.msra.mxu0 0
  %952 = vmatprep.subr.bf16.mxu0 0
  %953 = vmatpush1.bf16.msra.mxu0 0
  %954 = vmatprep.subr.bf16.mxu0 0
  %955 = vmatpush1.bf16.msra.mxu0 0
  %956 = vmatprep.subr.bf16.mxu0 0
  %957 = vmatpush1.bf16.msra.mxu0 0
  %958 = vmatprep.subr.bf16.mxu0 0
  %959 = vmatpush1.bf16.msra.mxu0 0
  %960 = vmatprep.mubr.bf16.mxu0 0
  %961 = vmatmul.mubr.bf16.gmra.mrb[0].mxu0 %v884
  %v962 = vpop.f32.mrb[0].mxu0
  %v963 = vadd.f32 0.0, %v962
  %v964 = vpop.f32.mrb[0].mxu0
  %v965 = vpop.f32.mrb[0].mxu0
  %v966 = vpop.f32.mrb[0].mxu0
  %967 = vdwg.mxu0
  %v968 = vadd.f32 %v145, %v963
  %v969 = vtanh.pop %v968
  %v970 = vxor.u32 %v968, 2147483648
  %v971 = vmul.f32 %v970, 1.442695
  %v972 = vpow.pop %v971
  %v973 = vadd.f32 %v972, 1.0
  %v974 = vrcp.pop %v973
  %v975 = vmul.f32 1.0, %v974
  %v976 = vsel %vm188, %v969, %v975
  %977 = vrot.lane.b32.xlu0 %v976, 64
  %v978 = vpop.permute.xlu0 %977
  %979 = vrot.lane.b32.xlu0 %v976, 32
  %v980 = vpop.permute.xlu0 %979
  %981 = vrot.lane.b32.xlu0 %v976, 96
  %v982 = vpop.permute.xlu0 %981
  %v983 = vmul.f32 %v976, %v882
  %v984 = vmul.f32 %v980, %v982
  %v985 = vadd.f32 %v983, %v984
  %v986 = vtanh.pop %v985
  %v987 = vmul.f32 %v978, %v986
  %v988 = vsel %vm189, %v985, 0.0
  %v989 = vsel %vm189, %v987, 0.0
  %v990 = vpack.c.bf16 %v989, %v989
  %991 = vmatprep.subr.bf16.mxu0 0
  %992 = vmatpush1.bf16.msra.mxu0 %v340
  %993 = vmatprep.subr.bf16.mxu0 0
  %994 = vmatpush1.bf16.msra.mxu0 %v341
  %995 = vmatprep.subr.bf16.mxu0 0
  %996 = vmatpush1.bf16.msra.mxu0 %v342
  %997 = vmatprep.subr.bf16.mxu0 0
  %998 = vmatpush1.bf16.msra.mxu0 %v343
  %999 = vmatprep.subr.bf16.mxu0 0
  %1000 = vmatpush1.bf16.msra.mxu0 %v344
  %1001 = vmatprep.subr.bf16.mxu0 0
  %1002 = vmatpush1.bf16.msra.mxu0 %v345
  %1003 = vmatprep.subr.bf16.mxu0 0
  %1004 = vmatpush1.bf16.msra.mxu0 %v346
  %1005 = vmatprep.subr.bf16.mxu0 0
  %1006 = vmatpush1.bf16.msra.mxu0 %v347
  %1007 = vmatprep.subr.bf16.mxu0 0
  %1008 = vmatpush1.bf16.msra.mxu0 0
  %1009 = vmatprep.subr.bf16.mxu0 0
  %1010 = vmatpush1.bf16.msra.mxu0 0
  %1011 = vmatprep.subr.bf16.mxu0 0
  %1012 = vmatpush1.bf16.msra.mxu0 0
  %1013 = vmatprep.subr.bf16.mxu0 0
  %1014 = vmatpush1.bf16.msra.mxu0 0
  %1015 = vmatprep.subr.bf16.mxu0 0
  %1016 = vmatpush1.bf16.msra.mxu0 0
  %1017 = vmatprep.subr.bf16.mxu0 0
  %1018 = vmatpush1.bf16.msra.mxu0 0
  %1019 = vmatprep.subr.bf16.mxu0 0
  %1020 = vmatpush1.bf16.msra.mxu0 0
  %1021 = vmatprep.subr.bf16.mxu0 0
  %1022 = vmatpush1.bf16.msra.mxu0 0
  %1023 = vmatprep.mubr.bf16.mxu0 0
  %1024 = vmatmul.mubr.bf16.gmra.mrb[0].mxu0 %v990
  %v1025 = vpop.f32.mrb[0].mxu0
  %v1026 = vadd.f32 %v306, %v1025
  %v1027 = vpop.f32.mrb[0].mxu0
  %v1028 = vpop.f32.mrb[0].mxu0
  %v1029 = vpop.f32.mrb[0].mxu0
  %1030 = vdwg.mxu0
  %v1031 = vpack.c.bf16 %v1026, %v1026
  %s1032 = scalar_lea.vmem %s6, 24
  %1033 = vst [vmem:[%s1032] sm:$0xf] %v1031
  %1034 = vmatprep.subr.bf16.mxu0 0
  %1035 = vmatpush1.bf16.msra.mxu0 %v223
  %1036 = vmatprep.subr.bf16.mxu0 0
  %1037 = vmatpush1.bf16.msra.mxu0 %v224
  %1038 = vmatprep.subr.bf16.mxu0 0
  %1039 = vmatpush1.bf16.msra.mxu0 %v225
  %1040 = vmatprep.subr.bf16.mxu0 0
  %1041 = vmatpush1.bf16.msra.mxu0 %v226
  %1042 = vmatprep.subr.bf16.mxu0 0
  %1043 = vmatpush1.bf16.msra.mxu0 %v227
  %1044 = vmatprep.subr.bf16.mxu0 0
  %1045 = vmatpush1.bf16.msra.mxu0 %v228
  %1046 = vmatprep.subr.bf16.mxu0 0
  %1047 = vmatpush1.bf16.msra.mxu0 %v229
  %1048 = vmatprep.subr.bf16.mxu0 0
  %1049 = vmatpush1.bf16.msra.mxu0 %v230
  %1050 = vmatprep.subr.bf16.mxu0 0
  %1051 = vmatpush1.bf16.msra.mxu0 0
  %1052 = vmatprep.subr.bf16.mxu0 0
  %1053 = vmatpush1.bf16.msra.mxu0 0
  %1054 = vmatprep.subr.bf16.mxu0 0
  %1055 = vmatpush1.bf16.msra.mxu0 0
  %1056 = vmatprep.subr.bf16.mxu0 0
  %1057 = vmatpush1.bf16.msra.mxu0 0
  %1058 = vmatprep.subr.bf16.mxu0 0
  %1059 = vmatpush1.bf16.msra.mxu0 0
  %1060 = vmatprep.subr.bf16.mxu0 0
  %1061 = vmatpush1.bf16.msra.mxu0 0
  %1062 = vmatprep.subr.bf16.mxu0 0
  %1063 = vmatpush1.bf16.msra.mxu0 0
  %1064 = vmatprep.subr.bf16.mxu0 0
  %1065 = vmatpush1.bf16.msra.mxu0 0
  %1066 = vmatprep.mubr.bf16.mxu0 0
  %1067 = vmatmul.mubr.bf16.gmra.mrb[0].mxu0 %v990
  %v1068 = vpop.f32.mrb[0].mxu0
  %v1069 = vadd.f32 0.0, %v1068
  %v1070 = vpop.f32.mrb[0].mxu0
  %v1071 = vpop.f32.mrb[0].mxu0
  %v1072 = vpop.f32.mrb[0].mxu0
  %1073 = vdwg.mxu0
  %v1074 = vadd.f32 %v148, %v1069
  %v1075 = vtanh.pop %v1074
  %v1076 = vxor.u32 %v1074, 2147483648
  %v1077 = vmul.f32 %v1076, 1.442695
  %v1078 = vpow.pop %v1077
  %v1079 = vadd.f32 %v1078, 1.0
  %v1080 = vrcp.pop %v1079
  %v1081 = vmul.f32 1.0, %v1080
  %v1082 = vsel %vm188, %v1075, %v1081
  %1083 = vrot.lane.b32.xlu0 %v1082, 64
  %v1084 = vpop.permute.xlu0 %1083
  %1085 = vrot.lane.b32.xlu0 %v1082, 32
  %v1086 = vpop.permute.xlu0 %1085
  %1087 = vrot.lane.b32.xlu0 %v1082, 96
  %v1088 = vpop.permute.xlu0 %1087
  %v1089 = vmul.f32 %v1082, %v988
  %v1090 = vmul.f32 %v1086, %v1088
  %v1091 = vadd.f32 %v1089, %v1090
  %v1092 = vtanh.pop %v1091
  %v1093 = vmul.f32 %v1084, %v1092
  %v1094 = vsel %vm189, %v1091, 0.0
  %v1095 = vsel %vm189, %v1093, 0.0
  %v1096 = vpack.c.bf16 %v1095, %v1095
  %1097 = vmatprep.subr.bf16.mxu0 0
  %1098 = vmatpush1.bf16.msra.mxu0 %v340
  %1099 = vmatprep.subr.bf16.mxu0 0
  %1100 = vmatpush1.bf16.msra.mxu0 %v341
  %1101 = vmatprep.subr.bf16.mxu0 0
  %1102 = vmatpush1.bf16.msra.mxu0 %v342
  %1103 = vmatprep.subr.bf16.mxu0 0
  %1104 = vmatpush1.bf16.msra.mxu0 %v343
  %1105 = vmatprep.subr.bf16.mxu0 0
  %1106 = vmatpush1.bf16.msra.mxu0 %v344
  %1107 = vmatprep.subr.bf16.mxu0 0
  %1108 = vmatpush1.bf16.msra.mxu0 %v345
  %1109 = vmatprep.subr.bf16.mxu0 0
  %1110 = vmatpush1.bf16.msra.mxu0 %v346
  %1111 = vmatprep.subr.bf16.mxu0 0
  %1112 = vmatpush1.bf16.msra.mxu0 %v347
  %1113 = vmatprep.subr.bf16.mxu0 0
  %1114 = vmatpush1.bf16.msra.mxu0 0
  %1115 = vmatprep.subr.bf16.mxu0 0
  %1116 = vmatpush1.bf16.msra.mxu0 0
  %1117 = vmatprep.subr.bf16.mxu0 0
  %1118 = vmatpush1.bf16.msra.mxu0 0
  %1119 = vmatprep.subr.bf16.mxu0 0
  %1120 = vmatpush1.bf16.msra.mxu0 0
  %1121 = vmatprep.subr.bf16.mxu0 0
  %1122 = vmatpush1.bf16.msra.mxu0 0
  %1123 = vmatprep.subr.bf16.mxu0 0
  %1124 = vmatpush1.bf16.msra.mxu0 0
  %1125 = vmatprep.subr.bf16.mxu0 0
  %1126 = vmatpush1.bf16.msra.mxu0 0
  %1127 = vmatprep.subr.bf16.mxu0 0
  %1128 = vmatpush1.bf16.msra.mxu0 0
  %1129 = vmatprep.mubr.bf16.mxu0 0
  %1130 = vmatmul.mubr.bf16.gmra.mrb[0].mxu0 %v1096
  %v1131 = vpop.f32.mrb[0].mxu0
  %v1132 = vadd.f32 %v306, %v1131
  %v1133 = vpop.f32.mrb[0].mxu0
  %v1134 = vpop.f32.mrb[0].mxu0
  %v1135 = vpop.f32.mrb[0].mxu0
  %1136 = vdwg.mxu0
  %v1137 = vpack.c.bf16 %v1132, %v1132
  %s1138 = scalar_lea.vmem %s6, 28
  %1139 = vst [vmem:[%s1138] sm:$0xf] %v1137
  %1140 = vst [vmem:[#allocation2] sm:$0xff] %v1095
  %1141 = vst [vmem:[#allocation3] sm:$0xff] %v1094
  // Predicated region
  $region30: #{lstm_model_forward.2} parent=0 // pred_check
    _
  $region31: #{lstm_model_forward.2} parent=0 // pred_check_branch
    %1143 = sbr.rel (0) target = $region33
  $region32: #{lstm_model_forward.2} parent=0 // pred_region
    _
  $region33: #{lstm_model_forward.2} parent=0 // pred_fallthru
    _
  // Predicated region
  $region34: #{lstm_model_forward.2} parent=0 // pred_check
    _
  $region35: #{lstm_model_forward.2} parent=0 // pred_check_branch
    %1145 = sbr.rel (0) target = $region37
  $region36: #{lstm_model_forward.2} parent=0 // pred_region
    _
  $region37: #{lstm_model_forward.2} parent=0 // pred_fallthru
    _

// kernel: lstm_model_forward.3
$region0: #{lstm_model_forward.3}
  #allocation0 [shape = 'u32[]', space=smem, size = 0x4, offset = 0x4, fixed_abs, tag = 'smem constant byte address 0x4 - core index']
  #allocation1 [shape = 'u32[144,128]{1,0:T(1,128)}', space=vmem, size = 0x12000, scoped, tag = 'internal scratch']
  #allocation2 [shape = 'f32[8,128]{1,0:T(8,128)}', space=vmem, size = 0x1000, scoped, tag = 'scratch operand']
  #allocation3 [shape = 'f32[8,128]{1,0:T(8,128)}', space=vmem, size = 0x1000, scoped, tag = 'scratch operand']
  %s0 = inlined_call_operand.vmem [shape: bf16[8,8,128], index: 0, kind: input, shape index: {}]
  %s1 = inlined_call_operand.vmem [shape: bf16[128,128], index: 1, kind: input, shape index: {}]
  %s2 = inlined_call_operand.vmem [shape: bf16[128,8], index: 2, kind: input, shape index: {}]
  %s3 = inlined_call_operand.vmem [shape: f32[1,8], index: 3, kind: input, shape index: {}]
  %s4 = inlined_call_operand.vmem [shape: f32[8,8], index: 4, kind: output, shape index: {}]
  %s5 = sld [smem:[#allocation0]]
  $region30: #{lstm_model_forward.3} parent=0
    _
  %s7 = ssub.s32 1, %s5
  %s8 = scalar_select 0, %s7, %s5
  // Predicated region
  $region2: #{lstm_model_forward.3} parent=0 // pred_check
    _
  $region3: #{lstm_model_forward.3} parent=0 // pred_check_branch
    %10 = sbr.rel (0) target = $region5
  $region4: #{lstm_model_forward.3} parent=0 // pred_region
    _
  $region5: #{lstm_model_forward.3} parent=0 // pred_fallthru
    _
  // Predicated region
  $region6: #{lstm_model_forward.3} parent=0 // pred_check
    _
  $region7: #{lstm_model_forward.3} parent=0 // pred_check_branch
    %12 = sbr.rel (0) target = $region9
  $region8: #{lstm_model_forward.3} parent=0 // pred_region
    _
  $region9: #{lstm_model_forward.3} parent=0 // pred_fallthru
    _
  // Predicated region
  $region10: #{lstm_model_forward.3} parent=0 // pred_check
    _
  $region11: #{lstm_model_forward.3} parent=0 // pred_check_branch
    %14 = sbr.rel (0) target = $region13
  $region12: #{lstm_model_forward.3} parent=0 // pred_region
    _
  $region13: #{lstm_model_forward.3} parent=0 // pred_fallthru
    _
  // Predicated region
  $region14: #{lstm_model_forward.3} parent=0 // pred_check
    _
  $region15: #{lstm_model_forward.3} parent=0 // pred_check_branch
    %16 = sbr.rel (0) target = $region17
  $region16: #{lstm_model_forward.3} parent=0 // pred_region
    _
  $region17: #{lstm_model_forward.3} parent=0 // pred_fallthru
    _
  %p18 = scmp.eq.s32.totalorder 0, 0
  // Predicated region
  $region18: #{lstm_model_forward.3} parent=0 // pred_check
    %p19 = pneg %p18
  $region19: #{lstm_model_forward.3} parent=0 // pred_check_branch
    %21 = sbr.rel (%p19) target = $region21
  $region20: #{lstm_model_forward.3} parent=0 // pred_region
    %22 = vst [vmem:[#allocation2] sm:$0xff] 0.0
    %23 = vst [vmem:[#allocation3] sm:$0xff] 0.0
  $region21: #{lstm_model_forward.3} parent=0 // pred_fallthru
    _
  %v24 = vld [vmem:[%s1] sm:$0xf]
  %v25 = vld [vmem:[%s1 + $0x4] sm:$0xf]
  %v26 = vld [vmem:[%s1 + $0x8] sm:$0xf]
  %v27 = vld [vmem:[%s1 + $0xc] sm:$0xf]
  %v28 = vld [vmem:[%s1 + $0x10] sm:$0xf]
  %v29 = vld [vmem:[%s1 + $0x14] sm:$0xf]
  %v30 = vld [vmem:[%s1 + $0x18] sm:$0xf]
  %v31 = vld [vmem:[%s1 + $0x1c] sm:$0xf]
  %v32 = vld [vmem:[%s1 + $0x20] sm:$0xf]
  %v33 = vld [vmem:[%s1 + $0x24] sm:$0xf]
  %v34 = vld [vmem:[%s1 + $0x28] sm:$0xf]
  %v35 = vld [vmem:[%s1 + $0x2c] sm:$0xf]
  %v36 = vld [vmem:[%s1 + $0x30] sm:$0xf]
  %v37 = vld [vmem:[%s1 + $0x34] sm:$0xf]
  %v38 = vld [vmem:[%s1 + $0x38] sm:$0xf]
  %v39 = vld [vmem:[%s1 + $0x3c] sm:$0xf]
  %v40 = vld [vmem:[%s2] sm:$0xf]
  %v41 = vld [vmem:[%s2 + $0x4] sm:$0xf]
  %v42 = vld [vmem:[%s2 + $0x8] sm:$0xf]
  %v43 = vld [vmem:[%s2 + $0xc] sm:$0xf]
  %v44 = vld [vmem:[%s2 + $0x10] sm:$0xf]
  %v45 = vld [vmem:[%s2 + $0x14] sm:$0xf]
  %v46 = vld [vmem:[%s2 + $0x18] sm:$0xf]
  %v47 = vld [vmem:[%s2 + $0x1c] sm:$0xf]
  %v48 = vld [vmem:[%s2 + $0x20] sm:$0xf]
  %v49 = vld [vmem:[%s2 + $0x24] sm:$0xf]
  %v50 = vld [vmem:[%s2 + $0x28] sm:$0xf]
  %v51 = vld [vmem:[%s2 + $0x2c] sm:$0xf]
  %v52 = vld [vmem:[%s2 + $0x30] sm:$0xf]
  %v53 = vld [vmem:[%s2 + $0x34] sm:$0xf]
  %v54 = vld [vmem:[%s2 + $0x38] sm:$0xf]
  %v55 = vld [vmem:[%s2 + $0x3c] sm:$0xf]
  %v56 = vld [vmem:[%s3] sm:$0x1]
  %v57 = vld [vmem:[#allocation2] sm:$0xff]
  %v58 = vld [vmem:[#allocation3] sm:$0xff]
  %v59 = vlaneseq
  %v60 = vand.u32 %v59, 127
  %vm61 = vcmp.ge.s32.totalorder %v60, 96
  %vm62 = vcmp.lt.s32.totalorder %v60, 32
  %v63 = vld [vmem:[%s0] sm:$0xf]
  %v64 = vunpack.c.l.bf16 %v63
  %v65 = vpack.c.bf16 %v57, %v57
  %v82 = vunpack.c.l.b16 %v24
  %v83 = vunpack.c.l.b16 %v25
  %v84 = vunpack.c.l.b16 %v26
  %v85 = vunpack.c.l.b16 %v27
  %v86 = vunpack.c.l.b16 %v28
  %v87 = vunpack.c.l.b16 %v29
  %v88 = vunpack.c.l.b16 %v30
  %v89 = vunpack.c.l.b16 %v31
  %v90 = vunpack.c.l.b16 %v32
  %v91 = vunpack.c.l.b16 %v33
  %v92 = vunpack.c.l.b16 %v34
  %v93 = vunpack.c.l.b16 %v35
  %v94 = vunpack.c.l.b16 %v36
  %v95 = vunpack.c.l.b16 %v37
  %v96 = vunpack.c.l.b16 %v38
  %v97 = vunpack.c.l.b16 %v39
  %v98 = vpack.c.b16 %v83, %v82
  %v99 = vpack.c.b16 %v85, %v84
  %v100 = vpack.c.b16 %v87, %v86
  %v101 = vpack.c.b16 %v89, %v88
  %v102 = vpack.c.b16 %v91, %v90
  %v103 = vpack.c.b16 %v93, %v92
  %v104 = vpack.c.b16 %v95, %v94
  %v105 = vpack.c.b16 %v97, %v96
  %114 = vmatprep.subr.bf16.mxu0 0
  %115 = vmatpush1.bf16.msra.mxu0 %v98
  %116 = vmatprep.subr.bf16.mxu0 0
  %117 = vmatpush1.bf16.msra.mxu0 %v99
  %118 = vmatprep.subr.bf16.mxu0 0
  %119 = vmatpush1.bf16.msra.mxu0 %v100
  %120 = vmatprep.subr.bf16.mxu0 0
  %121 = vmatpush1.bf16.msra.mxu0 %v101
  %122 = vmatprep.subr.bf16.mxu0 0
  %123 = vmatpush1.bf16.msra.mxu0 %v102
  %124 = vmatprep.subr.bf16.mxu0 0
  %125 = vmatpush1.bf16.msra.mxu0 %v103
  %126 = vmatprep.subr.bf16.mxu0 0
  %127 = vmatpush1.bf16.msra.mxu0 %v104
  %128 = vmatprep.subr.bf16.mxu0 0
  %129 = vmatpush1.bf16.msra.mxu0 %v105
  %130 = vmatprep.subr.bf16.mxu0 0
  %131 = vmatpush1.bf16.msra.mxu0 0
  %132 = vmatprep.subr.bf16.mxu0 0
  %133 = vmatpush1.bf16.msra.mxu0 0
  %134 = vmatprep.subr.bf16.mxu0 0
  %135 = vmatpush1.bf16.msra.mxu0 0
  %136 = vmatprep.subr.bf16.mxu0 0
  %137 = vmatpush1.bf16.msra.mxu0 0
  %138 = vmatprep.subr.bf16.mxu0 0
  %139 = vmatpush1.bf16.msra.mxu0 0
  %140 = vmatprep.subr.bf16.mxu0 0
  %141 = vmatpush1.bf16.msra.mxu0 0
  %142 = vmatprep.subr.bf16.mxu0 0
  %143 = vmatpush1.bf16.msra.mxu0 0
  %144 = vmatprep.subr.bf16.mxu0 0
  %145 = vmatpush1.bf16.msra.mxu0 0
  %146 = vmatprep.mubr.bf16.mxu0 0
  %147 = vmatmul.mubr.bf16.gmra.mrb[0].mxu0 %v65
  %v148 = vpop.f32.mrb[0].mxu0
  %v149 = vadd.f32 0.0, %v148
  %v150 = vpop.f32.mrb[0].mxu0
  %v151 = vpop.f32.mrb[0].mxu0
  %v152 = vpop.f32.mrb[0].mxu0
  %153 = vdwg.mxu0
  %v154 = vadd.f32 %v64, %v149
  %v155 = vtanh.pop %v154
  %v156 = vxor.u32 %v154, 2147483648
  %v157 = vmul.f32 %v156, 1.442695
  %v158 = vpow.pop %v157
  %v159 = vadd.f32 %v158, 1.0
  %v160 = vrcp.pop %v159
  %v161 = vmul.f32 1.0, %v160
  %v162 = vsel %vm61, %v155, %v161
  %163 = vrot.lane.b32.xlu0 %v162, 64
  %v164 = vpop.permute.xlu0 %163
  %165 = vrot.lane.b32.xlu0 %v162, 32
  %v166 = vpop.permute.xlu0 %165
  %167 = vrot.lane.b32.xlu0 %v162, 96
  %v168 = vpop.permute.xlu0 %167
  %v169 = vmul.f32 %v162, %v58
  %v170 = vmul.f32 %v166, %v168
  %v171 = vadd.f32 %v169, %v170
  %v172 = vtanh.pop %v171
  %v173 = vmul.f32 %v164, %v172
  %v174 = vsel %vm62, %v171, 0.0
  %v175 = vsel %vm62, %v173, 0.0
  %s176 = scalar_lea.vmem %s0, 4
  %v177 = vld [vmem:[%s176] sm:$0xf]
  %v178 = vunpack.c.l.bf16 %v177
  %v179 = vpack.c.bf16 %v175, %v175
  %180 = vmatprep.subr.bf16.mxu0 0
  %181 = vmatpush1.bf16.msra.mxu0 %v98
  %182 = vmatprep.subr.bf16.mxu0 0
  %183 = vmatpush1.bf16.msra.mxu0 %v99
  %184 = vmatprep.subr.bf16.mxu0 0
  %185 = vmatpush1.bf16.msra.mxu0 %v100
  %186 = vmatprep.subr.bf16.mxu0 0
  %187 = vmatpush1.bf16.msra.mxu0 %v101
  %188 = vmatprep.subr.bf16.mxu0 0
  %189 = vmatpush1.bf16.msra.mxu0 %v102
  %190 = vmatprep.subr.bf16.mxu0 0
  %191 = vmatpush1.bf16.msra.mxu0 %v103
  %192 = vmatprep.subr.bf16.mxu0 0
  %193 = vmatpush1.bf16.msra.mxu0 %v104
  %194 = vmatprep.subr.bf16.mxu0 0
  %195 = vmatpush1.bf16.msra.mxu0 %v105
  %196 = vmatprep.subr.bf16.mxu0 0
  %197 = vmatpush1.bf16.msra.mxu0 0
  %198 = vmatprep.subr.bf16.mxu0 0
  %199 = vmatpush1.bf16.msra.mxu0 0
  %200 = vmatprep.subr.bf16.mxu0 0
  %201 = vmatpush1.bf16.msra.mxu0 0
  %202 = vmatprep.subr.bf16.mxu0 0
  %203 = vmatpush1.bf16.msra.mxu0 0
  %204 = vmatprep.subr.bf16.mxu0 0
  %205 = vmatpush1.bf16.msra.mxu0 0
  %206 = vmatprep.subr.bf16.mxu0 0
  %207 = vmatpush1.bf16.msra.mxu0 0
  %208 = vmatprep.subr.bf16.mxu0 0
  %209 = vmatpush1.bf16.msra.mxu0 0
  %210 = vmatprep.subr.bf16.mxu0 0
  %211 = vmatpush1.bf16.msra.mxu0 0
  %212 = vmatprep.mubr.bf16.mxu0 0
  %213 = vmatmul.mubr.bf16.gmra.mrb[0].mxu0 %v179
  %v214 = vpop.f32.mrb[0].mxu0
  %v215 = vadd.f32 0.0, %v214
  %v216 = vpop.f32.mrb[0].mxu0
  %v217 = vpop.f32.mrb[0].mxu0
  %v218 = vpop.f32.mrb[0].mxu0
  %219 = vdwg.mxu0
  %v220 = vadd.f32 %v178, %v215
  %v221 = vtanh.pop %v220
  %v222 = vxor.u32 %v220, 2147483648
  %v223 = vmul.f32 %v222, 1.442695
  %v224 = vpow.pop %v223
  %v225 = vadd.f32 %v224, 1.0
  %v226 = vrcp.pop %v225
  %v227 = vmul.f32 1.0, %v226
  %v228 = vsel %vm61, %v221, %v227
  %229 = vrot.lane.b32.xlu0 %v228, 64
  %v230 = vpop.permute.xlu0 %229
  %231 = vrot.lane.b32.xlu0 %v228, 32
  %v232 = vpop.permute.xlu0 %231
  %233 = vrot.lane.b32.xlu0 %v228, 96
  %v234 = vpop.permute.xlu0 %233
  %v235 = vmul.f32 %v228, %v174
  %v236 = vmul.f32 %v232, %v234
  %v237 = vadd.f32 %v235, %v236
  %v238 = vtanh.pop %v237
  %v239 = vmul.f32 %v230, %v238
  %v240 = vsel %vm62, %v237, 0.0
  %v241 = vsel %vm62, %v239, 0.0
  %s242 = scalar_lea.vmem %s0, 8
  %v243 = vld [vmem:[%s242] sm:$0xf]
  %v244 = vunpack.c.l.bf16 %v243
  %v245 = vpack.c.bf16 %v241, %v241
  %246 = vmatprep.subr.bf16.mxu0 0
  %247 = vmatpush1.bf16.msra.mxu0 %v98
  %248 = vmatprep.subr.bf16.mxu0 0
  %249 = vmatpush1.bf16.msra.mxu0 %v99
  %250 = vmatprep.subr.bf16.mxu0 0
  %251 = vmatpush1.bf16.msra.mxu0 %v100
  %252 = vmatprep.subr.bf16.mxu0 0
  %253 = vmatpush1.bf16.msra.mxu0 %v101
  %254 = vmatprep.subr.bf16.mxu0 0
  %255 = vmatpush1.bf16.msra.mxu0 %v102
  %256 = vmatprep.subr.bf16.mxu0 0
  %257 = vmatpush1.bf16.msra.mxu0 %v103
  %258 = vmatprep.subr.bf16.mxu0 0
  %259 = vmatpush1.bf16.msra.mxu0 %v104
  %260 = vmatprep.subr.bf16.mxu0 0
  %261 = vmatpush1.bf16.msra.mxu0 %v105
  %262 = vmatprep.subr.bf16.mxu0 0
  %263 = vmatpush1.bf16.msra.mxu0 0
  %264 = vmatprep.subr.bf16.mxu0 0
  %265 = vmatpush1.bf16.msra.mxu0 0
  %266 = vmatprep.subr.bf16.mxu0 0
  %267 = vmatpush1.bf16.msra.mxu0 0
  %268 = vmatprep.subr.bf16.mxu0 0
  %269 = vmatpush1.bf16.msra.mxu0 0
  %270 = vmatprep.subr.bf16.mxu0 0
  %271 = vmatpush1.bf16.msra.mxu0 0
  %272 = vmatprep.subr.bf16.mxu0 0
  %273 = vmatpush1.bf16.msra.mxu0 0
  %274 = vmatprep.subr.bf16.mxu0 0
  %275 = vmatpush1.bf16.msra.mxu0 0
  %276 = vmatprep.subr.bf16.mxu0 0
  %277 = vmatpush1.bf16.msra.mxu0 0
  %278 = vmatprep.mubr.bf16.mxu0 0
  %279 = vmatmul.mubr.bf16.gmra.mrb[0].mxu0 %v245
  %v280 = vpop.f32.mrb[0].mxu0
  %v281 = vadd.f32 0.0, %v280
  %v282 = vpop.f32.mrb[0].mxu0
  %v283 = vpop.f32.mrb[0].mxu0
  %v284 = vpop.f32.mrb[0].mxu0
  %285 = vdwg.mxu0
  %v286 = vadd.f32 %v244, %v281
  %v287 = vtanh.pop %v286
  %v288 = vxor.u32 %v286, 2147483648
  %v289 = vmul.f32 %v288, 1.442695
  %v290 = vpow.pop %v289
  %v291 = vadd.f32 %v290, 1.0
  %v292 = vrcp.pop %v291
  %v293 = vmul.f32 1.0, %v292
  %v294 = vsel %vm61, %v287, %v293
  %295 = vrot.lane.b32.xlu0 %v294, 64
  %v296 = vpop.permute.xlu0 %295
  %297 = vrot.lane.b32.xlu0 %v294, 32
  %v298 = vpop.permute.xlu0 %297
  %299 = vrot.lane.b32.xlu0 %v294, 96
  %v300 = vpop.permute.xlu0 %299
  %v301 = vmul.f32 %v294, %v240
  %v302 = vmul.f32 %v298, %v300
  %v303 = vadd.f32 %v301, %v302
  %v304 = vtanh.pop %v303
  %v305 = vmul.f32 %v296, %v304
  %v306 = vsel %vm62, %v303, 0.0
  %v307 = vsel %vm62, %v305, 0.0
  %s308 = scalar_lea.vmem %s0, 12
  %v309 = vld [vmem:[%s308] sm:$0xf]
  %v310 = vunpack.c.l.bf16 %v309
  %v311 = vpack.c.bf16 %v307, %v307
  %312 = vmatprep.subr.bf16.mxu0 0
  %313 = vmatpush1.bf16.msra.mxu0 %v98
  %314 = vmatprep.subr.bf16.mxu0 0
  %315 = vmatpush1.bf16.msra.mxu0 %v99
  %316 = vmatprep.subr.bf16.mxu0 0
  %317 = vmatpush1.bf16.msra.mxu0 %v100
  %318 = vmatprep.subr.bf16.mxu0 0
  %319 = vmatpush1.bf16.msra.mxu0 %v101
  %320 = vmatprep.subr.bf16.mxu0 0
  %321 = vmatpush1.bf16.msra.mxu0 %v102
  %322 = vmatprep.subr.bf16.mxu0 0
  %323 = vmatpush1.bf16.msra.mxu0 %v103
  %324 = vmatprep.subr.bf16.mxu0 0
  %325 = vmatpush1.bf16.msra.mxu0 %v104
  %326 = vmatprep.subr.bf16.mxu0 0
  %327 = vmatpush1.bf16.msra.mxu0 %v105
  %328 = vmatprep.subr.bf16.mxu0 0
  %329 = vmatpush1.bf16.msra.mxu0 0
  %330 = vmatprep.subr.bf16.mxu0 0
  %331 = vmatpush1.bf16.msra.mxu0 0
  %332 = vmatprep.subr.bf16.mxu0 0
  %333 = vmatpush1.bf16.msra.mxu0 0
  %334 = vmatprep.subr.bf16.mxu0 0
  %335 = vmatpush1.bf16.msra.mxu0 0
  %336 = vmatprep.subr.bf16.mxu0 0
  %337 = vmatpush1.bf16.msra.mxu0 0
  %338 = vmatprep.subr.bf16.mxu0 0
  %339 = vmatpush1.bf16.msra.mxu0 0
  %340 = vmatprep.subr.bf16.mxu0 0
  %341 = vmatpush1.bf16.msra.mxu0 0
  %342 = vmatprep.subr.bf16.mxu0 0
  %343 = vmatpush1.bf16.msra.mxu0 0
  %344 = vmatprep.mubr.bf16.mxu0 0
  %345 = vmatmul.mubr.bf16.gmra.mrb[0].mxu0 %v311
  %v346 = vpop.f32.mrb[0].mxu0
  %v347 = vadd.f32 0.0, %v346
  %v348 = vpop.f32.mrb[0].mxu0
  %v349 = vpop.f32.mrb[0].mxu0
  %v350 = vpop.f32.mrb[0].mxu0
  %351 = vdwg.mxu0
  %v352 = vadd.f32 %v310, %v347
  %v353 = vtanh.pop %v352
  %v354 = vxor.u32 %v352, 2147483648
  %v355 = vmul.f32 %v354, 1.442695
  %v356 = vpow.pop %v355
  %v357 = vadd.f32 %v356, 1.0
  %v358 = vrcp.pop %v357
  %v359 = vmul.f32 1.0, %v358
  %v360 = vsel %vm61, %v353, %v359
  %361 = vrot.lane.b32.xlu0 %v360, 64
  %v362 = vpop.permute.xlu0 %361
  %363 = vrot.lane.b32.xlu0 %v360, 32
  %v364 = vpop.permute.xlu0 %363
  %365 = vrot.lane.b32.xlu0 %v360, 96
  %v366 = vpop.permute.xlu0 %365
  %v367 = vmul.f32 %v360, %v306
  %v368 = vmul.f32 %v364, %v366
  %v369 = vadd.f32 %v367, %v368
  %v370 = vtanh.pop %v369
  %v371 = vmul.f32 %v362, %v370
  %v372 = vsel %vm62, %v369, 0.0
  %v373 = vsel %vm62, %v371, 0.0
  %s374 = scalar_lea.vmem %s0, 16
  %v375 = vld [vmem:[%s374] sm:$0xf]
  %v376 = vunpack.c.l.bf16 %v375
  %v377 = vpack.c.bf16 %v373, %v373
  %378 = vmatprep.subr.bf16.mxu0 0
  %379 = vmatpush1.bf16.msra.mxu0 %v98
  %380 = vmatprep.subr.bf16.mxu0 0
  %381 = vmatpush1.bf16.msra.mxu0 %v99
  %382 = vmatprep.subr.bf16.mxu0 0
  %383 = vmatpush1.bf16.msra.mxu0 %v100
  %384 = vmatprep.subr.bf16.mxu0 0
  %385 = vmatpush1.bf16.msra.mxu0 %v101
  %386 = vmatprep.subr.bf16.mxu0 0
  %387 = vmatpush1.bf16.msra.mxu0 %v102
  %388 = vmatprep.subr.bf16.mxu0 0
  %389 = vmatpush1.bf16.msra.mxu0 %v103
  %390 = vmatprep.subr.bf16.mxu0 0
  %391 = vmatpush1.bf16.msra.mxu0 %v104
  %392 = vmatprep.subr.bf16.mxu0 0
  %393 = vmatpush1.bf16.msra.mxu0 %v105
  %394 = vmatprep.subr.bf16.mxu0 0
  %395 = vmatpush1.bf16.msra.mxu0 0
  %396 = vmatprep.subr.bf16.mxu0 0
  %397 = vmatpush1.bf16.msra.mxu0 0
  %398 = vmatprep.subr.bf16.mxu0 0
  %399 = vmatpush1.bf16.msra.mxu0 0
  %400 = vmatprep.subr.bf16.mxu0 0
  %401 = vmatpush1.bf16.msra.mxu0 0
  %402 = vmatprep.subr.bf16.mxu0 0
  %403 = vmatpush1.bf16.msra.mxu0 0
  %404 = vmatprep.subr.bf16.mxu0 0
  %405 = vmatpush1.bf16.msra.mxu0 0
  %406 = vmatprep.subr.bf16.mxu0 0
  %407 = vmatpush1.bf16.msra.mxu0 0
  %408 = vmatprep.subr.bf16.mxu0 0
  %409 = vmatpush1.bf16.msra.mxu0 0
  %410 = vmatprep.mubr.bf16.mxu0 0
  %411 = vmatmul.mubr.bf16.gmra.mrb[0].mxu0 %v377
  %v412 = vpop.f32.mrb[0].mxu0
  %v413 = vadd.f32 0.0, %v412
  %v414 = vpop.f32.mrb[0].mxu0
  %v415 = vpop.f32.mrb[0].mxu0
  %v416 = vpop.f32.mrb[0].mxu0
  %417 = vdwg.mxu0
  %v418 = vadd.f32 %v376, %v413
  %v419 = vtanh.pop %v418
  %v420 = vxor.u32 %v418, 2147483648
  %v421 = vmul.f32 %v420, 1.442695
  %v422 = vpow.pop %v421
  %v423 = vadd.f32 %v422, 1.0
  %v424 = vrcp.pop %v423
  %v425 = vmul.f32 1.0, %v424
  %v426 = vsel %vm61, %v419, %v425
  %427 = vrot.lane.b32.xlu0 %v426, 64
  %v428 = vpop.permute.xlu0 %427
  %429 = vrot.lane.b32.xlu0 %v426, 32
  %v430 = vpop.permute.xlu0 %429
  %431 = vrot.lane.b32.xlu0 %v426, 96
  %v432 = vpop.permute.xlu0 %431
  %v433 = vmul.f32 %v426, %v372
  %v434 = vmul.f32 %v430, %v432
  %v435 = vadd.f32 %v433, %v434
  %v436 = vtanh.pop %v435
  %v437 = vmul.f32 %v428, %v436
  %v438 = vsel %vm62, %v435, 0.0
  %v439 = vsel %vm62, %v437, 0.0
  %s440 = scalar_lea.vmem %s0, 20
  %v441 = vld [vmem:[%s440] sm:$0xf]
  %v442 = vunpack.c.l.bf16 %v441
  %v443 = vpack.c.bf16 %v439, %v439
  %444 = vmatprep.subr.bf16.mxu0 0
  %445 = vmatpush1.bf16.msra.mxu0 %v98
  %446 = vmatprep.subr.bf16.mxu0 0
  %447 = vmatpush1.bf16.msra.mxu0 %v99
  %448 = vmatprep.subr.bf16.mxu0 0
  %449 = vmatpush1.bf16.msra.mxu0 %v100
  %450 = vmatprep.subr.bf16.mxu0 0
  %451 = vmatpush1.bf16.msra.mxu0 %v101
  %452 = vmatprep.subr.bf16.mxu0 0
  %453 = vmatpush1.bf16.msra.mxu0 %v102
  %454 = vmatprep.subr.bf16.mxu0 0
  %455 = vmatpush1.bf16.msra.mxu0 %v103
  %456 = vmatprep.subr.bf16.mxu0 0
  %457 = vmatpush1.bf16.msra.mxu0 %v104
  %458 = vmatprep.subr.bf16.mxu0 0
  %459 = vmatpush1.bf16.msra.mxu0 %v105
  %460 = vmatprep.subr.bf16.mxu0 0
  %461 = vmatpush1.bf16.msra.mxu0 0
  %462 = vmatprep.subr.bf16.mxu0 0
  %463 = vmatpush1.bf16.msra.mxu0 0
  %464 = vmatprep.subr.bf16.mxu0 0
  %465 = vmatpush1.bf16.msra.mxu0 0
  %466 = vmatprep.subr.bf16.mxu0 0
  %467 = vmatpush1.bf16.msra.mxu0 0
  %468 = vmatprep.subr.bf16.mxu0 0
  %469 = vmatpush1.bf16.msra.mxu0 0
  %470 = vmatprep.subr.bf16.mxu0 0
  %471 = vmatpush1.bf16.msra.mxu0 0
  %472 = vmatprep.subr.bf16.mxu0 0
  %473 = vmatpush1.bf16.msra.mxu0 0
  %474 = vmatprep.subr.bf16.mxu0 0
  %475 = vmatpush1.bf16.msra.mxu0 0
  %476 = vmatprep.mubr.bf16.mxu0 0
  %477 = vmatmul.mubr.bf16.gmra.mrb[0].mxu0 %v443
  %v478 = vpop.f32.mrb[0].mxu0
  %v479 = vadd.f32 0.0, %v478
  %v480 = vpop.f32.mrb[0].mxu0
  %v481 = vpop.f32.mrb[0].mxu0
  %v482 = vpop.f32.mrb[0].mxu0
  %483 = vdwg.mxu0
  %v484 = vadd.f32 %v442, %v479
  %v485 = vtanh.pop %v484
  %v486 = vxor.u32 %v484, 2147483648
  %v487 = vmul.f32 %v486, 1.442695
  %v488 = vpow.pop %v487
  %v489 = vadd.f32 %v488, 1.0
  %v490 = vrcp.pop %v489
  %v491 = vmul.f32 1.0, %v490
  %v492 = vsel %vm61, %v485, %v491
  %493 = vrot.lane.b32.xlu0 %v492, 64
  %v494 = vpop.permute.xlu0 %493
  %495 = vrot.lane.b32.xlu0 %v492, 32
  %v496 = vpop.permute.xlu0 %495
  %497 = vrot.lane.b32.xlu0 %v492, 96
  %v498 = vpop.permute.xlu0 %497
  %v499 = vmul.f32 %v492, %v438
  %v500 = vmul.f32 %v496, %v498
  %v501 = vadd.f32 %v499, %v500
  %v502 = vtanh.pop %v501
  %v503 = vmul.f32 %v494, %v502
  %v504 = vsel %vm62, %v501, 0.0
  %v505 = vsel %vm62, %v503, 0.0
  %s506 = scalar_lea.vmem %s0, 24
  %v507 = vld [vmem:[%s506] sm:$0xf]
  %v508 = vunpack.c.l.bf16 %v507
  %v509 = vpack.c.bf16 %v505, %v505
  %510 = vmatprep.subr.bf16.mxu0 0
  %511 = vmatpush1.bf16.msra.mxu0 %v98
  %512 = vmatprep.subr.bf16.mxu0 0
  %513 = vmatpush1.bf16.msra.mxu0 %v99
  %514 = vmatprep.subr.bf16.mxu0 0
  %515 = vmatpush1.bf16.msra.mxu0 %v100
  %516 = vmatprep.subr.bf16.mxu0 0
  %517 = vmatpush1.bf16.msra.mxu0 %v101
  %518 = vmatprep.subr.bf16.mxu0 0
  %519 = vmatpush1.bf16.msra.mxu0 %v102
  %520 = vmatprep.subr.bf16.mxu0 0
  %521 = vmatpush1.bf16.msra.mxu0 %v103
  %522 = vmatprep.subr.bf16.mxu0 0
  %523 = vmatpush1.bf16.msra.mxu0 %v104
  %524 = vmatprep.subr.bf16.mxu0 0
  %525 = vmatpush1.bf16.msra.mxu0 %v105
  %526 = vmatprep.subr.bf16.mxu0 0
  %527 = vmatpush1.bf16.msra.mxu0 0
  %528 = vmatprep.subr.bf16.mxu0 0
  %529 = vmatpush1.bf16.msra.mxu0 0
  %530 = vmatprep.subr.bf16.mxu0 0
  %531 = vmatpush1.bf16.msra.mxu0 0
  %532 = vmatprep.subr.bf16.mxu0 0
  %533 = vmatpush1.bf16.msra.mxu0 0
  %534 = vmatprep.subr.bf16.mxu0 0
  %535 = vmatpush1.bf16.msra.mxu0 0
  %536 = vmatprep.subr.bf16.mxu0 0
  %537 = vmatpush1.bf16.msra.mxu0 0
  %538 = vmatprep.subr.bf16.mxu0 0
  %539 = vmatpush1.bf16.msra.mxu0 0
  %540 = vmatprep.subr.bf16.mxu0 0
  %541 = vmatpush1.bf16.msra.mxu0 0
  %542 = vmatprep.mubr.bf16.mxu0 0
  %543 = vmatmul.mubr.bf16.gmra.mrb[0].mxu0 %v509
  %v544 = vpop.f32.mrb[0].mxu0
  %v545 = vadd.f32 0.0, %v544
  %v546 = vpop.f32.mrb[0].mxu0
  %v547 = vpop.f32.mrb[0].mxu0
  %v548 = vpop.f32.mrb[0].mxu0
  %549 = vdwg.mxu0
  %v550 = vadd.f32 %v508, %v545
  %v551 = vtanh.pop %v550
  %v552 = vxor.u32 %v550, 2147483648
  %v553 = vmul.f32 %v552, 1.442695
  %v554 = vpow.pop %v553
  %v555 = vadd.f32 %v554, 1.0
  %v556 = vrcp.pop %v555
  %v557 = vmul.f32 1.0, %v556
  %v558 = vsel %vm61, %v551, %v557
  %559 = vrot.lane.b32.xlu0 %v558, 64
  %v560 = vpop.permute.xlu0 %559
  %561 = vrot.lane.b32.xlu0 %v558, 32
  %v562 = vpop.permute.xlu0 %561
  %563 = vrot.lane.b32.xlu0 %v558, 96
  %v564 = vpop.permute.xlu0 %563
  %v565 = vmul.f32 %v558, %v504
  %v566 = vmul.f32 %v562, %v564
  %v567 = vadd.f32 %v565, %v566
  %v568 = vtanh.pop %v567
  %v569 = vmul.f32 %v560, %v568
  %v570 = vsel %vm62, %v567, 0.0
  %v571 = vsel %vm62, %v569, 0.0
  %s572 = scalar_lea.vmem %s0, 28
  %v573 = vld [vmem:[%s572] sm:$0xf]
  %v574 = vunpack.c.l.bf16 %v573
  %v575 = vpack.c.bf16 %v571, %v571
  %576 = vmatprep.subr.bf16.mxu0 0
  %577 = vmatpush1.bf16.msra.mxu0 %v98
  %578 = vmatprep.subr.bf16.mxu0 0
  %579 = vmatpush1.bf16.msra.mxu0 %v99
  %580 = vmatprep.subr.bf16.mxu0 0
  %581 = vmatpush1.bf16.msra.mxu0 %v100
  %582 = vmatprep.subr.bf16.mxu0 0
  %583 = vmatpush1.bf16.msra.mxu0 %v101
  %584 = vmatprep.subr.bf16.mxu0 0
  %585 = vmatpush1.bf16.msra.mxu0 %v102
  %586 = vmatprep.subr.bf16.mxu0 0
  %587 = vmatpush1.bf16.msra.mxu0 %v103
  %588 = vmatprep.subr.bf16.mxu0 0
  %589 = vmatpush1.bf16.msra.mxu0 %v104
  %590 = vmatprep.subr.bf16.mxu0 0
  %591 = vmatpush1.bf16.msra.mxu0 %v105
  %592 = vmatprep.subr.bf16.mxu0 0
  %593 = vmatpush1.bf16.msra.mxu0 0
  %594 = vmatprep.subr.bf16.mxu0 0
  %595 = vmatpush1.bf16.msra.mxu0 0
  %596 = vmatprep.subr.bf16.mxu0 0
  %597 = vmatpush1.bf16.msra.mxu0 0
  %598 = vmatprep.subr.bf16.mxu0 0
  %599 = vmatpush1.bf16.msra.mxu0 0
  %600 = vmatprep.subr.bf16.mxu0 0
  %601 = vmatpush1.bf16.msra.mxu0 0
  %602 = vmatprep.subr.bf16.mxu0 0
  %603 = vmatpush1.bf16.msra.mxu0 0
  %604 = vmatprep.subr.bf16.mxu0 0
  %605 = vmatpush1.bf16.msra.mxu0 0
  %606 = vmatprep.subr.bf16.mxu0 0
  %607 = vmatpush1.bf16.msra.mxu0 0
  %608 = vmatprep.mubr.bf16.mxu0 0
  %609 = vmatmul.mubr.bf16.gmra.mrb[0].mxu0 %v575
  %v610 = vpop.f32.mrb[0].mxu0
  %v611 = vadd.f32 0.0, %v610
  %v612 = vpop.f32.mrb[0].mxu0
  %v613 = vpop.f32.mrb[0].mxu0
  %v614 = vpop.f32.mrb[0].mxu0
  %615 = vdwg.mxu0
  %v616 = vadd.f32 %v574, %v611
  %v617 = vtanh.pop %v616
  %v618 = vxor.u32 %v616, 2147483648
  %v619 = vmul.f32 %v618, 1.442695
  %v620 = vpow.pop %v619
  %v621 = vadd.f32 %v620, 1.0
  %v622 = vrcp.pop %v621
  %v623 = vmul.f32 1.0, %v622
  %v624 = vsel %vm61, %v617, %v623
  %625 = vrot.lane.b32.xlu0 %v624, 64
  %v626 = vpop.permute.xlu0 %625
  %627 = vrot.lane.b32.xlu0 %v624, 32
  %v628 = vpop.permute.xlu0 %627
  %629 = vrot.lane.b32.xlu0 %v624, 96
  %v630 = vpop.permute.xlu0 %629
  %v631 = vmul.f32 %v624, %v570
  %v632 = vmul.f32 %v628, %v630
  %v633 = vadd.f32 %v631, %v632
  %v634 = vtanh.pop %v633
  %v635 = vmul.f32 %v626, %v634
  %v636 = vsel %vm62, %v633, 0.0
  %v637 = vsel %vm62, %v635, 0.0
  %638 = vst [vmem:[#allocation2] sm:$0xff] %v637
  %639 = vst [vmem:[#allocation3] sm:$0xff] %v636
  %v640 = vpack.c.bf16 %v637, %v637
  %v642 = vlaneseq
  %v643 = vshrl.u32 %v642, 7
  %v644 = vsub.s32 0, %v643
  %v645 = vrot.slane %v56, %v644
  %v663 = vunpack.c.l.b16 %v40
  %v664 = vunpack.c.l.b16 %v41
  %v665 = vunpack.c.l.b16 %v42
  %v666 = vunpack.c.l.b16 %v43
  %v667 = vunpack.c.l.b16 %v44
  %v668 = vunpack.c.l.b16 %v45
  %v669 = vunpack.c.l.b16 %v46
  %v670 = vunpack.c.l.b16 %v47
  %v671 = vunpack.c.l.b16 %v48
  %v672 = vunpack.c.l.b16 %v49
  %v673 = vunpack.c.l.b16 %v50
  %v674 = vunpack.c.l.b16 %v51
  %v675 = vunpack.c.l.b16 %v52
  %v676 = vunpack.c.l.b16 %v53
  %v677 = vunpack.c.l.b16 %v54
  %v678 = vunpack.c.l.b16 %v55
  %v679 = vpack.c.b16 %v664, %v663
  %v680 = vpack.c.b16 %v666, %v665
  %v681 = vpack.c.b16 %v668, %v667
  %v682 = vpack.c.b16 %v670, %v669
  %v683 = vpack.c.b16 %v672, %v671
  %v684 = vpack.c.b16 %v674, %v673
  %v685 = vpack.c.b16 %v676, %v675
  %v686 = vpack.c.b16 %v678, %v677
  %695 = vmatprep.subr.bf16.mxu0 0
  %696 = vmatpush1.bf16.msra.mxu0 %v679
  %697 = vmatprep.subr.bf16.mxu0 0
  %698 = vmatpush1.bf16.msra.mxu0 %v680
  %699 = vmatprep.subr.bf16.mxu0 0
  %700 = vmatpush1.bf16.msra.mxu0 %v681
  %701 = vmatprep.subr.bf16.mxu0 0
  %702 = vmatpush1.bf16.msra.mxu0 %v682
  %703 = vmatprep.subr.bf16.mxu0 0
  %704 = vmatpush1.bf16.msra.mxu0 %v683
  %705 = vmatprep.subr.bf16.mxu0 0
  %706 = vmatpush1.bf16.msra.mxu0 %v684
  %707 = vmatprep.subr.bf16.mxu0 0
  %708 = vmatpush1.bf16.msra.mxu0 %v685
  %709 = vmatprep.subr.bf16.mxu0 0
  %710 = vmatpush1.bf16.msra.mxu0 %v686
  %711 = vmatprep.subr.bf16.mxu0 0
  %712 = vmatpush1.bf16.msra.mxu0 0
  %713 = vmatprep.subr.bf16.mxu0 0
  %714 = vmatpush1.bf16.msra.mxu0 0
  %715 = vmatprep.subr.bf16.mxu0 0
  %716 = vmatpush1.bf16.msra.mxu0 0
  %717 = vmatprep.subr.bf16.mxu0 0
  %718 = vmatpush1.bf16.msra.mxu0 0
  %719 = vmatprep.subr.bf16.mxu0 0
  %720 = vmatpush1.bf16.msra.mxu0 0
  %721 = vmatprep.subr.bf16.mxu0 0
  %722 = vmatpush1.bf16.msra.mxu0 0
  %723 = vmatprep.subr.bf16.mxu0 0
  %724 = vmatpush1.bf16.msra.mxu0 0
  %725 = vmatprep.subr.bf16.mxu0 0
  %726 = vmatpush1.bf16.msra.mxu0 0
  %727 = vmatprep.mubr.bf16.mxu0 0
  %728 = vmatmul.mubr.bf16.gmra.mrb[0].mxu0 %v640
  %v729 = vpop.f32.mrb[0].mxu0
  %v730 = vadd.f32 %v645, %v729
  %v731 = vpop.f32.mrb[0].mxu0
  %v732 = vpop.f32.mrb[0].mxu0
  %v733 = vpop.f32.mrb[0].mxu0
  %734 = vdwg.mxu0
  %vm735 = vcmask 64512
  %736 = vst.msk [vmem:[%s4] sm:$0xff] %vm735, %v730
  // Predicated region
  $region22: #{lstm_model_forward.3} parent=0 // pred_check
    _
  $region23: #{lstm_model_forward.3} parent=0 // pred_check_branch
    %738 = sbr.rel (0) target = $region25
  $region24: #{lstm_model_forward.3} parent=0 // pred_region
    _
  $region25: #{lstm_model_forward.3} parent=0 // pred_fallthru
    _
  // Predicated region
  $region26: #{lstm_model_forward.3} parent=0 // pred_check
    _
  $region27: #{lstm_model_forward.3} parent=0 // pred_check_branch
    %740 = sbr.rel (0) target = $region29
  $region28: #{lstm_model_forward.3} parent=0 // pred_region
    _
  $region29: #{lstm_model_forward.3} parent=0 // pred_fallthru
    _

</llo_original>
